<compile_context>
chip_gen: v6e
topology: v6e:2x2x1
jax: 0.10.0
libtpu: 0.0.40
codegen_flags: <defaults>
</compile_context>

<pallas_src>
import functools

import jax
import jax.numpy as jnp
from jax.experimental import pallas as pl
from jax.experimental.pallas import tpu as pltpu


def _cbam_kernel(x_ref, w1t_ref, b1_ref, w2_ref, b2_ref, colmask_ref,
                 wc_ref, bc_ref, o_ref, xca_ref, pads_ref,
                 *, H, W, K, NB, BASE, PADW):
    f32 = jnp.float32
    HW = H * W
    p = K // 2
    KK = K * K
    SHIFT = BASE - (p * W + p)      # lane shift between output index q and tap reads

    w1t = w1t_ref[...].astype(f32)          # (C, Cr)
    w2 = w2_ref[...].astype(f32)            # (C, Cr)
    b1 = b1_ref[...].astype(f32)            # (1, Cr)
    b2 = b2_ref[...].astype(f32)            # (C, 1)

    # Zero only the halo regions of the packed (avg | max) conv buffer; both
    # slices are 128-lane aligned.  Re-zeroing every step stays correct when
    # the "parallel" grid axis is split across TensorCores.
    if BASE > 0:
        pads_ref[:, :BASE] = jnp.zeros((2 * NB, BASE), f32)
    if PADW > BASE + HW:
        pads_ref[:, BASE + HW:] = jnp.zeros((2 * NB, PADW - BASE - HW), f32)

    # ---- phase 1: SE channel attention, cache x*catt, write avg/max maps ----
    for b in range(NB):
        xb = x_ref[b].astype(f32)                                    # (C, HW)
        pooled = jnp.mean(xb, axis=1, keepdims=True)                 # (C, 1)
        # 1x1 conv C -> Cr, ReLU  (tiny; VPU broadcast-mul + reduce, no MXU matvec)
        h = jnp.maximum(
            jnp.sum(pooled * w1t, axis=0, keepdims=True) + b1, 0.0)  # (1, Cr)
        # 1x1 conv Cr -> C, sigmoid
        catt = jax.nn.sigmoid(
            jnp.sum(h * w2, axis=1, keepdims=True) + b2)             # (C, 1)
        xca = xb * catt                                              # (C, HW)
        xca_ref[b] = xca                                             # cache for phase 3
        # Lane-aligned full-width interior stores (BASE % 128 == 0, HW % 128 == 0
        # at typical sizes); avg maps in sublanes [0, NB), max maps in [NB, 2NB).
        pads_ref[b:b + 1, BASE:BASE + HW] = jnp.mean(xca, axis=0, keepdims=True)
        pads_ref[NB + b:NB + b + 1, BASE:BASE + HW] = jnp.max(xca, axis=0, keepdims=True)

    # ---- phase 2: KxK 'same' conv on the sublane-packed maps ----------------
    # out[s, q] needs pads[s, SHIFT + i*W + j + q]; row over/underflow lands in
    # the zero halo, column overflow is killed by the per-j column mask.
    half_is_avg = jax.lax.broadcasted_iota(jnp.int32, (2 * NB, 1), 0) < NB
    colm = colmask_ref[...]                                          # (K, HW) f32

    acc = [None, None]                       # 2 independent chains over j for ILP
    for j in range(K):
        aj = [None, None]                    # 2 independent chains over i
        for i in range(K):
            t = i * K + j
            off = SHIFT + i * W + j
            # per-tap weight column: avg-half gets the avg tap, max-half the max tap
            w_t = jnp.where(half_is_avg, wc_ref[t], wc_ref[KK + t])  # (2NB, 1)
            term = w_t * pads_ref[:, off:off + HW]                   # (2NB, HW)
            c = i & 1
            aj[c] = term if aj[c] is None else aj[c] + term
        aj_sum = aj[0] if aj[1] is None else aj[0] + aj[1]
        masked = aj_sum * colm[j:j + 1, :]   # mask applied once per j (not per tap)
        c = j & 1
        acc[c] = masked if acc[c] is None else acc[c] + masked
    conv = acc[0] if acc[1] is None else acc[0] + acc[1]             # (2NB, HW)
    attn = jax.nn.sigmoid(conv[:NB, :] + conv[NB:, :] + bc_ref[0])   # (NB, HW)

    # ---- phase 3: apply spatial attention to the cached x*catt --------------
    for b in range(NB):
        o_ref[b] = (xca_ref[b] * attn[b:b + 1, :]).astype(o_ref.dtype)


def _pick_nb(N, C, HW, PADW, itemsize):
    """Images per grid step: whole batch on single-TC chips, >=2 steps on dual-TC."""
    try:
        kind = jax.devices()[0].device_kind.lower()
    except Exception:
        kind = ""
    single_tc = any(s in kind for s in ("v5e", "v5 lite", "v6e", "v6 lite"))
    nb = N if single_tc else max(1, N // 2)

    # VMEM budget guard (double-buffered in + out blocks + f32 xca + pad scratch).
    budget = 8 * 1024 * 1024
    def step_bytes(nbv):
        blk = nbv * C * HW
        return 4 * blk * itemsize + 4 * blk + 8 * nbv * PADW
    while nb > 1 and step_bytes(nb) > budget:
        nb -= 1
    return max(1, nb)


def cbam_pallas(x, w1, b1, w2, b2, wc, bc, *, nb=None):
    N, C, H, W = x.shape
    Cr = w1.shape[0]
    K = wc.shape[-1]
    HW = H * W
    p = K // 2

    # Flat pad-buffer geometry: interior starts at a 128-aligned lane offset.
    interior = p * W + p
    BASE = ((interior + 127) // 128) * 128
    SHIFT = BASE - interior
    PADW = -(-(SHIFT + (K - 1) * (W + 1) + HW) // 128) * 128
    PADW = max(PADW, BASE + HW)

    if nb is None:
        nb = _pick_nb(N, C, HW, PADW, jnp.dtype(x.dtype).itemsize)
    nb = max(1, min(int(nb), N))
    while N % nb:
        nb -= 1

    # Lane-dense views / small host-side precomputation (free outside the kernel).
    x_flat = x.reshape(N, C, HW)
    w1t = jnp.transpose(w1)                                  # (C, Cr)
    b1r = b1.reshape(1, Cr)
    b2r = b2.reshape(C, 1)
    wc_flat = wc.reshape(-1).astype(jnp.float32)             # avg taps then max taps
    bc_arr = jnp.reshape(bc, (1,)).astype(jnp.float32)

    # Column validity masks for each tap column j (host precomputed, int math).
    cols = jnp.arange(HW, dtype=jnp.int32) % W
    j_ids = jnp.arange(K, dtype=jnp.int32)[:, None]
    colmask = ((cols[None, :] >= (p - j_ids)) &
               (cols[None, :] <= (W - 1 + p - j_ids))).astype(jnp.float32)  # (K, HW)

    kernel = functools.partial(_cbam_kernel, H=H, W=W, K=K, NB=nb,
                               BASE=BASE, PADW=PADW)

    out_flat = pl.pallas_call(
        kernel,
        out_shape=jax.ShapeDtypeStruct((N, C, HW), x.dtype),
        grid=(N // nb,),
        in_specs=[
            pl.BlockSpec((nb, C, HW), lambda n: (n, 0, 0)),          # x (lane-dense)
            pl.BlockSpec((C, Cr), lambda n: (0, 0)),                 # w1^T
            pl.BlockSpec((1, Cr), lambda n: (0, 0)),                 # b1
            pl.BlockSpec((C, Cr), lambda n: (0, 0)),                 # w2
            pl.BlockSpec((C, 1), lambda n: (0, 0)),                  # b2
            pl.BlockSpec((K, HW), lambda n: (0, 0)),                 # column masks
            pl.BlockSpec(memory_space=pltpu.MemorySpace.SMEM),       # 7x7 taps
            pl.BlockSpec(memory_space=pltpu.MemorySpace.SMEM),       # 7x7 bias
        ],
        out_specs=pl.BlockSpec((nb, C, HW), lambda n: (n, 0, 0)),
        scratch_shapes=[
            pltpu.VMEM((nb, C, HW), jnp.float32),        # cached x * channel-attention
            pltpu.VMEM((2 * nb, PADW), jnp.float32),     # sublane-packed avg|max maps
        ],
        compiler_params=pltpu.CompilerParams(
            dimension_semantics=("parallel",)),
    )(x_flat, w1t, b1r, w2, b2r, colmask, wc_flat, bc_arr)

    return out_flat.reshape(N, C, H, W)


def cbam_reference(x, w1, b1, w2, b2, wc, bc):
    # Pure-JAX reference matching the PyTorch forward.
    pooled = jnp.mean(x, axis=(2, 3))                                   # (N, C)
    h = jax.nn.relu(pooled @ w1.T + b1)                                 # (N, Cr)
    catt = jax.nn.sigmoid(h @ w2.T + b2)                                # (N, C)
    x_ca = x * catt[:, :, None, None]
    avg = jnp.mean(x_ca, axis=1, keepdims=True)
    mx = jnp.max(x_ca, axis=1, keepdims=True)
    cat = jnp.concatenate([avg, mx], axis=1)                            # (N, 2, H, W)
    K = wc.shape[-1]
    attn = jax.lax.conv_general_dilated(
        cat, wc, window_strides=(1, 1),
        padding=[(K // 2, K // 2), (K // 2, K // 2)],
        dimension_numbers=("NCHW", "OIHW", "NCHW")) + bc
    attn = jax.nn.sigmoid(attn)
    return x_ca * attn


if __name__ == "__main__":
    N, C, H, W = 8, 32, 16, 16
    reduction, K = 16, 7
    Cr = C // reduction

    key = jax.random.PRNGKey(0)
    kx, k1, k2, k3, k4, k5, k6 = jax.random.split(key, 7)

    x = jax.random.normal(kx, (N, C, H, W), jnp.float32)
    w1 = jax.random.normal(k1, (Cr, C), jnp.float32) * 0.2     # 1x1 conv C -> C//r
    b1 = jax.random.normal(k2, (Cr,), jnp.float32) * 0.1
    w2 = jax.random.normal(k3, (C, Cr), jnp.float32) * 0.2     # 1x1 conv C//r -> C
    b2 = jax.random.normal(k4, (C,), jnp.float32) * 0.1
    wc = jax.random.normal(k5, (1, 2, K, K), jnp.float32) * 0.1  # 7x7 conv, 2 -> 1
    bc = jax.random.normal(k6, (), jnp.float32) * 0.1

    out = cbam_pallas(x, w1, b1, w2, b2, wc, bc)
    out = jax.block_until_ready(out)

    ref = cbam_reference(x, w1, b1, w2, b2, wc, bc)
    assert out.shape == (N, C, H, W)
    err = float(jnp.max(jnp.abs(out - ref)))
    assert jnp.allclose(out, ref, rtol=1e-4, atol=1e-4), f"max abs err {err}"

    print("KERNEL_OK")
</pallas_src>

<mosaic_0001>
module attributes {stable_mosaic.version = 11 : i64} {
  func.func @_cbam_kernel(%arg0: i32, %arg1: memref<4x32x256xf32, #tpu.memory_space<vmem>>, %arg2: memref<32x2xf32, #tpu.memory_space<vmem>>, %arg3: memref<1x2xf32, #tpu.memory_space<vmem>>, %arg4: memref<32x2xf32, #tpu.memory_space<vmem>>, %arg5: memref<32x1xf32, #tpu.memory_space<vmem>>, %arg6: memref<7x256xf32, #tpu.memory_space<vmem>>, %arg7: memref<98xf32, #tpu.memory_space<smem>>, %arg8: memref<1xf32, #tpu.memory_space<smem>>, %arg9: memref<4x32x256xf32, #tpu.memory_space<vmem>>, %arg10: memref<4x32x256xf32, #tpu.memory_space<vmem>>, %arg11: memref<8x512xf32, #tpu.memory_space<vmem>>) attributes {dimension_semantics = [#tpu.dimension_semantics<parallel>], iteration_bounds = array<i64: 2>, scalar_prefetch = 0 : i64, scratch_operands = 2 : i64, tpu.core_type = #tpu.core_type<tc>, window_params = [{transform_indices = @transform_0, window_bounds = array<i64: 4, 32, 256>}, {pipeline_mode = #tpu.pipeline_mode<synchronous>, transform_indices = @transform_1, window_bounds = array<i64: 32, 2>}, {pipeline_mode = #tpu.pipeline_mode<synchronous>, transform_indices = @transform_2, window_bounds = array<i64: 1, 2>}, {pipeline_mode = #tpu.pipeline_mode<synchronous>, transform_indices = @transform_3, window_bounds = array<i64: 32, 2>}, {pipeline_mode = #tpu.pipeline_mode<synchronous>, transform_indices = @transform_4, window_bounds = array<i64: 32, 1>}, {pipeline_mode = #tpu.pipeline_mode<synchronous>, transform_indices = @transform_5, window_bounds = array<i64: 7, 256>}, {transform_indices = @transform_6, window_bounds = array<i64: 98>}, {transform_indices = @transform_7, window_bounds = array<i64: 1>}, {transform_indices = @transform_8, window_bounds = array<i64: 4, 32, 256>}]} {
    %c0 = arith.constant 0 : index
    %c0_0 = arith.constant 0 : index
    %0 = vector.load %arg2[%c0, %c0_0] : memref<32x2xf32, #tpu.memory_space<vmem>>, vector<32x2xf32>
    %c0_1 = arith.constant 0 : index
    %c0_2 = arith.constant 0 : index
    %1 = vector.load %arg4[%c0_1, %c0_2] : memref<32x2xf32, #tpu.memory_space<vmem>>, vector<32x2xf32>
    %c0_3 = arith.constant 0 : index
    %c0_4 = arith.constant 0 : index
    %2 = vector.load %arg3[%c0_3, %c0_4] : memref<1x2xf32, #tpu.memory_space<vmem>>, vector<1x2xf32>
    %c0_5 = arith.constant 0 : index
    %c0_6 = arith.constant 0 : index
    %3 = vector.load %arg5[%c0_5, %c0_6] : memref<32x1xf32, #tpu.memory_space<vmem>>, vector<32x1xf32>
    %cst = arith.constant 0.000000e+00 : f32
    %4 = vector.broadcast %cst : f32 to vector<8x128xf32>
    %c0_7 = arith.constant 0 : index
    %c0_8 = arith.constant 0 : index
    %5 = vector.load %arg11[%c0_7, %c0_8] : memref<8x512xf32, #tpu.memory_space<vmem>>, vector<8x128xf32>
    tpu.vector_store %arg11[%c0_7, %c0_8], %4 {strides = array<i32>} : memref<8x512xf32, #tpu.memory_space<vmem>>, vector<8x128xf32>,
    %cst_9 = arith.constant 0.000000e+00 : f32
    %6 = vector.broadcast %cst_9 : f32 to vector<8x128xf32>
    %c0_10 = arith.constant 0 : index
    %c384 = arith.constant 384 : index
    %7 = vector.load %arg11[%c0_10, %c384] : memref<8x512xf32, #tpu.memory_space<vmem>>, vector<8x128xf32>
    tpu.vector_store %arg11[%c0_10, %c384], %6 {strides = array<i32>} : memref<8x512xf32, #tpu.memory_space<vmem>>, vector<8x128xf32>,
    %c0_11 = arith.constant 0 : index
    %c0_12 = arith.constant 0 : index
    %c0_13 = arith.constant 0 : index
    %8 = vector.load %arg1[%c0_11, %c0_12, %c0_13] : memref<4x32x256xf32, #tpu.memory_space<vmem>>, vector<1x32x256xf32>
    %9 = vector.shape_cast %8 : vector<1x32x256xf32> to vector<32x256xf32>
    %cst_14 = arith.constant dense<0.000000e+00> : vector<32xf32>
    %10 = vector.multi_reduction <add>, %9, %cst_14 [1] : vector<32x256xf32> to vector<32xf32>
    %11 = vector.shape_cast %10 : vector<32xf32> to vector<32x1xf32>
    %cst_15 = arith.constant 2.560000e+02 : f32
    %12 = vector.broadcast %cst_15 : f32 to vector<32x1xf32>
    %13 = arith.divf %11, %12 : vector<32x1xf32>
    %14 = vector.broadcast %13 : vector<32x1xf32> to vector<32x2xf32>
    %15 = arith.mulf %14, %0 : vector<32x2xf32>
    %cst_16 = arith.constant dense<0.000000e+00> : vector<2xf32>
    %16 = vector.multi_reduction <add>, %15, %cst_16 [0] : vector<32x2xf32> to vector<2xf32>
    %17 = vector.shape_cast %16 : vector<2xf32> to vector<1x2xf32>
    %18 = arith.addf %17, %2 : vector<1x2xf32>
    %cst_17 = arith.constant 0.000000e+00 : f32
    %19 = vector.broadcast %cst_17 : f32 to vector<1x2xf32>
    %20 = arith.maximumf %18, %19 : vector<1x2xf32>
    %21 = vector.broadcast %20 : vector<1x2xf32> to vector<32x2xf32>
    %22 = arith.mulf %21, %1 : vector<32x2xf32>
    %cst_18 = arith.constant dense<0.000000e+00> : vector<32xf32>
    %23 = vector.multi_reduction <add>, %22, %cst_18 [1] : vector<32x2xf32> to vector<32xf32>
    %24 = vector.shape_cast %23 : vector<32xf32> to vector<32x1xf32>
    %25 = arith.addf %24, %3 : vector<32x1xf32>
    %26 = arith.negf %25 : vector<32x1xf32>
    %27 = math.exp %26 : vector<32x1xf32>
    %cst_19 = arith.constant 1.000000e+00 : f32
    %28 = vector.broadcast %cst_19 : f32 to vector<32x1xf32>
    %29 = arith.addf %28, %27 : vector<32x1xf32>
    %30 = arith.divf %28, %29 : vector<32x1xf32>
    %31 = vector.broadcast %30 : vector<32x1xf32> to vector<32x256xf32>
    %32 = arith.mulf %9, %31 : vector<32x256xf32>
    %c0_20 = arith.constant 0 : index
    %c0_21 = arith.constant 0 : index
    %c0_22 = arith.constant 0 : index
    %33 = vector.load %arg10[%c0_20, %c0_21, %c0_22] : memref<4x32x256xf32, #tpu.memory_space<vmem>>, vector<1x32x256xf32>
    %34 = vector.shape_cast %33 : vector<1x32x256xf32> to vector<32x256xf32>
    %35 = vector.shape_cast %32 : vector<32x256xf32> to vector<1x32x256xf32>
    tpu.vector_store %arg10[%c0_20, %c0_21, %c0_22], %35 {strides = array<i32>} : memref<4x32x256xf32, #tpu.memory_space<vmem>>, vector<1x32x256xf32>,
    %cst_23 = arith.constant dense<0.000000e+00> : vector<256xf32>
    %36 = vector.multi_reduction <add>, %32, %cst_23 [0] : vector<32x256xf32> to vector<256xf32>
    %37 = vector.shape_cast %36 : vector<256xf32> to vector<1x256xf32>
    %cst_24 = arith.constant 3.200000e+01 : f32
    %38 = vector.broadcast %cst_24 : f32 to vector<1x256xf32>
    %39 = arith.divf %37, %38 : vector<1x256xf32>
    %c0_25 = arith.constant 0 : index
    %c128 = arith.constant 128 : index
    %40 = vector.load %arg11[%c0_25, %c128] : memref<8x512xf32, #tpu.memory_space<vmem>>, vector<1x256xf32>
    tpu.vector_store %arg11[%c0_25, %c128], %39 {strides = array<i32>} : memref<8x512xf32, #tpu.memory_space<vmem>>, vector<1x256xf32>,
    %cst_26 = arith.constant dense<0xFF800000> : vector<256xf32>
    %41 = vector.multi_reduction <maximumf>, %32, %cst_26 [0] : vector<32x256xf32> to vector<256xf32>
    %42 = vector.shape_cast %41 : vector<256xf32> to vector<1x256xf32>
    %c4 = arith.constant 4 : index
    %c128_27 = arith.constant 128 : index
    %43 = vector.load %arg11[%c4, %c128_27] : memref<8x512xf32, #tpu.memory_space<vmem>>, vector<1x256xf32>
    tpu.vector_store %arg11[%c4, %c128_27], %42 {strides = array<i32>} : memref<8x512xf32, #tpu.memory_space<vmem>>, vector<1x256xf32>,
    %c1 = arith.constant 1 : index
    %c0_28 = arith.constant 0 : index
    %c0_29 = arith.constant 0 : index
    %44 = vector.load %arg1[%c1, %c0_28, %c0_29] : memref<4x32x256xf32, #tpu.memory_space<vmem>>, vector<1x32x256xf32>
    %45 = vector.shape_cast %44 : vector<1x32x256xf32> to vector<32x256xf32>
    %cst_30 = arith.constant dense<0.000000e+00> : vector<32xf32>
    %46 = vector.multi_reduction <add>, %45, %cst_30 [1] : vector<32x256xf32> to vector<32xf32>
    %47 = vector.shape_cast %46 : vector<32xf32> to vector<32x1xf32>
    %cst_31 = arith.constant 2.560000e+02 : f32
    %48 = vector.broadcast %cst_31 : f32 to vector<32x1xf32>
    %49 = arith.divf %47, %48 : vector<32x1xf32>
    %50 = vector.broadcast %49 : vector<32x1xf32> to vector<32x2xf32>
    %51 = arith.mulf %50, %0 : vector<32x2xf32>
    %cst_32 = arith.constant dense<0.000000e+00> : vector<2xf32>
    %52 = vector.multi_reduction <add>, %51, %cst_32 [0] : vector<32x2xf32> to vector<2xf32>
    %53 = vector.shape_cast %52 : vector<2xf32> to vector<1x2xf32>
    %54 = arith.addf %53, %2 : vector<1x2xf32>
    %cst_33 = arith.constant 0.000000e+00 : f32
    %55 = vector.broadcast %cst_33 : f32 to vector<1x2xf32>
    %56 = arith.maximumf %54, %55 : vector<1x2xf32>
    %57 = vector.broadcast %56 : vector<1x2xf32> to vector<32x2xf32>
    %58 = arith.mulf %57, %1 : vector<32x2xf32>
    %cst_34 = arith.constant dense<0.000000e+00> : vector<32xf32>
    %59 = vector.multi_reduction <add>, %58, %cst_34 [1] : vector<32x2xf32> to vector<32xf32>
    %60 = vector.shape_cast %59 : vector<32xf32> to vector<32x1xf32>
    %61 = arith.addf %60, %3 : vector<32x1xf32>
    %62 = arith.negf %61 : vector<32x1xf32>
    %63 = math.exp %62 : vector<32x1xf32>
    %cst_35 = arith.constant 1.000000e+00 : f32
    %64 = vector.broadcast %cst_35 : f32 to vector<32x1xf32>
    %65 = arith.addf %64, %63 : vector<32x1xf32>
    %66 = arith.divf %64, %65 : vector<32x1xf32>
    %67 = vector.broadcast %66 : vector<32x1xf32> to vector<32x256xf32>
    %68 = arith.mulf %45, %67 : vector<32x256xf32>
    %c1_36 = arith.constant 1 : index
    %c0_37 = arith.constant 0 : index
    %c0_38 = arith.constant 0 : index
    %69 = vector.load %arg10[%c1_36, %c0_37, %c0_38] : memref<4x32x256xf32, #tpu.memory_space<vmem>>, vector<1x32x256xf32>
    %70 = vector.shape_cast %69 : vector<1x32x256xf32> to vector<32x256xf32>
    %71 = vector.shape_cast %68 : vector<32x256xf32> to vector<1x32x256xf32>
    tpu.vector_store %arg10[%c1_36, %c0_37, %c0_38], %71 {strides = array<i32>} : memref<4x32x256xf32, #tpu.memory_space<vmem>>, vector<1x32x256xf32>,
    %cst_39 = arith.constant dense<0.000000e+00> : vector<256xf32>
    %72 = vector.multi_reduction <add>, %68, %cst_39 [0] : vector<32x256xf32> to vector<256xf32>
    %73 = vector.shape_cast %72 : vector<256xf32> to vector<1x256xf32>
    %cst_40 = arith.constant 3.200000e+01 : f32
    %74 = vector.broadcast %cst_40 : f32 to vector<1x256xf32>
    %75 = arith.divf %73, %74 : vector<1x256xf32>
    %c1_41 = arith.constant 1 : index
    %c128_42 = arith.constant 128 : index
    %76 = vector.load %arg11[%c1_41, %c128_42] : memref<8x512xf32, #tpu.memory_space<vmem>>, vector<1x256xf32>
    tpu.vector_store %arg11[%c1_41, %c128_42], %75 {strides = array<i32>} : memref<8x512xf32, #tpu.memory_space<vmem>>, vector<1x256xf32>,
    %cst_43 = arith.constant dense<0xFF800000> : vector<256xf32>
    %77 = vector.multi_reduction <maximumf>, %68, %cst_43 [0] : vector<32x256xf32> to vector<256xf32>
    %78 = vector.shape_cast %77 : vector<256xf32> to vector<1x256xf32>
    %c5 = arith.constant 5 : index
    %c128_44 = arith.constant 128 : index
    %79 = vector.load %arg11[%c5, %c128_44] : memref<8x512xf32, #tpu.memory_space<vmem>>, vector<1x256xf32>
    tpu.vector_store %arg11[%c5, %c128_44], %78 {strides = array<i32>} : memref<8x512xf32, #tpu.memory_space<vmem>>, vector<1x256xf32>,
    %c2 = arith.constant 2 : index
    %c0_45 = arith.constant 0 : index
    %c0_46 = arith.constant 0 : index
    %80 = vector.load %arg1[%c2, %c0_45, %c0_46] : memref<4x32x256xf32, #tpu.memory_space<vmem>>, vector<1x32x256xf32>
    %81 = vector.shape_cast %80 : vector<1x32x256xf32> to vector<32x256xf32>
    %cst_47 = arith.constant dense<0.000000e+00> : vector<32xf32>
    %82 = vector.multi_reduction <add>, %81, %cst_47 [1] : vector<32x256xf32> to vector<32xf32>
    %83 = vector.shape_cast %82 : vector<32xf32> to vector<32x1xf32>
    %cst_48 = arith.constant 2.560000e+02 : f32
    %84 = vector.broadcast %cst_48 : f32 to vector<32x1xf32>
    %85 = arith.divf %83, %84 : vector<32x1xf32>
    %86 = vector.broadcast %85 : vector<32x1xf32> to vector<32x2xf32>
    %87 = arith.mulf %86, %0 : vector<32x2xf32>
    %cst_49 = arith.constant dense<0.000000e+00> : vector<2xf32>
    %88 = vector.multi_reduction <add>, %87, %cst_49 [0] : vector<32x2xf32> to vector<2xf32>
    %89 = vector.shape_cast %88 : vector<2xf32> to vector<1x2xf32>
    %90 = arith.addf %89, %2 : vector<1x2xf32>
    %cst_50 = arith.constant 0.000000e+00 : f32
    %91 = vector.broadcast %cst_50 : f32 to vector<1x2xf32>
    %92 = arith.maximumf %90, %91 : vector<1x2xf32>
    %93 = vector.broadcast %92 : vector<1x2xf32> to vector<32x2xf32>
    %94 = arith.mulf %93, %1 : vector<32x2xf32>
    %cst_51 = arith.constant dense<0.000000e+00> : vector<32xf32>
    %95 = vector.multi_reduction <add>, %94, %cst_51 [1] : vector<32x2xf32> to vector<32xf32>
    %96 = vector.shape_cast %95 : vector<32xf32> to vector<32x1xf32>
    %97 = arith.addf %96, %3 : vector<32x1xf32>
    %98 = arith.negf %97 : vector<32x1xf32>
    %99 = math.exp %98 : vector<32x1xf32>
    %cst_52 = arith.constant 1.000000e+00 : f32
    %100 = vector.broadcast %cst_52 : f32 to vector<32x1xf32>
    %101 = arith.addf %100, %99 : vector<32x1xf32>
    %102 = arith.divf %100, %101 : vector<32x1xf32>
    %103 = vector.broadcast %102 : vector<32x1xf32> to vector<32x256xf32>
    %104 = arith.mulf %81, %103 : vector<32x256xf32>
    %c2_53 = arith.constant 2 : index
    %c0_54 = arith.constant 0 : index
    %c0_55 = arith.constant 0 : index
    %105 = vector.load %arg10[%c2_53, %c0_54, %c0_55] : memref<4x32x256xf32, #tpu.memory_space<vmem>>, vector<1x32x256xf32>
    %106 = vector.shape_cast %105 : vector<1x32x256xf32> to vector<32x256xf32>
    %107 = vector.shape_cast %104 : vector<32x256xf32> to vector<1x32x256xf32>
    tpu.vector_store %arg10[%c2_53, %c0_54, %c0_55], %107 {strides = array<i32>} : memref<4x32x256xf32, #tpu.memory_space<vmem>>, vector<1x32x256xf32>,
    %cst_56 = arith.constant dense<0.000000e+00> : vector<256xf32>
    %108 = vector.multi_reduction <add>, %104, %cst_56 [0] : vector<32x256xf32> to vector<256xf32>
    %109 = vector.shape_cast %108 : vector<256xf32> to vector<1x256xf32>
    %cst_57 = arith.constant 3.200000e+01 : f32
    %110 = vector.broadcast %cst_57 : f32 to vector<1x256xf32>
    %111 = arith.divf %109, %110 : vector<1x256xf32>
    %c2_58 = arith.constant 2 : index
    %c128_59 = arith.constant 128 : index
    %112 = vector.load %arg11[%c2_58, %c128_59] : memref<8x512xf32, #tpu.memory_space<vmem>>, vector<1x256xf32>
    tpu.vector_store %arg11[%c2_58, %c128_59], %111 {strides = array<i32>} : memref<8x512xf32, #tpu.memory_space<vmem>>, vector<1x256xf32>,
    %cst_60 = arith.constant dense<0xFF800000> : vector<256xf32>
    %113 = vector.multi_reduction <maximumf>, %104, %cst_60 [0] : vector<32x256xf32> to vector<256xf32>
    %114 = vector.shape_cast %113 : vector<256xf32> to vector<1x256xf32>
    %c6 = arith.constant 6 : index
    %c128_61 = arith.constant 128 : index
    %115 = vector.load %arg11[%c6, %c128_61] : memref<8x512xf32, #tpu.memory_space<vmem>>, vector<1x256xf32>
    tpu.vector_store %arg11[%c6, %c128_61], %114 {strides = array<i32>} : memref<8x512xf32, #tpu.memory_space<vmem>>, vector<1x256xf32>,
    %c3 = arith.constant 3 : index
    %c0_62 = arith.constant 0 : index
    %c0_63 = arith.constant 0 : index
    %116 = vector.load %arg1[%c3, %c0_62, %c0_63] : memref<4x32x256xf32, #tpu.memory_space<vmem>>, vector<1x32x256xf32>
    %117 = vector.shape_cast %116 : vector<1x32x256xf32> to vector<32x256xf32>
    %cst_64 = arith.constant dense<0.000000e+00> : vector<32xf32>
    %118 = vector.multi_reduction <add>, %117, %cst_64 [1] : vector<32x256xf32> to vector<32xf32>
    %119 = vector.shape_cast %118 : vector<32xf32> to vector<32x1xf32>
    %cst_65 = arith.constant 2.560000e+02 : f32
    %120 = vector.broadcast %cst_65 : f32 to vector<32x1xf32>
    %121 = arith.divf %119, %120 : vector<32x1xf32>
    %122 = vector.broadcast %121 : vector<32x1xf32> to vector<32x2xf32>
    %123 = arith.mulf %122, %0 : vector<32x2xf32>
    %cst_66 = arith.constant dense<0.000000e+00> : vector<2xf32>
    %124 = vector.multi_reduction <add>, %123, %cst_66 [0] : vector<32x2xf32> to vector<2xf32>
    %125 = vector.shape_cast %124 : vector<2xf32> to vector<1x2xf32>
    %126 = arith.addf %125, %2 : vector<1x2xf32>
    %cst_67 = arith.constant 0.000000e+00 : f32
    %127 = vector.broadcast %cst_67 : f32 to vector<1x2xf32>
    %128 = arith.maximumf %126, %127 : vector<1x2xf32>
    %129 = vector.broadcast %128 : vector<1x2xf32> to vector<32x2xf32>
    %130 = arith.mulf %129, %1 : vector<32x2xf32>
    %cst_68 = arith.constant dense<0.000000e+00> : vector<32xf32>
    %131 = vector.multi_reduction <add>, %130, %cst_68 [1] : vector<32x2xf32> to vector<32xf32>
    %132 = vector.shape_cast %131 : vector<32xf32> to vector<32x1xf32>
    %133 = arith.addf %132, %3 : vector<32x1xf32>
    %134 = arith.negf %133 : vector<32x1xf32>
    %135 = math.exp %134 : vector<32x1xf32>
    %cst_69 = arith.constant 1.000000e+00 : f32
    %136 = vector.broadcast %cst_69 : f32 to vector<32x1xf32>
    %137 = arith.addf %136, %135 : vector<32x1xf32>
    %138 = arith.divf %136, %137 : vector<32x1xf32>
    %139 = vector.broadcast %138 : vector<32x1xf32> to vector<32x256xf32>
    %140 = arith.mulf %117, %139 : vector<32x256xf32>
    %c3_70 = arith.constant 3 : index
    %c0_71 = arith.constant 0 : index
    %c0_72 = arith.constant 0 : index
    %141 = vector.load %arg10[%c3_70, %c0_71, %c0_72] : memref<4x32x256xf32, #tpu.memory_space<vmem>>, vector<1x32x256xf32>
    %142 = vector.shape_cast %141 : vector<1x32x256xf32> to vector<32x256xf32>
    %143 = vector.shape_cast %140 : vector<32x256xf32> to vector<1x32x256xf32>
    tpu.vector_store %arg10[%c3_70, %c0_71, %c0_72], %143 {strides = array<i32>} : memref<4x32x256xf32, #tpu.memory_space<vmem>>, vector<1x32x256xf32>,
    %cst_73 = arith.constant dense<0.000000e+00> : vector<256xf32>
    %144 = vector.multi_reduction <add>, %140, %cst_73 [0] : vector<32x256xf32> to vector<256xf32>
    %145 = vector.shape_cast %144 : vector<256xf32> to vector<1x256xf32>
    %cst_74 = arith.constant 3.200000e+01 : f32
    %146 = vector.broadcast %cst_74 : f32 to vector<1x256xf32>
    %147 = arith.divf %145, %146 : vector<1x256xf32>
    %c3_75 = arith.constant 3 : index
    %c128_76 = arith.constant 128 : index
    %148 = vector.load %arg11[%c3_75, %c128_76] : memref<8x512xf32, #tpu.memory_space<vmem>>, vector<1x256xf32>
    tpu.vector_store %arg11[%c3_75, %c128_76], %147 {strides = array<i32>} : memref<8x512xf32, #tpu.memory_space<vmem>>, vector<1x256xf32>,
    %cst_77 = arith.constant dense<0xFF800000> : vector<256xf32>
    %149 = vector.multi_reduction <maximumf>, %140, %cst_77 [0] : vector<32x256xf32> to vector<256xf32>
    %150 = vector.shape_cast %149 : vector<256xf32> to vector<1x256xf32>
    %c7 = arith.constant 7 : index
    %c128_78 = arith.constant 128 : index
    %151 = vector.load %arg11[%c7, %c128_78] : memref<8x512xf32, #tpu.memory_space<vmem>>, vector<1x256xf32>
    tpu.vector_store %arg11[%c7, %c128_78], %150 {strides = array<i32>} : memref<8x512xf32, #tpu.memory_space<vmem>>, vector<1x256xf32>,
    %152 = tpu.iota {dimensions = array<i32: 0>} : vector<8x1xi32>
    %c4_i32 = arith.constant 4 : i32
    %153 = vector.broadcast %c4_i32 : i32 to vector<8x1xi32>
    %154 = arith.cmpi slt, %152, %153 : vector<8x1xi32>
    %c0_79 = arith.constant 0 : index
    %c0_80 = arith.constant 0 : index
    %155 = vector.load %arg6[%c0_79, %c0_80] : memref<7x256xf32, #tpu.memory_space<vmem>>, vector<7x256xf32>
    %c0_81 = arith.constant 0 : index
    %156 = memref.load %arg7[%c0_81] : memref<98xf32, #tpu.memory_space<smem>>
    %c49 = arith.constant 49 : index
    %157 = memref.load %arg7[%c49] : memref<98xf32, #tpu.memory_space<smem>>
    %158 = vector.broadcast %156 : f32 to vector<8x1xf32>
    %159 = vector.broadcast %157 : f32 to vector<8x1xf32>
    %160 = arith.select %154, %158, %159 : vector<8x1xi1>, vector<8x1xf32>
    %c0_82 = arith.constant 0 : index
    %c77 = arith.constant 77 : index
    %161 = vector.load %arg11[%c0_82, %c77] : memref<8x512xf32, #tpu.memory_space<vmem>>, vector<8x256xf32>
    %162 = vector.broadcast %160 : vector<8x1xf32> to vector<8x256xf32>
    %163 = arith.mulf %162, %161 : vector<8x256xf32>
    %c7_83 = arith.constant 7 : index
    %164 = memref.load %arg7[%c7_83] : memref<98xf32, #tpu.memory_space<smem>>
    %c56 = arith.constant 56 : index
    %165 = memref.load %arg7[%c56] : memref<98xf32, #tpu.memory_space<smem>>
    %166 = vector.broadcast %164 : f32 to vector<8x1xf32>
    %167 = vector.broadcast %165 : f32 to vector<8x1xf32>
    %168 = arith.select %154, %166, %167 : vector<8x1xi1>, vector<8x1xf32>
    %c0_84 = arith.constant 0 : index
    %c93 = arith.constant 93 : index
    %169 = vector.load %arg11[%c0_84, %c93] : memref<8x512xf32, #tpu.memory_space<vmem>>, vector<8x256xf32>
    %170 = vector.broadcast %168 : vector<8x1xf32> to vector<8x256xf32>
    %171 = arith.mulf %170, %169 : vector<8x256xf32>
    %c14 = arith.constant 14 : index
    %172 = memref.load %arg7[%c14] : memref<98xf32, #tpu.memory_space<smem>>
    %c63 = arith.constant 63 : index
    %173 = memref.load %arg7[%c63] : memref<98xf32, #tpu.memory_space<smem>>
    %174 = vector.broadcast %172 : f32 to vector<8x1xf32>
    %175 = vector.broadcast %173 : f32 to vector<8x1xf32>
    %176 = arith.select %154, %174, %175 : vector<8x1xi1>, vector<8x1xf32>
    %c0_85 = arith.constant 0 : index
    %c109 = arith.constant 109 : index
    %177 = vector.load %arg11[%c0_85, %c109] : memref<8x512xf32, #tpu.memory_space<vmem>>, vector<8x256xf32>
    %178 = vector.broadcast %176 : vector<8x1xf32> to vector<8x256xf32>
    %179 = arith.mulf %178, %177 : vector<8x256xf32>
    %180 = arith.addf %163, %179 : vector<8x256xf32>
    %c21 = arith.constant 21 : index
    %181 = memref.load %arg7[%c21] : memref<98xf32, #tpu.memory_space<smem>>
    %c70 = arith.constant 70 : index
    %182 = memref.load %arg7[%c70] : memref<98xf32, #tpu.memory_space<smem>>
    %183 = vector.broadcast %181 : f32 to vector<8x1xf32>
    %184 = vector.broadcast %182 : f32 to vector<8x1xf32>
    %185 = arith.select %154, %183, %184 : vector<8x1xi1>, vector<8x1xf32>
    %c0_86 = arith.constant 0 : index
    %c125 = arith.constant 125 : index
    %186 = vector.load %arg11[%c0_86, %c125] : memref<8x512xf32, #tpu.memory_space<vmem>>, vector<8x256xf32>
    %187 = vector.broadcast %185 : vector<8x1xf32> to vector<8x256xf32>
    %188 = arith.mulf %187, %186 : vector<8x256xf32>
    %189 = arith.addf %171, %188 : vector<8x256xf32>
    %c28 = arith.constant 28 : index
    %190 = memref.load %arg7[%c28] : memref<98xf32, #tpu.memory_space<smem>>
    %c77_87 = arith.constant 77 : index
    %191 = memref.load %arg7[%c77_87] : memref<98xf32, #tpu.memory_space<smem>>
    %192 = vector.broadcast %190 : f32 to vector<8x1xf32>
    %193 = vector.broadcast %191 : f32 to vector<8x1xf32>
    %194 = arith.select %154, %192, %193 : vector<8x1xi1>, vector<8x1xf32>
    %c0_88 = arith.constant 0 : index
    %c141 = arith.constant 141 : index
    %195 = vector.load %arg11[%c0_88, %c141] : memref<8x512xf32, #tpu.memory_space<vmem>>, vector<8x256xf32>
    %196 = vector.broadcast %194 : vector<8x1xf32> to vector<8x256xf32>
    %197 = arith.mulf %196, %195 : vector<8x256xf32>
    %198 = arith.addf %180, %197 : vector<8x256xf32>
    %c35 = arith.constant 35 : index
    %199 = memref.load %arg7[%c35] : memref<98xf32, #tpu.memory_space<smem>>
    %c84 = arith.constant 84 : index
    %200 = memref.load %arg7[%c84] : memref<98xf32, #tpu.memory_space<smem>>
    %201 = vector.broadcast %199 : f32 to vector<8x1xf32>
    %202 = vector.broadcast %200 : f32 to vector<8x1xf32>
    %203 = arith.select %154, %201, %202 : vector<8x1xi1>, vector<8x1xf32>
    %c0_89 = arith.constant 0 : index
    %c157 = arith.constant 157 : index
    %204 = vector.load %arg11[%c0_89, %c157] : memref<8x512xf32, #tpu.memory_space<vmem>>, vector<8x256xf32>
    %205 = vector.broadcast %203 : vector<8x1xf32> to vector<8x256xf32>
    %206 = arith.mulf %205, %204 : vector<8x256xf32>
    %207 = arith.addf %189, %206 : vector<8x256xf32>
    %c42 = arith.constant 42 : index
    %208 = memref.load %arg7[%c42] : memref<98xf32, #tpu.memory_space<smem>>
    %c91 = arith.constant 91 : index
    %209 = memref.load %arg7[%c91] : memref<98xf32, #tpu.memory_space<smem>>
    %210 = vector.broadcast %208 : f32 to vector<8x1xf32>
    %211 = vector.broadcast %209 : f32 to vector<8x1xf32>
    %212 = arith.select %154, %210, %211 : vector<8x1xi1>, vector<8x1xf32>
    %c0_90 = arith.constant 0 : index
    %c173 = arith.constant 173 : index
    %213 = vector.load %arg11[%c0_90, %c173] : memref<8x512xf32, #tpu.memory_space<vmem>>, vector<8x256xf32>
    %214 = vector.broadcast %212 : vector<8x1xf32> to vector<8x256xf32>
    %215 = arith.mulf %214, %213 : vector<8x256xf32>
    %216 = arith.addf %198, %215 : vector<8x256xf32>
    %217 = arith.addf %216, %207 : vector<8x256xf32>
    %218 = vector.extract_strided_slice %155 {offsets = [0, 0], sizes = [1, 256], strides = [1, 1]} : vector<7x256xf32> to vector<1x256xf32>
    %219 = vector.broadcast %218 : vector<1x256xf32> to vector<8x256xf32>
    %220 = arith.mulf %217, %219 : vector<8x256xf32>
    %c1_91 = arith.constant 1 : index
    %221 = memref.load %arg7[%c1_91] : memref<98xf32, #tpu.memory_space<smem>>
    %c50 = arith.constant 50 : index
    %222 = memref.load %arg7[%c50] : memref<98xf32, #tpu.memory_space<smem>>
    %223 = vector.broadcast %221 : f32 to vector<8x1xf32>
    %224 = vector.broadcast %222 : f32 to vector<8x1xf32>
    %225 = arith.select %154, %223, %224 : vector<8x1xi1>, vector<8x1xf32>
    %c0_92 = arith.constant 0 : index
    %c78 = arith.constant 78 : index
    %226 = vector.load %arg11[%c0_92, %c78] : memref<8x512xf32, #tpu.memory_space<vmem>>, vector<8x256xf32>
    %227 = vector.broadcast %225 : vector<8x1xf32> to vector<8x256xf32>
    %228 = arith.mulf %227, %226 : vector<8x256xf32>
    %c8 = arith.constant 8 : index
    %229 = memref.load %arg7[%c8] : memref<98xf32, #tpu.memory_space<smem>>
    %c57 = arith.constant 57 : index
    %230 = memref.load %arg7[%c57] : memref<98xf32, #tpu.memory_space<smem>>
    %231 = vector.broadcast %229 : f32 to vector<8x1xf32>
    %232 = vector.broadcast %230 : f32 to vector<8x1xf32>
    %233 = arith.select %154, %231, %232 : vector<8x1xi1>, vector<8x1xf32>
    %c0_93 = arith.constant 0 : index
    %c94 = arith.constant 94 : index
    %234 = vector.load %arg11[%c0_93, %c94] : memref<8x512xf32, #tpu.memory_space<vmem>>, vector<8x256xf32>
    %235 = vector.broadcast %233 : vector<8x1xf32> to vector<8x256xf32>
    %236 = arith.mulf %235, %234 : vector<8x256xf32>
    %c15 = arith.constant 15 : index
    %237 = memref.load %arg7[%c15] : memref<98xf32, #tpu.memory_space<smem>>
    %c64 = arith.constant 64 : index
    %238 = memref.load %arg7[%c64] : memref<98xf32, #tpu.memory_space<smem>>
    %239 = vector.broadcast %237 : f32 to vector<8x1xf32>
    %240 = vector.broadcast %238 : f32 to vector<8x1xf32>
    %241 = arith.select %154, %239, %240 : vector<8x1xi1>, vector<8x1xf32>
    %c0_94 = arith.constant 0 : index
    %c110 = arith.constant 110 : index
    %242 = vector.load %arg11[%c0_94, %c110] : memref<8x512xf32, #tpu.memory_space<vmem>>, vector<8x256xf32>
    %243 = vector.broadcast %241 : vector<8x1xf32> to vector<8x256xf32>
    %244 = arith.mulf %243, %242 : vector<8x256xf32>
    %245 = arith.addf %228, %244 : vector<8x256xf32>
    %c22 = arith.constant 22 : index
    %246 = memref.load %arg7[%c22] : memref<98xf32, #tpu.memory_space<smem>>
    %c71 = arith.constant 71 : index
    %247 = memref.load %arg7[%c71] : memref<98xf32, #tpu.memory_space<smem>>
    %248 = vector.broadcast %246 : f32 to vector<8x1xf32>
    %249 = vector.broadcast %247 : f32 to vector<8x1xf32>
    %250 = arith.select %154, %248, %249 : vector<8x1xi1>, vector<8x1xf32>
    %c0_95 = arith.constant 0 : index
    %c126 = arith.constant 126 : index
    %251 = vector.load %arg11[%c0_95, %c126] : memref<8x512xf32, #tpu.memory_space<vmem>>, vector<8x256xf32>
    %252 = vector.broadcast %250 : vector<8x1xf32> to vector<8x256xf32>
    %253 = arith.mulf %252, %251 : vector<8x256xf32>
    %254 = arith.addf %236, %253 : vector<8x256xf32>
    %c29 = arith.constant 29 : index
    %255 = memref.load %arg7[%c29] : memref<98xf32, #tpu.memory_space<smem>>
    %c78_96 = arith.constant 78 : index
    %256 = memref.load %arg7[%c78_96] : memref<98xf32, #tpu.memory_space<smem>>
    %257 = vector.broadcast %255 : f32 to vector<8x1xf32>
    %258 = vector.broadcast %256 : f32 to vector<8x1xf32>
    %259 = arith.select %154, %257, %258 : vector<8x1xi1>, vector<8x1xf32>
    %c0_97 = arith.constant 0 : index
    %c142 = arith.constant 142 : index
    %260 = vector.load %arg11[%c0_97, %c142] : memref<8x512xf32, #tpu.memory_space<vmem>>, vector<8x256xf32>
    %261 = vector.broadcast %259 : vector<8x1xf32> to vector<8x256xf32>
    %262 = arith.mulf %261, %260 : vector<8x256xf32>
    %263 = arith.addf %245, %262 : vector<8x256xf32>
    %c36 = arith.constant 36 : index
    %264 = memref.load %arg7[%c36] : memref<98xf32, #tpu.memory_space<smem>>
    %c85 = arith.constant 85 : index
    %265 = memref.load %arg7[%c85] : memref<98xf32, #tpu.memory_space<smem>>
    %266 = vector.broadcast %264 : f32 to vector<8x1xf32>
    %267 = vector.broadcast %265 : f32 to vector<8x1xf32>
    %268 = arith.select %154, %266, %267 : vector<8x1xi1>, vector<8x1xf32>
    %c0_98 = arith.constant 0 : index
    %c158 = arith.constant 158 : index
    %269 = vector.load %arg11[%c0_98, %c158] : memref<8x512xf32, #tpu.memory_space<vmem>>, vector<8x256xf32>
    %270 = vector.broadcast %268 : vector<8x1xf32> to vector<8x256xf32>
    %271 = arith.mulf %270, %269 : vector<8x256xf32>
    %272 = arith.addf %254, %271 : vector<8x256xf32>
    %c43 = arith.constant 43 : index
    %273 = memref.load %arg7[%c43] : memref<98xf32, #tpu.memory_space<smem>>
    %c92 = arith.constant 92 : index
    %274 = memref.load %arg7[%c92] : memref<98xf32, #tpu.memory_space<smem>>
    %275 = vector.broadcast %273 : f32 to vector<8x1xf32>
    %276 = vector.broadcast %274 : f32 to vector<8x1xf32>
    %277 = arith.select %154, %275, %276 : vector<8x1xi1>, vector<8x1xf32>
    %c0_99 = arith.constant 0 : index
    %c174 = arith.constant 174 : index
    %278 = vector.load %arg11[%c0_99, %c174] : memref<8x512xf32, #tpu.memory_space<vmem>>, vector<8x256xf32>
    %279 = vector.broadcast %277 : vector<8x1xf32> to vector<8x256xf32>
    %280 = arith.mulf %279, %278 : vector<8x256xf32>
    %281 = arith.addf %263, %280 : vector<8x256xf32>
    %282 = arith.addf %281, %272 : vector<8x256xf32>
    %283 = vector.extract_strided_slice %155 {offsets = [1, 0], sizes = [1, 256], strides = [1, 1]} : vector<7x256xf32> to vector<1x256xf32>
    %284 = vector.broadcast %283 : vector<1x256xf32> to vector<8x256xf32>
    %285 = arith.mulf %282, %284 : vector<8x256xf32>
    %c2_100 = arith.constant 2 : index
    %286 = memref.load %arg7[%c2_100] : memref<98xf32, #tpu.memory_space<smem>>
    %c51 = arith.constant 51 : index
    %287 = memref.load %arg7[%c51] : memref<98xf32, #tpu.memory_space<smem>>
    %288 = vector.broadcast %286 : f32 to vector<8x1xf32>
    %289 = vector.broadcast %287 : f32 to vector<8x1xf32>
    %290 = arith.select %154, %288, %289 : vector<8x1xi1>, vector<8x1xf32>
    %c0_101 = arith.constant 0 : index
    %c79 = arith.constant 79 : index
    %291 = vector.load %arg11[%c0_101, %c79] : memref<8x512xf32, #tpu.memory_space<vmem>>, vector<8x256xf32>
    %292 = vector.broadcast %290 : vector<8x1xf32> to vector<8x256xf32>
    %293 = arith.mulf %292, %291 : vector<8x256xf32>
    %c9 = arith.constant 9 : index
    %294 = memref.load %arg7[%c9] : memref<98xf32, #tpu.memory_space<smem>>
    %c58 = arith.constant 58 : index
    %295 = memref.load %arg7[%c58] : memref<98xf32, #tpu.memory_space<smem>>
    %296 = vector.broadcast %294 : f32 to vector<8x1xf32>
    %297 = vector.broadcast %295 : f32 to vector<8x1xf32>
    %298 = arith.select %154, %296, %297 : vector<8x1xi1>, vector<8x1xf32>
    %c0_102 = arith.constant 0 : index
    %c95 = arith.constant 95 : index
    %299 = vector.load %arg11[%c0_102, %c95] : memref<8x512xf32, #tpu.memory_space<vmem>>, vector<8x256xf32>
    %300 = vector.broadcast %298 : vector<8x1xf32> to vector<8x256xf32>
    %301 = arith.mulf %300, %299 : vector<8x256xf32>
    %c16 = arith.constant 16 : index
    %302 = memref.load %arg7[%c16] : memref<98xf32, #tpu.memory_space<smem>>
    %c65 = arith.constant 65 : index
    %303 = memref.load %arg7[%c65] : memref<98xf32, #tpu.memory_space<smem>>
    %304 = vector.broadcast %302 : f32 to vector<8x1xf32>
    %305 = vector.broadcast %303 : f32 to vector<8x1xf32>
    %306 = arith.select %154, %304, %305 : vector<8x1xi1>, vector<8x1xf32>
    %c0_103 = arith.constant 0 : index
    %c111 = arith.constant 111 : index
    %307 = vector.load %arg11[%c0_103, %c111] : memref<8x512xf32, #tpu.memory_space<vmem>>, vector<8x256xf32>
    %308 = vector.broadcast %306 : vector<8x1xf32> to vector<8x256xf32>
    %309 = arith.mulf %308, %307 : vector<8x256xf32>
    %310 = arith.addf %293, %309 : vector<8x256xf32>
    %c23 = arith.constant 23 : index
    %311 = memref.load %arg7[%c23] : memref<98xf32, #tpu.memory_space<smem>>
    %c72 = arith.constant 72 : index
    %312 = memref.load %arg7[%c72] : memref<98xf32, #tpu.memory_space<smem>>
    %313 = vector.broadcast %311 : f32 to vector<8x1xf32>
    %314 = vector.broadcast %312 : f32 to vector<8x1xf32>
    %315 = arith.select %154, %313, %314 : vector<8x1xi1>, vector<8x1xf32>
    %c0_104 = arith.constant 0 : index
    %c127 = arith.constant 127 : index
    %316 = vector.load %arg11[%c0_104, %c127] : memref<8x512xf32, #tpu.memory_space<vmem>>, vector<8x256xf32>
    %317 = vector.broadcast %315 : vector<8x1xf32> to vector<8x256xf32>
    %318 = arith.mulf %317, %316 : vector<8x256xf32>
    %319 = arith.addf %301, %318 : vector<8x256xf32>
    %c30 = arith.constant 30 : index
    %320 = memref.load %arg7[%c30] : memref<98xf32, #tpu.memory_space<smem>>
    %c79_105 = arith.constant 79 : index
    %321 = memref.load %arg7[%c79_105] : memref<98xf32, #tpu.memory_space<smem>>
    %322 = vector.broadcast %320 : f32 to vector<8x1xf32>
    %323 = vector.broadcast %321 : f32 to vector<8x1xf32>
    %324 = arith.select %154, %322, %323 : vector<8x1xi1>, vector<8x1xf32>
    %c0_106 = arith.constant 0 : index
    %c143 = arith.constant 143 : index
    %325 = vector.load %arg11[%c0_106, %c143] : memref<8x512xf32, #tpu.memory_space<vmem>>, vector<8x256xf32>
    %326 = vector.broadcast %324 : vector<8x1xf32> to vector<8x256xf32>
    %327 = arith.mulf %326, %325 : vector<8x256xf32>
    %328 = arith.addf %310, %327 : vector<8x256xf32>
    %c37 = arith.constant 37 : index
    %329 = memref.load %arg7[%c37] : memref<98xf32, #tpu.memory_space<smem>>
    %c86 = arith.constant 86 : index
    %330 = memref.load %arg7[%c86] : memref<98xf32, #tpu.memory_space<smem>>
    %331 = vector.broadcast %329 : f32 to vector<8x1xf32>
    %332 = vector.broadcast %330 : f32 to vector<8x1xf32>
    %333 = arith.select %154, %331, %332 : vector<8x1xi1>, vector<8x1xf32>
    %c0_107 = arith.constant 0 : index
    %c159 = arith.constant 159 : index
    %334 = vector.load %arg11[%c0_107, %c159] : memref<8x512xf32, #tpu.memory_space<vmem>>, vector<8x256xf32>
    %335 = vector.broadcast %333 : vector<8x1xf32> to vector<8x256xf32>
    %336 = arith.mulf %335, %334 : vector<8x256xf32>
    %337 = arith.addf %319, %336 : vector<8x256xf32>
    %c44 = arith.constant 44 : index
    %338 = memref.load %arg7[%c44] : memref<98xf32, #tpu.memory_space<smem>>
    %c93_108 = arith.constant 93 : index
    %339 = memref.load %arg7[%c93_108] : memref<98xf32, #tpu.memory_space<smem>>
    %340 = vector.broadcast %338 : f32 to vector<8x1xf32>
    %341 = vector.broadcast %339 : f32 to vector<8x1xf32>
    %342 = arith.select %154, %340, %341 : vector<8x1xi1>, vector<8x1xf32>
    %c0_109 = arith.constant 0 : index
    %c175 = arith.constant 175 : index
    %343 = vector.load %arg11[%c0_109, %c175] : memref<8x512xf32, #tpu.memory_space<vmem>>, vector<8x256xf32>
    %344 = vector.broadcast %342 : vector<8x1xf32> to vector<8x256xf32>
    %345 = arith.mulf %344, %343 : vector<8x256xf32>
    %346 = arith.addf %328, %345 : vector<8x256xf32>
    %347 = arith.addf %346, %337 : vector<8x256xf32>
    %348 = vector.extract_strided_slice %155 {offsets = [2, 0], sizes = [1, 256], strides = [1, 1]} : vector<7x256xf32> to vector<1x256xf32>
    %349 = vector.broadcast %348 : vector<1x256xf32> to vector<8x256xf32>
    %350 = arith.mulf %347, %349 : vector<8x256xf32>
    %351 = arith.addf %220, %350 : vector<8x256xf32>
    %c3_110 = arith.constant 3 : index
    %352 = memref.load %arg7[%c3_110] : memref<98xf32, #tpu.memory_space<smem>>
    %c52 = arith.constant 52 : index
    %353 = memref.load %arg7[%c52] : memref<98xf32, #tpu.memory_space<smem>>
    %354 = vector.broadcast %352 : f32 to vector<8x1xf32>
    %355 = vector.broadcast %353 : f32 to vector<8x1xf32>
    %356 = arith.select %154, %354, %355 : vector<8x1xi1>, vector<8x1xf32>
    %c0_111 = arith.constant 0 : index
    %c80 = arith.constant 80 : index
    %357 = vector.load %arg11[%c0_111, %c80] : memref<8x512xf32, #tpu.memory_space<vmem>>, vector<8x256xf32>
    %358 = vector.broadcast %356 : vector<8x1xf32> to vector<8x256xf32>
    %359 = arith.mulf %358, %357 : vector<8x256xf32>
    %c10 = arith.constant 10 : index
    %360 = memref.load %arg7[%c10] : memref<98xf32, #tpu.memory_space<smem>>
    %c59 = arith.constant 59 : index
    %361 = memref.load %arg7[%c59] : memref<98xf32, #tpu.memory_space<smem>>
    %362 = vector.broadcast %360 : f32 to vector<8x1xf32>
    %363 = vector.broadcast %361 : f32 to vector<8x1xf32>
    %364 = arith.select %154, %362, %363 : vector<8x1xi1>, vector<8x1xf32>
    %c0_112 = arith.constant 0 : index
    %c96 = arith.constant 96 : index
    %365 = vector.load %arg11[%c0_112, %c96] : memref<8x512xf32, #tpu.memory_space<vmem>>, vector<8x256xf32>
    %366 = vector.broadcast %364 : vector<8x1xf32> to vector<8x256xf32>
    %367 = arith.mulf %366, %365 : vector<8x256xf32>
    %c17 = arith.constant 17 : index
    %368 = memref.load %arg7[%c17] : memref<98xf32, #tpu.memory_space<smem>>
    %c66 = arith.constant 66 : index
    %369 = memref.load %arg7[%c66] : memref<98xf32, #tpu.memory_space<smem>>
    %370 = vector.broadcast %368 : f32 to vector<8x1xf32>
    %371 = vector.broadcast %369 : f32 to vector<8x1xf32>
    %372 = arith.select %154, %370, %371 : vector<8x1xi1>, vector<8x1xf32>
    %c0_113 = arith.constant 0 : index
    %c112 = arith.constant 112 : index
    %373 = vector.load %arg11[%c0_113, %c112] : memref<8x512xf32, #tpu.memory_space<vmem>>, vector<8x256xf32>
    %374 = vector.broadcast %372 : vector<8x1xf32> to vector<8x256xf32>
    %375 = arith.mulf %374, %373 : vector<8x256xf32>
    %376 = arith.addf %359, %375 : vector<8x256xf32>
    %c24 = arith.constant 24 : index
    %377 = memref.load %arg7[%c24] : memref<98xf32, #tpu.memory_space<smem>>
    %c73 = arith.constant 73 : index
    %378 = memref.load %arg7[%c73] : memref<98xf32, #tpu.memory_space<smem>>
    %379 = vector.broadcast %377 : f32 to vector<8x1xf32>
    %380 = vector.broadcast %378 : f32 to vector<8x1xf32>
    %381 = arith.select %154, %379, %380 : vector<8x1xi1>, vector<8x1xf32>
    %c0_114 = arith.constant 0 : index
    %c128_115 = arith.constant 128 : index
    %382 = vector.load %arg11[%c0_114, %c128_115] : memref<8x512xf32, #tpu.memory_space<vmem>>, vector<8x256xf32>
    %383 = vector.broadcast %381 : vector<8x1xf32> to vector<8x256xf32>
    %384 = arith.mulf %383, %382 : vector<8x256xf32>
    %385 = arith.addf %367, %384 : vector<8x256xf32>
    %c31 = arith.constant 31 : index
    %386 = memref.load %arg7[%c31] : memref<98xf32, #tpu.memory_space<smem>>
    %c80_116 = arith.constant 80 : index
    %387 = memref.load %arg7[%c80_116] : memref<98xf32, #tpu.memory_space<smem>>
    %388 = vector.broadcast %386 : f32 to vector<8x1xf32>
    %389 = vector.broadcast %387 : f32 to vector<8x1xf32>
    %390 = arith.select %154, %388, %389 : vector<8x1xi1>, vector<8x1xf32>
    %c0_117 = arith.constant 0 : index
    %c144 = arith.constant 144 : index
    %391 = vector.load %arg11[%c0_117, %c144] : memref<8x512xf32, #tpu.memory_space<vmem>>, vector<8x256xf32>
    %392 = vector.broadcast %390 : vector<8x1xf32> to vector<8x256xf32>
    %393 = arith.mulf %392, %391 : vector<8x256xf32>
    %394 = arith.addf %376, %393 : vector<8x256xf32>
    %c38 = arith.constant 38 : index
    %395 = memref.load %arg7[%c38] : memref<98xf32, #tpu.memory_space<smem>>
    %c87 = arith.constant 87 : index
    %396 = memref.load %arg7[%c87] : memref<98xf32, #tpu.memory_space<smem>>
    %397 = vector.broadcast %395 : f32 to vector<8x1xf32>
    %398 = vector.broadcast %396 : f32 to vector<8x1xf32>
    %399 = arith.select %154, %397, %398 : vector<8x1xi1>, vector<8x1xf32>
    %c0_118 = arith.constant 0 : index
    %c160 = arith.constant 160 : index
    %400 = vector.load %arg11[%c0_118, %c160] : memref<8x512xf32, #tpu.memory_space<vmem>>, vector<8x256xf32>
    %401 = vector.broadcast %399 : vector<8x1xf32> to vector<8x256xf32>
    %402 = arith.mulf %401, %400 : vector<8x256xf32>
    %403 = arith.addf %385, %402 : vector<8x256xf32>
    %c45 = arith.constant 45 : index
    %404 = memref.load %arg7[%c45] : memref<98xf32, #tpu.memory_space<smem>>
    %c94_119 = arith.constant 94 : index
    %405 = memref.load %arg7[%c94_119] : memref<98xf32, #tpu.memory_space<smem>>
    %406 = vector.broadcast %404 : f32 to vector<8x1xf32>
    %407 = vector.broadcast %405 : f32 to vector<8x1xf32>
    %408 = arith.select %154, %406, %407 : vector<8x1xi1>, vector<8x1xf32>
    %c0_120 = arith.constant 0 : index
    %c176 = arith.constant 176 : index
    %409 = vector.load %arg11[%c0_120, %c176] : memref<8x512xf32, #tpu.memory_space<vmem>>, vector<8x256xf32>
    %410 = vector.broadcast %408 : vector<8x1xf32> to vector<8x256xf32>
    %411 = arith.mulf %410, %409 : vector<8x256xf32>
    %412 = arith.addf %394, %411 : vector<8x256xf32>
    %413 = arith.addf %412, %403 : vector<8x256xf32>
    %414 = vector.extract_strided_slice %155 {offsets = [3, 0], sizes = [1, 256], strides = [1, 1]} : vector<7x256xf32> to vector<1x256xf32>
    %415 = vector.broadcast %414 : vector<1x256xf32> to vector<8x256xf32>
    %416 = arith.mulf %413, %415 : vector<8x256xf32>
    %417 = arith.addf %285, %416 : vector<8x256xf32>
    %c4_121 = arith.constant 4 : index
    %418 = memref.load %arg7[%c4_121] : memref<98xf32, #tpu.memory_space<smem>>
    %c53 = arith.constant 53 : index
    %419 = memref.load %arg7[%c53] : memref<98xf32, #tpu.memory_space<smem>>
    %420 = vector.broadcast %418 : f32 to vector<8x1xf32>
    %421 = vector.broadcast %419 : f32 to vector<8x1xf32>
    %422 = arith.select %154, %420, %421 : vector<8x1xi1>, vector<8x1xf32>
    %c0_122 = arith.constant 0 : index
    %c81 = arith.constant 81 : index
    %423 = vector.load %arg11[%c0_122, %c81] : memref<8x512xf32, #tpu.memory_space<vmem>>, vector<8x256xf32>
    %424 = vector.broadcast %422 : vector<8x1xf32> to vector<8x256xf32>
    %425 = arith.mulf %424, %423 : vector<8x256xf32>
    %c11 = arith.constant 11 : index
    %426 = memref.load %arg7[%c11] : memref<98xf32, #tpu.memory_space<smem>>
    %c60 = arith.constant 60 : index
    %427 = memref.load %arg7[%c60] : memref<98xf32, #tpu.memory_space<smem>>
    %428 = vector.broadcast %426 : f32 to vector<8x1xf32>
    %429 = vector.broadcast %427 : f32 to vector<8x1xf32>
    %430 = arith.select %154, %428, %429 : vector<8x1xi1>, vector<8x1xf32>
    %c0_123 = arith.constant 0 : index
    %c97 = arith.constant 97 : index
    %431 = vector.load %arg11[%c0_123, %c97] : memref<8x512xf32, #tpu.memory_space<vmem>>, vector<8x256xf32>
    %432 = vector.broadcast %430 : vector<8x1xf32> to vector<8x256xf32>
    %433 = arith.mulf %432, %431 : vector<8x256xf32>
    %c18 = arith.constant 18 : index
    %434 = memref.load %arg7[%c18] : memref<98xf32, #tpu.memory_space<smem>>
    %c67 = arith.constant 67 : index
    %435 = memref.load %arg7[%c67] : memref<98xf32, #tpu.memory_space<smem>>
    %436 = vector.broadcast %434 : f32 to vector<8x1xf32>
    %437 = vector.broadcast %435 : f32 to vector<8x1xf32>
    %438 = arith.select %154, %436, %437 : vector<8x1xi1>, vector<8x1xf32>
    %c0_124 = arith.constant 0 : index
    %c113 = arith.constant 113 : index
    %439 = vector.load %arg11[%c0_124, %c113] : memref<8x512xf32, #tpu.memory_space<vmem>>, vector<8x256xf32>
    %440 = vector.broadcast %438 : vector<8x1xf32> to vector<8x256xf32>
    %441 = arith.mulf %440, %439 : vector<8x256xf32>
    %442 = arith.addf %425, %441 : vector<8x256xf32>
    %c25 = arith.constant 25 : index
    %443 = memref.load %arg7[%c25] : memref<98xf32, #tpu.memory_space<smem>>
    %c74 = arith.constant 74 : index
    %444 = memref.load %arg7[%c74] : memref<98xf32, #tpu.memory_space<smem>>
    %445 = vector.broadcast %443 : f32 to vector<8x1xf32>
    %446 = vector.broadcast %444 : f32 to vector<8x1xf32>
    %447 = arith.select %154, %445, %446 : vector<8x1xi1>, vector<8x1xf32>
    %c0_125 = arith.constant 0 : index
    %c129 = arith.constant 129 : index
    %448 = vector.load %arg11[%c0_125, %c129] : memref<8x512xf32, #tpu.memory_space<vmem>>, vector<8x256xf32>
    %449 = vector.broadcast %447 : vector<8x1xf32> to vector<8x256xf32>
    %450 = arith.mulf %449, %448 : vector<8x256xf32>
    %451 = arith.addf %433, %450 : vector<8x256xf32>
    %c32 = arith.constant 32 : index
    %452 = memref.load %arg7[%c32] : memref<98xf32, #tpu.memory_space<smem>>
    %c81_126 = arith.constant 81 : index
    %453 = memref.load %arg7[%c81_126] : memref<98xf32, #tpu.memory_space<smem>>
    %454 = vector.broadcast %452 : f32 to vector<8x1xf32>
    %455 = vector.broadcast %453 : f32 to vector<8x1xf32>
    %456 = arith.select %154, %454, %455 : vector<8x1xi1>, vector<8x1xf32>
    %c0_127 = arith.constant 0 : index
    %c145 = arith.constant 145 : index
    %457 = vector.load %arg11[%c0_127, %c145] : memref<8x512xf32, #tpu.memory_space<vmem>>, vector<8x256xf32>
    %458 = vector.broadcast %456 : vector<8x1xf32> to vector<8x256xf32>
    %459 = arith.mulf %458, %457 : vector<8x256xf32>
    %460 = arith.addf %442, %459 : vector<8x256xf32>
    %c39 = arith.constant 39 : index
    %461 = memref.load %arg7[%c39] : memref<98xf32, #tpu.memory_space<smem>>
    %c88 = arith.constant 88 : index
    %462 = memref.load %arg7[%c88] : memref<98xf32, #tpu.memory_space<smem>>
    %463 = vector.broadcast %461 : f32 to vector<8x1xf32>
    %464 = vector.broadcast %462 : f32 to vector<8x1xf32>
    %465 = arith.select %154, %463, %464 : vector<8x1xi1>, vector<8x1xf32>
    %c0_128 = arith.constant 0 : index
    %c161 = arith.constant 161 : index
    %466 = vector.load %arg11[%c0_128, %c161] : memref<8x512xf32, #tpu.memory_space<vmem>>, vector<8x256xf32>
    %467 = vector.broadcast %465 : vector<8x1xf32> to vector<8x256xf32>
    %468 = arith.mulf %467, %466 : vector<8x256xf32>
    %469 = arith.addf %451, %468 : vector<8x256xf32>
    %c46 = arith.constant 46 : index
    %470 = memref.load %arg7[%c46] : memref<98xf32, #tpu.memory_space<smem>>
    %c95_129 = arith.constant 95 : index
    %471 = memref.load %arg7[%c95_129] : memref<98xf32, #tpu.memory_space<smem>>
    %472 = vector.broadcast %470 : f32 to vector<8x1xf32>
    %473 = vector.broadcast %471 : f32 to vector<8x1xf32>
    %474 = arith.select %154, %472, %473 : vector<8x1xi1>, vector<8x1xf32>
    %c0_130 = arith.constant 0 : index
    %c177 = arith.constant 177 : index
    %475 = vector.load %arg11[%c0_130, %c177] : memref<8x512xf32, #tpu.memory_space<vmem>>, vector<8x256xf32>
    %476 = vector.broadcast %474 : vector<8x1xf32> to vector<8x256xf32>
    %477 = arith.mulf %476, %475 : vector<8x256xf32>
    %478 = arith.addf %460, %477 : vector<8x256xf32>
    %479 = arith.addf %478, %469 : vector<8x256xf32>
    %480 = vector.extract_strided_slice %155 {offsets = [4, 0], sizes = [1, 256], strides = [1, 1]} : vector<7x256xf32> to vector<1x256xf32>
    %481 = vector.broadcast %480 : vector<1x256xf32> to vector<8x256xf32>
    %482 = arith.mulf %479, %481 : vector<8x256xf32>
    %483 = arith.addf %351, %482 : vector<8x256xf32>
    %c5_131 = arith.constant 5 : index
    %484 = memref.load %arg7[%c5_131] : memref<98xf32, #tpu.memory_space<smem>>
    %c54 = arith.constant 54 : index
    %485 = memref.load %arg7[%c54] : memref<98xf32, #tpu.memory_space<smem>>
    %486 = vector.broadcast %484 : f32 to vector<8x1xf32>
    %487 = vector.broadcast %485 : f32 to vector<8x1xf32>
    %488 = arith.select %154, %486, %487 : vector<8x1xi1>, vector<8x1xf32>
    %c0_132 = arith.constant 0 : index
    %c82 = arith.constant 82 : index
    %489 = vector.load %arg11[%c0_132, %c82] : memref<8x512xf32, #tpu.memory_space<vmem>>, vector<8x256xf32>
    %490 = vector.broadcast %488 : vector<8x1xf32> to vector<8x256xf32>
    %491 = arith.mulf %490, %489 : vector<8x256xf32>
    %c12 = arith.constant 12 : index
    %492 = memref.load %arg7[%c12] : memref<98xf32, #tpu.memory_space<smem>>
    %c61 = arith.constant 61 : index
    %493 = memref.load %arg7[%c61] : memref<98xf32, #tpu.memory_space<smem>>
    %494 = vector.broadcast %492 : f32 to vector<8x1xf32>
    %495 = vector.broadcast %493 : f32 to vector<8x1xf32>
    %496 = arith.select %154, %494, %495 : vector<8x1xi1>, vector<8x1xf32>
    %c0_133 = arith.constant 0 : index
    %c98 = arith.constant 98 : index
    %497 = vector.load %arg11[%c0_133, %c98] : memref<8x512xf32, #tpu.memory_space<vmem>>, vector<8x256xf32>
    %498 = vector.broadcast %496 : vector<8x1xf32> to vector<8x256xf32>
    %499 = arith.mulf %498, %497 : vector<8x256xf32>
    %c19 = arith.constant 19 : index
    %500 = memref.load %arg7[%c19] : memref<98xf32, #tpu.memory_space<smem>>
    %c68 = arith.constant 68 : index
    %501 = memref.load %arg7[%c68] : memref<98xf32, #tpu.memory_space<smem>>
    %502 = vector.broadcast %500 : f32 to vector<8x1xf32>
    %503 = vector.broadcast %501 : f32 to vector<8x1xf32>
    %504 = arith.select %154, %502, %503 : vector<8x1xi1>, vector<8x1xf32>
    %c0_134 = arith.constant 0 : index
    %c114 = arith.constant 114 : index
    %505 = vector.load %arg11[%c0_134, %c114] : memref<8x512xf32, #tpu.memory_space<vmem>>, vector<8x256xf32>
    %506 = vector.broadcast %504 : vector<8x1xf32> to vector<8x256xf32>
    %507 = arith.mulf %506, %505 : vector<8x256xf32>
    %508 = arith.addf %491, %507 : vector<8x256xf32>
    %c26 = arith.constant 26 : index
    %509 = memref.load %arg7[%c26] : memref<98xf32, #tpu.memory_space<smem>>
    %c75 = arith.constant 75 : index
    %510 = memref.load %arg7[%c75] : memref<98xf32, #tpu.memory_space<smem>>
    %511 = vector.broadcast %509 : f32 to vector<8x1xf32>
    %512 = vector.broadcast %510 : f32 to vector<8x1xf32>
    %513 = arith.select %154, %511, %512 : vector<8x1xi1>, vector<8x1xf32>
    %c0_135 = arith.constant 0 : index
    %c130 = arith.constant 130 : index
    %514 = vector.load %arg11[%c0_135, %c130] : memref<8x512xf32, #tpu.memory_space<vmem>>, vector<8x256xf32>
    %515 = vector.broadcast %513 : vector<8x1xf32> to vector<8x256xf32>
    %516 = arith.mulf %515, %514 : vector<8x256xf32>
    %517 = arith.addf %499, %516 : vector<8x256xf32>
    %c33 = arith.constant 33 : index
    %518 = memref.load %arg7[%c33] : memref<98xf32, #tpu.memory_space<smem>>
    %c82_136 = arith.constant 82 : index
    %519 = memref.load %arg7[%c82_136] : memref<98xf32, #tpu.memory_space<smem>>
    %520 = vector.broadcast %518 : f32 to vector<8x1xf32>
    %521 = vector.broadcast %519 : f32 to vector<8x1xf32>
    %522 = arith.select %154, %520, %521 : vector<8x1xi1>, vector<8x1xf32>
    %c0_137 = arith.constant 0 : index
    %c146 = arith.constant 146 : index
    %523 = vector.load %arg11[%c0_137, %c146] : memref<8x512xf32, #tpu.memory_space<vmem>>, vector<8x256xf32>
    %524 = vector.broadcast %522 : vector<8x1xf32> to vector<8x256xf32>
    %525 = arith.mulf %524, %523 : vector<8x256xf32>
    %526 = arith.addf %508, %525 : vector<8x256xf32>
    %c40 = arith.constant 40 : index
    %527 = memref.load %arg7[%c40] : memref<98xf32, #tpu.memory_space<smem>>
    %c89 = arith.constant 89 : index
    %528 = memref.load %arg7[%c89] : memref<98xf32, #tpu.memory_space<smem>>
    %529 = vector.broadcast %527 : f32 to vector<8x1xf32>
    %530 = vector.broadcast %528 : f32 to vector<8x1xf32>
    %531 = arith.select %154, %529, %530 : vector<8x1xi1>, vector<8x1xf32>
    %c0_138 = arith.constant 0 : index
    %c162 = arith.constant 162 : index
    %532 = vector.load %arg11[%c0_138, %c162] : memref<8x512xf32, #tpu.memory_space<vmem>>, vector<8x256xf32>
    %533 = vector.broadcast %531 : vector<8x1xf32> to vector<8x256xf32>
    %534 = arith.mulf %533, %532 : vector<8x256xf32>
    %535 = arith.addf %517, %534 : vector<8x256xf32>
    %c47 = arith.constant 47 : index
    %536 = memref.load %arg7[%c47] : memref<98xf32, #tpu.memory_space<smem>>
    %c96_139 = arith.constant 96 : index
    %537 = memref.load %arg7[%c96_139] : memref<98xf32, #tpu.memory_space<smem>>
    %538 = vector.broadcast %536 : f32 to vector<8x1xf32>
    %539 = vector.broadcast %537 : f32 to vector<8x1xf32>
    %540 = arith.select %154, %538, %539 : vector<8x1xi1>, vector<8x1xf32>
    %c0_140 = arith.constant 0 : index
    %c178 = arith.constant 178 : index
    %541 = vector.load %arg11[%c0_140, %c178] : memref<8x512xf32, #tpu.memory_space<vmem>>, vector<8x256xf32>
    %542 = vector.broadcast %540 : vector<8x1xf32> to vector<8x256xf32>
    %543 = arith.mulf %542, %541 : vector<8x256xf32>
    %544 = arith.addf %526, %543 : vector<8x256xf32>
    %545 = arith.addf %544, %535 : vector<8x256xf32>
    %546 = vector.extract_strided_slice %155 {offsets = [5, 0], sizes = [1, 256], strides = [1, 1]} : vector<7x256xf32> to vector<1x256xf32>
    %547 = vector.broadcast %546 : vector<1x256xf32> to vector<8x256xf32>
    %548 = arith.mulf %545, %547 : vector<8x256xf32>
    %549 = arith.addf %417, %548 : vector<8x256xf32>
    %c6_141 = arith.constant 6 : index
    %550 = memref.load %arg7[%c6_141] : memref<98xf32, #tpu.memory_space<smem>>
    %c55 = arith.constant 55 : index
    %551 = memref.load %arg7[%c55] : memref<98xf32, #tpu.memory_space<smem>>
    %552 = vector.broadcast %550 : f32 to vector<8x1xf32>
    %553 = vector.broadcast %551 : f32 to vector<8x1xf32>
    %554 = arith.select %154, %552, %553 : vector<8x1xi1>, vector<8x1xf32>
    %c0_142 = arith.constant 0 : index
    %c83 = arith.constant 83 : index
    %555 = vector.load %arg11[%c0_142, %c83] : memref<8x512xf32, #tpu.memory_space<vmem>>, vector<8x256xf32>
    %556 = vector.broadcast %554 : vector<8x1xf32> to vector<8x256xf32>
    %557 = arith.mulf %556, %555 : vector<8x256xf32>
    %c13 = arith.constant 13 : index
    %558 = memref.load %arg7[%c13] : memref<98xf32, #tpu.memory_space<smem>>
    %c62 = arith.constant 62 : index
    %559 = memref.load %arg7[%c62] : memref<98xf32, #tpu.memory_space<smem>>
    %560 = vector.broadcast %558 : f32 to vector<8x1xf32>
    %561 = vector.broadcast %559 : f32 to vector<8x1xf32>
    %562 = arith.select %154, %560, %561 : vector<8x1xi1>, vector<8x1xf32>
    %c0_143 = arith.constant 0 : index
    %c99 = arith.constant 99 : index
    %563 = vector.load %arg11[%c0_143, %c99] : memref<8x512xf32, #tpu.memory_space<vmem>>, vector<8x256xf32>
    %564 = vector.broadcast %562 : vector<8x1xf32> to vector<8x256xf32>
    %565 = arith.mulf %564, %563 : vector<8x256xf32>
    %c20 = arith.constant 20 : index
    %566 = memref.load %arg7[%c20] : memref<98xf32, #tpu.memory_space<smem>>
    %c69 = arith.constant 69 : index
    %567 = memref.load %arg7[%c69] : memref<98xf32, #tpu.memory_space<smem>>
    %568 = vector.broadcast %566 : f32 to vector<8x1xf32>
    %569 = vector.broadcast %567 : f32 to vector<8x1xf32>
    %570 = arith.select %154, %568, %569 : vector<8x1xi1>, vector<8x1xf32>
    %c0_144 = arith.constant 0 : index
    %c115 = arith.constant 115 : index
    %571 = vector.load %arg11[%c0_144, %c115] : memref<8x512xf32, #tpu.memory_space<vmem>>, vector<8x256xf32>
    %572 = vector.broadcast %570 : vector<8x1xf32> to vector<8x256xf32>
    %573 = arith.mulf %572, %571 : vector<8x256xf32>
    %574 = arith.addf %557, %573 : vector<8x256xf32>
    %c27 = arith.constant 27 : index
    %575 = memref.load %arg7[%c27] : memref<98xf32, #tpu.memory_space<smem>>
    %c76 = arith.constant 76 : index
    %576 = memref.load %arg7[%c76] : memref<98xf32, #tpu.memory_space<smem>>
    %577 = vector.broadcast %575 : f32 to vector<8x1xf32>
    %578 = vector.broadcast %576 : f32 to vector<8x1xf32>
    %579 = arith.select %154, %577, %578 : vector<8x1xi1>, vector<8x1xf32>
    %c0_145 = arith.constant 0 : index
    %c131 = arith.constant 131 : index
    %580 = vector.load %arg11[%c0_145, %c131] : memref<8x512xf32, #tpu.memory_space<vmem>>, vector<8x256xf32>
    %581 = vector.broadcast %579 : vector<8x1xf32> to vector<8x256xf32>
    %582 = arith.mulf %581, %580 : vector<8x256xf32>
    %583 = arith.addf %565, %582 : vector<8x256xf32>
    %c34 = arith.constant 34 : index
    %584 = memref.load %arg7[%c34] : memref<98xf32, #tpu.memory_space<smem>>
    %c83_146 = arith.constant 83 : index
    %585 = memref.load %arg7[%c83_146] : memref<98xf32, #tpu.memory_space<smem>>
    %586 = vector.broadcast %584 : f32 to vector<8x1xf32>
    %587 = vector.broadcast %585 : f32 to vector<8x1xf32>
    %588 = arith.select %154, %586, %587 : vector<8x1xi1>, vector<8x1xf32>
    %c0_147 = arith.constant 0 : index
    %c147 = arith.constant 147 : index
    %589 = vector.load %arg11[%c0_147, %c147] : memref<8x512xf32, #tpu.memory_space<vmem>>, vector<8x256xf32>
    %590 = vector.broadcast %588 : vector<8x1xf32> to vector<8x256xf32>
    %591 = arith.mulf %590, %589 : vector<8x256xf32>
    %592 = arith.addf %574, %591 : vector<8x256xf32>
    %c41 = arith.constant 41 : index
    %593 = memref.load %arg7[%c41] : memref<98xf32, #tpu.memory_space<smem>>
    %c90 = arith.constant 90 : index
    %594 = memref.load %arg7[%c90] : memref<98xf32, #tpu.memory_space<smem>>
    %595 = vector.broadcast %593 : f32 to vector<8x1xf32>
    %596 = vector.broadcast %594 : f32 to vector<8x1xf32>
    %597 = arith.select %154, %595, %596 : vector<8x1xi1>, vector<8x1xf32>
    %c0_148 = arith.constant 0 : index
    %c163 = arith.constant 163 : index
    %598 = vector.load %arg11[%c0_148, %c163] : memref<8x512xf32, #tpu.memory_space<vmem>>, vector<8x256xf32>
    %599 = vector.broadcast %597 : vector<8x1xf32> to vector<8x256xf32>
    %600 = arith.mulf %599, %598 : vector<8x256xf32>
    %601 = arith.addf %583, %600 : vector<8x256xf32>
    %c48 = arith.constant 48 : index
    %602 = memref.load %arg7[%c48] : memref<98xf32, #tpu.memory_space<smem>>
    %c97_149 = arith.constant 97 : index
    %603 = memref.load %arg7[%c97_149] : memref<98xf32, #tpu.memory_space<smem>>
    %604 = vector.broadcast %602 : f32 to vector<8x1xf32>
    %605 = vector.broadcast %603 : f32 to vector<8x1xf32>
    %606 = arith.select %154, %604, %605 : vector<8x1xi1>, vector<8x1xf32>
    %c0_150 = arith.constant 0 : index
    %c179 = arith.constant 179 : index
    %607 = vector.load %arg11[%c0_150, %c179] : memref<8x512xf32, #tpu.memory_space<vmem>>, vector<8x256xf32>
    %608 = vector.broadcast %606 : vector<8x1xf32> to vector<8x256xf32>
    %609 = arith.mulf %608, %607 : vector<8x256xf32>
    %610 = arith.addf %592, %609 : vector<8x256xf32>
    %611 = arith.addf %610, %601 : vector<8x256xf32>
    %612 = vector.extract_strided_slice %155 {offsets = [6, 0], sizes = [1, 256], strides = [1, 1]} : vector<7x256xf32> to vector<1x256xf32>
    %613 = vector.broadcast %612 : vector<1x256xf32> to vector<8x256xf32>
    %614 = arith.mulf %611, %613 : vector<8x256xf32>
    %615 = arith.addf %483, %614 : vector<8x256xf32>
    %616 = arith.addf %615, %549 : vector<8x256xf32>
    %617 = vector.extract_strided_slice %616 {offsets = [0, 0], sizes = [4, 256], strides = [1, 1]} : vector<8x256xf32> to vector<4x256xf32>
    %618 = vector.extract_strided_slice %616 {offsets = [4, 0], sizes = [4, 256], strides = [1, 1]} : vector<8x256xf32> to vector<4x256xf32>
    %619 = arith.addf %617, %618 : vector<4x256xf32>
    %c0_151 = arith.constant 0 : index
    %620 = memref.load %arg8[%c0_151] : memref<1xf32, #tpu.memory_space<smem>>
    %621 = vector.broadcast %620 : f32 to vector<4x256xf32>
    %622 = arith.addf %619, %621 : vector<4x256xf32>
    %623 = arith.negf %622 : vector<4x256xf32>
    %624 = math.exp %623 : vector<4x256xf32>
    %cst_152 = arith.constant 1.000000e+00 : f32
    %625 = vector.broadcast %cst_152 : f32 to vector<4x256xf32>
    %626 = arith.addf %625, %624 : vector<4x256xf32>
    %627 = arith.divf %625, %626 : vector<4x256xf32>
    %c0_153 = arith.constant 0 : index
    %c0_154 = arith.constant 0 : index
    %c0_155 = arith.constant 0 : index
    %628 = vector.load %arg10[%c0_153, %c0_154, %c0_155] : memref<4x32x256xf32, #tpu.memory_space<vmem>>, vector<1x32x256xf32>
    %629 = vector.shape_cast %628 : vector<1x32x256xf32> to vector<32x256xf32>
    %630 = vector.extract_strided_slice %627 {offsets = [0, 0], sizes = [1, 256], strides = [1, 1]} : vector<4x256xf32> to vector<1x256xf32>
    %631 = vector.broadcast %630 : vector<1x256xf32> to vector<32x256xf32>
    %632 = arith.mulf %629, %631 : vector<32x256xf32>
    %c0_156 = arith.constant 0 : index
    %c0_157 = arith.constant 0 : index
    %c0_158 = arith.constant 0 : index
    %633 = vector.load %arg9[%c0_156, %c0_157, %c0_158] : memref<4x32x256xf32, #tpu.memory_space<vmem>>, vector<1x32x256xf32>
    %634 = vector.shape_cast %633 : vector<1x32x256xf32> to vector<32x256xf32>
    %635 = vector.shape_cast %632 : vector<32x256xf32> to vector<1x32x256xf32>
    tpu.vector_store %arg9[%c0_156, %c0_157, %c0_158], %635 {strides = array<i32>} : memref<4x32x256xf32, #tpu.memory_space<vmem>>, vector<1x32x256xf32>,
    %c1_159 = arith.constant 1 : index
    %c0_160 = arith.constant 0 : index
    %c0_161 = arith.constant 0 : index
    %636 = vector.load %arg10[%c1_159, %c0_160, %c0_161] : memref<4x32x256xf32, #tpu.memory_space<vmem>>, vector<1x32x256xf32>
    %637 = vector.shape_cast %636 : vector<1x32x256xf32> to vector<32x256xf32>
    %638 = vector.extract_strided_slice %627 {offsets = [1, 0], sizes = [1, 256], strides = [1, 1]} : vector<4x256xf32> to vector<1x256xf32>
    %639 = vector.broadcast %638 : vector<1x256xf32> to vector<32x256xf32>
    %640 = arith.mulf %637, %639 : vector<32x256xf32>
    %c1_162 = arith.constant 1 : index
    %c0_163 = arith.constant 0 : index
    %c0_164 = arith.constant 0 : index
    %641 = vector.load %arg9[%c1_162, %c0_163, %c0_164] : memref<4x32x256xf32, #tpu.memory_space<vmem>>, vector<1x32x256xf32>
    %642 = vector.shape_cast %641 : vector<1x32x256xf32> to vector<32x256xf32>
    %643 = vector.shape_cast %640 : vector<32x256xf32> to vector<1x32x256xf32>
    tpu.vector_store %arg9[%c1_162, %c0_163, %c0_164], %643 {strides = array<i32>} : memref<4x32x256xf32, #tpu.memory_space<vmem>>, vector<1x32x256xf32>,
    %c2_165 = arith.constant 2 : index
    %c0_166 = arith.constant 0 : index
    %c0_167 = arith.constant 0 : index
    %644 = vector.load %arg10[%c2_165, %c0_166, %c0_167] : memref<4x32x256xf32, #tpu.memory_space<vmem>>, vector<1x32x256xf32>
    %645 = vector.shape_cast %644 : vector<1x32x256xf32> to vector<32x256xf32>
    %646 = vector.extract_strided_slice %627 {offsets = [2, 0], sizes = [1, 256], strides = [1, 1]} : vector<4x256xf32> to vector<1x256xf32>
    %647 = vector.broadcast %646 : vector<1x256xf32> to vector<32x256xf32>
    %648 = arith.mulf %645, %647 : vector<32x256xf32>
    %c2_168 = arith.constant 2 : index
    %c0_169 = arith.constant 0 : index
    %c0_170 = arith.constant 0 : index
    %649 = vector.load %arg9[%c2_168, %c0_169, %c0_170] : memref<4x32x256xf32, #tpu.memory_space<vmem>>, vector<1x32x256xf32>
    %650 = vector.shape_cast %649 : vector<1x32x256xf32> to vector<32x256xf32>
    %651 = vector.shape_cast %648 : vector<32x256xf32> to vector<1x32x256xf32>
    tpu.vector_store %arg9[%c2_168, %c0_169, %c0_170], %651 {strides = array<i32>} : memref<4x32x256xf32, #tpu.memory_space<vmem>>, vector<1x32x256xf32>,
    %c3_171 = arith.constant 3 : index
    %c0_172 = arith.constant 0 : index
    %c0_173 = arith.constant 0 : index
    %652 = vector.load %arg10[%c3_171, %c0_172, %c0_173] : memref<4x32x256xf32, #tpu.memory_space<vmem>>, vector<1x32x256xf32>
    %653 = vector.shape_cast %652 : vector<1x32x256xf32> to vector<32x256xf32>
    %654 = vector.extract_strided_slice %627 {offsets = [3, 0], sizes = [1, 256], strides = [1, 1]} : vector<4x256xf32> to vector<1x256xf32>
    %655 = vector.broadcast %654 : vector<1x256xf32> to vector<32x256xf32>
    %656 = arith.mulf %653, %655 : vector<32x256xf32>
    %c3_174 = arith.constant 3 : index
    %c0_175 = arith.constant 0 : index
    %c0_176 = arith.constant 0 : index
    %657 = vector.load %arg9[%c3_174, %c0_175, %c0_176] : memref<4x32x256xf32, #tpu.memory_space<vmem>>, vector<1x32x256xf32>
    %658 = vector.shape_cast %657 : vector<1x32x256xf32> to vector<32x256xf32>
    %659 = vector.shape_cast %656 : vector<32x256xf32> to vector<1x32x256xf32>
    tpu.vector_store %arg9[%c3_174, %c0_175, %c0_176], %659 {strides = array<i32>} : memref<4x32x256xf32, #tpu.memory_space<vmem>>, vector<1x32x256xf32>,
    return
  }
  func.func @transform_0(%arg0: i32) -> (i32, i32, i32) {
    %c0_i32 = arith.constant 0 : i32
    %c0_i32_0 = arith.constant 0 : i32
    %c0_i32_1 = arith.constant 0 : i32
    return %arg0, %c0_i32, %c0_i32_0 : i32, i32, i32
  }
  func.func @transform_1(%arg0: i32) -> (i32, i32) {
    %c0_i32 = arith.constant 0 : i32
    %c0_i32_0 = arith.constant 0 : i32
    %c0_i32_1 = arith.constant 0 : i32
    return %c0_i32, %c0_i32_0 : i32, i32
  }
  func.func @transform_2(%arg0: i32) -> (i32, i32) {
    %c0_i32 = arith.constant 0 : i32
    %c0_i32_0 = arith.constant 0 : i32
    %c0_i32_1 = arith.constant 0 : i32
    return %c0_i32, %c0_i32_0 : i32, i32
  }
  func.func @transform_3(%arg0: i32) -> (i32, i32) {
    %c0_i32 = arith.constant 0 : i32
    %c0_i32_0 = arith.constant 0 : i32
    %c0_i32_1 = arith.constant 0 : i32
    return %c0_i32, %c0_i32_0 : i32, i32
  }
  func.func @transform_4(%arg0: i32) -> (i32, i32) {
    %c0_i32 = arith.constant 0 : i32
    %c0_i32_0 = arith.constant 0 : i32
    %c0_i32_1 = arith.constant 0 : i32
    return %c0_i32, %c0_i32_0 : i32, i32
  }
  func.func @transform_5(%arg0: i32) -> (i32, i32) {
    %c0_i32 = arith.constant 0 : i32
    %c0_i32_0 = arith.constant 0 : i32
    %c0_i32_1 = arith.constant 0 : i32
    return %c0_i32, %c0_i32_0 : i32, i32
  }
  func.func @transform_6(%arg0: i32) -> i32 {
    %c0_i32 = arith.constant 0 : i32
    %c0_i32_0 = arith.constant 0 : i32
    return %c0_i32 : i32
  }
  func.func @transform_7(%arg0: i32) -> i32 {
    %c0_i32 = arith.constant 0 : i32
    %c0_i32_0 = arith.constant 0 : i32
    return %c0_i32 : i32
  }
  func.func @transform_8(%arg0: i32) -> (i32, i32, i32) {
    %c0_i32 = arith.constant 0 : i32
    %c0_i32_0 = arith.constant 0 : i32
    %c0_i32_1 = arith.constant 0 : i32
    return %arg0, %c0_i32, %c0_i32_0 : i32, i32, i32
  }
}

</mosaic_0001>

<llo_original>
// kernel: tpu_custom_call.1
$region0: #{tpu_custom_call.1}
  #allocation0 [shape = 'u32[]', space=smem, size = 0x4, offset = 0x4, fixed_abs, tag = 'smem constant byte address 0x4 - core index']
  #allocation1 [shape = 'u32[144,128]{1,0:T(1,128)}', space=vmem, size = 0x12000, scoped, tag = 'internal scratch']
  #allocation2 [shape = 'f32[4,32,256]{2,1,0:T(8,128)}', space=vmem, size = 0x20000, scoped, tag = 'scratch operand']
  #allocation3 [shape = 'f32[8,512]{1,0:T(8,128)}', space=vmem, size = 0x4000, scoped, tag = 'scratch operand']
  #allocation4 [shape = 'f32[1]{0:T(128)S(6)}', space=smem, size = 0x200, scoped, tag = 'scoped memory for tpu_custom_call.1']
  %s0 = inlined_call_operand.hbm [shape: f32[8,32,256], index: 0, kind: input, shape index: {}]
  %s1 = inlined_call_operand.vmem [shape: f32[32,2], index: 1, kind: input, shape index: {}]
  %s2 = inlined_call_operand.vmem [shape: f32[1,2], index: 2, kind: input, shape index: {}]
  %s3 = inlined_call_operand.vmem [shape: f32[32,2], index: 3, kind: input, shape index: {}]
  %s4 = inlined_call_operand.vmem [shape: f32[32,1], index: 4, kind: input, shape index: {}]
  %s5 = inlined_call_operand.vmem [shape: f32[7,256], index: 5, kind: input, shape index: {}]
  %s6 = inlined_call_operand.vmem [shape: f32[98], index: 6, kind: input, shape index: {}]
  %s7 = inlined_call_operand.<no memory space> [shape: f32[1], index: 7, kind: input, shape index: {}]
  %s8 = inlined_call_operand.hbm [shape: f32[8,32,256], index: 8, kind: output, shape index: {}]
  %s9 = sld [smem:[#allocation0]]
  $region73: #{tpu_custom_call.1} parent=0
    _
  %s11 = ssub.s32 1, %s9
  %s12 = scalar_select 0, %s11, %s9
  %13 = sst [smem:[#allocation4]] %s7
  $region1: #{tpu_custom_call.1} parent=0
    #allocation5 [shape = 'u8[262144]{0}', space=vmem, size = 0x40000, scoped, tag = 'input window, operand 0']
    #allocation6 [shape = 's32[2]{0}', space=sflag, size = 0x8, scoped, tag = 'scoped memory for tpu_custom_call.1']
    #allocation7 [shape = 's32[2]{0}', space=sflag, size = 0x8, scoped, tag = 'scoped memory for tpu_custom_call.1']
    #allocation8 [shape = 's32[2]{0}', space=sflag, size = 0x8, scoped, tag = 'scoped memory for tpu_custom_call.1']
    #allocation9 [shape = 'u8[512]{0}', space=smem, size = 0x200, scoped, tag = 'input window, operand 6, single buffered']
    #allocation10 [shape = 'u8[262144]{0}', space=vmem, size = 0x40000, scoped, tag = 'output window, operand 0']
    %14 = vsyncpa [#allocation6], 0
    %s15 = scalar_lea.sflag [#allocation6], 1
    %16 = vsyncpa %s15, 0
    %17 = vsyncpa [#allocation8], 0
    %18 = vsyncpa [#allocation7], 0
    %s19 = scalar_lea.sflag [#allocation7], 1
    %20 = vsyncpa %s19, 0
    loop: start=0, step=1, limit=4
    $region2: #{tpu_custom_call.1} parent=1 // loop_pre_header
      _
    $region3: #{tpu_custom_call.1} parent=1 // loop_header
      %s22 = sphi 0, %s26
      %p23 = scmp.ge.s32.totalorder %s22, 4
      %s32 = sphi 0, %s34
      %s35 = sphi 0, %s32
      %s36 = sphi 0, %s35
      %s52 = sphi 0, %s36
      %s56 = sphi 0, %s56
      %s58 = sphi 0, %s56
      %s59 = sphi 0, %s58
      %s73 = sphi 0, %s59
      %s77 = sphi 0, %s77
      %s79 = sphi 0, %s77
      %s80 = sphi 0, %s79
      %s94 = sphi 0, %s80
      %s98 = sphi 0, %s98
      %s100 = sphi 0, %s98
      %s101 = sphi 0, %s100
      %s115 = sphi 0, %s101
      %s119 = sphi 0, %s119
      %s121 = sphi 0, %s119
      %s122 = sphi 0, %s121
      %s136 = sphi 0, %s122
      %s140 = sphi 0, %s140
      %s142 = sphi 0, %s140
      %s143 = sphi 0, %s142
      %s157 = sphi 0, %s143
      %s161 = sphi 0, %s161
      %s163 = sphi 0, %s161
      %s164 = sphi 0, %s163
      %s178 = sphi 0, %s164
      %s182 = sphi 0, %s182
      %s184 = sphi 0, %s182
      %s185 = sphi 0, %s184
      %s199 = sphi 0, %s185
      %s205 = sphi 0, %s207
      %s208 = sphi 0, %s205
      %s209 = sphi 0, %s208
      %s225 = sphi 0, %s209
    $region4: #{tpu_custom_call.1} parent=1 // loop_header_branch
      %25 = sbr.rel (%p23) target = $region8
    $region5: #{tpu_custom_call.1} parent=1 // loop_body
      %s27 = ssub.s32 %s22, 1
      %s28 = ssub.s32 %s22, 2
      %s29 = sadd.s32 %s22, 1
      %s30 = ssub.s32 %s22, %s29
      %p31 = scmp.eq.s32.totalorder %s30, 0
      %s33 = sadd.s32 %s32, 1
      %s34 = scalar_select %p31, %s32, %s33
      %p37 = pneg %p31
      %p38 = scmp.eq.s32.totalorder %s22, 1
      %p39 = por %p37, %p38
      %p40 = scmp.ne.s32.totalorder %s32, %s35
      %p41 = scmp.eq.s32.totalorder %s22, 0
      %p42 = por %p40, %p41
      %p43 = scmp.ne.s32.totalorder %s32, %s35
      %p44 = scmp.eq.s32.totalorder %s27, 1
      %p45 = por %p43, %p44
      %p46 = scmp.ne.s32.totalorder %s35, %s36
      %p47 = scmp.eq.s32.totalorder %s27, 0
      %p48 = por %p46, %p47
      %p49 = scmp.ne.s32.totalorder %s35, %s36
      %p50 = scmp.eq.s32.totalorder %s28, 1
      %p51 = por %p49, %p50
      %p53 = scmp.ne.s32.totalorder %s36, %s52
      %p54 = scmp.eq.s32.totalorder %s28, 0
      %p55 = por %p53, %p54
      %s57 = sadd.s32 %s56, 1
      %p60 = scmp.eq.s32.totalorder %s22, 1
      %p61 = scmp.ne.s32.totalorder %s56, %s58
      %p62 = scmp.eq.s32.totalorder %s22, 0
      %p63 = por %p61, %p62
      %p64 = scmp.ne.s32.totalorder %s56, %s58
      %p65 = scmp.eq.s32.totalorder %s27, 1
      %p66 = por %p64, %p65
      %p67 = scmp.ne.s32.totalorder %s58, %s59
      %p68 = scmp.eq.s32.totalorder %s27, 0
      %p69 = por %p67, %p68
      %p70 = scmp.ne.s32.totalorder %s58, %s59
      %p71 = scmp.eq.s32.totalorder %s28, 1
      %p72 = por %p70, %p71
      %p74 = scmp.ne.s32.totalorder %s59, %s73
      %p75 = scmp.eq.s32.totalorder %s28, 0
      %p76 = por %p74, %p75
      %s78 = sadd.s32 %s77, 1
      %p81 = scmp.eq.s32.totalorder %s22, 1
      %p82 = scmp.ne.s32.totalorder %s77, %s79
      %p83 = scmp.eq.s32.totalorder %s22, 0
      %p84 = por %p82, %p83
      %p85 = scmp.ne.s32.totalorder %s77, %s79
      %p86 = scmp.eq.s32.totalorder %s27, 1
      %p87 = por %p85, %p86
      %p88 = scmp.ne.s32.totalorder %s79, %s80
      %p89 = scmp.eq.s32.totalorder %s27, 0
      %p90 = por %p88, %p89
      %p91 = scmp.ne.s32.totalorder %s79, %s80
      %p92 = scmp.eq.s32.totalorder %s28, 1
      %p93 = por %p91, %p92
      %p95 = scmp.ne.s32.totalorder %s80, %s94
      %p96 = scmp.eq.s32.totalorder %s28, 0
      %p97 = por %p95, %p96
      %s99 = sadd.s32 %s98, 1
      %p102 = scmp.eq.s32.totalorder %s22, 1
      %p103 = scmp.ne.s32.totalorder %s98, %s100
      %p104 = scmp.eq.s32.totalorder %s22, 0
      %p105 = por %p103, %p104
      %p106 = scmp.ne.s32.totalorder %s98, %s100
      %p107 = scmp.eq.s32.totalorder %s27, 1
      %p108 = por %p106, %p107
      %p109 = scmp.ne.s32.totalorder %s100, %s101
      %p110 = scmp.eq.s32.totalorder %s27, 0
      %p111 = por %p109, %p110
      %p112 = scmp.ne.s32.totalorder %s100, %s101
      %p113 = scmp.eq.s32.totalorder %s28, 1
      %p114 = por %p112, %p113
      %p116 = scmp.ne.s32.totalorder %s101, %s115
      %p117 = scmp.eq.s32.totalorder %s28, 0
      %p118 = por %p116, %p117
      %s120 = sadd.s32 %s119, 1
      %p123 = scmp.eq.s32.totalorder %s22, 1
      %p124 = scmp.ne.s32.totalorder %s119, %s121
      %p125 = scmp.eq.s32.totalorder %s22, 0
      %p126 = por %p124, %p125
      %p127 = scmp.ne.s32.totalorder %s119, %s121
      %p128 = scmp.eq.s32.totalorder %s27, 1
      %p129 = por %p127, %p128
      %p130 = scmp.ne.s32.totalorder %s121, %s122
      %p131 = scmp.eq.s32.totalorder %s27, 0
      %p132 = por %p130, %p131
      %p133 = scmp.ne.s32.totalorder %s121, %s122
      %p134 = scmp.eq.s32.totalorder %s28, 1
      %p135 = por %p133, %p134
      %p137 = scmp.ne.s32.totalorder %s122, %s136
      %p138 = scmp.eq.s32.totalorder %s28, 0
      %p139 = por %p137, %p138
      %s141 = sadd.s32 %s140, 1
      %p144 = scmp.eq.s32.totalorder %s22, 1
      %p145 = scmp.ne.s32.totalorder %s140, %s142
      %p146 = scmp.eq.s32.totalorder %s22, 0
      %p147 = por %p145, %p146
      %p148 = scmp.ne.s32.totalorder %s140, %s142
      %p149 = scmp.eq.s32.totalorder %s27, 1
      %p150 = por %p148, %p149
      %p151 = scmp.ne.s32.totalorder %s142, %s143
      %p152 = scmp.eq.s32.totalorder %s27, 0
      %p153 = por %p151, %p152
      %p154 = scmp.ne.s32.totalorder %s142, %s143
      %p155 = scmp.eq.s32.totalorder %s28, 1
      %p156 = por %p154, %p155
      %p158 = scmp.ne.s32.totalorder %s143, %s157
      %p159 = scmp.eq.s32.totalorder %s28, 0
      %p160 = por %p158, %p159
      %s162 = sadd.s32 %s161, 1
      %p165 = scmp.eq.s32.totalorder %s22, 1
      %p166 = scmp.ne.s32.totalorder %s161, %s163
      %p167 = scmp.eq.s32.totalorder %s22, 0
      %p168 = por %p166, %p167
      %p169 = scmp.ne.s32.totalorder %s161, %s163
      %p170 = scmp.eq.s32.totalorder %s27, 1
      %p171 = por %p169, %p170
      %p172 = scmp.ne.s32.totalorder %s163, %s164
      %p173 = scmp.eq.s32.totalorder %s27, 0
      %p174 = por %p172, %p173
      %p175 = scmp.ne.s32.totalorder %s163, %s164
      %p176 = scmp.eq.s32.totalorder %s28, 1
      %p177 = por %p175, %p176
      %p179 = scmp.ne.s32.totalorder %s164, %s178
      %p180 = scmp.eq.s32.totalorder %s28, 0
      %p181 = por %p179, %p180
      %s183 = sadd.s32 %s182, 1
      %p186 = scmp.eq.s32.totalorder %s22, 1
      %p187 = scmp.ne.s32.totalorder %s182, %s184
      %p188 = scmp.eq.s32.totalorder %s22, 0
      %p189 = por %p187, %p188
      %p190 = scmp.ne.s32.totalorder %s182, %s184
      %p191 = scmp.eq.s32.totalorder %s27, 1
      %p192 = por %p190, %p191
      %p193 = scmp.ne.s32.totalorder %s184, %s185
      %p194 = scmp.eq.s32.totalorder %s27, 0
      %p195 = por %p193, %p194
      %p196 = scmp.ne.s32.totalorder %s184, %s185
      %p197 = scmp.eq.s32.totalorder %s28, 1
      %p198 = por %p196, %p197
      %p200 = scmp.ne.s32.totalorder %s185, %s199
      %p201 = scmp.eq.s32.totalorder %s28, 0
      %p202 = por %p200, %p201
      %s203 = ssub.s32 %s22, %s29
      %p204 = scmp.eq.s32.totalorder %s203, 0
      %s206 = sadd.s32 %s205, 1
      %s207 = scalar_select %p204, %s205, %s206
      %p210 = pneg %p204
      %p211 = scmp.eq.s32.totalorder %s22, 1
      %p212 = por %p210, %p211
      %p213 = scmp.ne.s32.totalorder %s205, %s208
      %p214 = scmp.eq.s32.totalorder %s22, 0
      %p215 = por %p213, %p214
      %p216 = scmp.ne.s32.totalorder %s205, %s208
      %p217 = scmp.eq.s32.totalorder %s27, 1
      %p218 = por %p216, %p217
      %p219 = scmp.ne.s32.totalorder %s208, %s209
      %p220 = scmp.eq.s32.totalorder %s27, 0
      %p221 = por %p219, %p220
      %p222 = scmp.ne.s32.totalorder %s208, %s209
      %p223 = scmp.eq.s32.totalorder %s28, 1
      %p224 = por %p222, %p223
      %p226 = scmp.ne.s32.totalorder %s209, %s225
      %p227 = scmp.eq.s32.totalorder %s28, 0
      %p228 = por %p226, %p227
      %p229 = scmp.le.s32.totalorder 1, %s22
      %p230 = scmp.lt.s32.totalorder %s22, 3
      %p231 = pnand %p229, %p230
      %p232 = pneg %p231
      // Predicated region
      $region9: #{tpu_custom_call.1} parent=5 // pred_check
        _
      $region10: #{tpu_custom_call.1} parent=5 // pred_check_branch
        %234 = sbr.rel (%p231) target = $region12
      $region11: #{tpu_custom_call.1} parent=5 // pred_region
        %s235 = ssub.s32 %s22, 1
        // Predicated region
        $region13: #{tpu_custom_call.1} parent=11 // pred_check
          %p236 = pneg %p69
        $region14: #{tpu_custom_call.1} parent=11 // pred_check_branch
          %238 = sbr.rel (%p236) target = $region16
        $region15: #{tpu_custom_call.1} parent=11 // pred_region
          _
        $region16: #{tpu_custom_call.1} parent=11 // pred_fallthru
          _
        // Predicated region
        $region17: #{tpu_custom_call.1} parent=11 // pred_check
          %p239 = pneg %p90
        $region18: #{tpu_custom_call.1} parent=11 // pred_check_branch
          %241 = sbr.rel (%p239) target = $region20
        $region19: #{tpu_custom_call.1} parent=11 // pred_region
          _
        $region20: #{tpu_custom_call.1} parent=11 // pred_fallthru
          _
        // Predicated region
        $region21: #{tpu_custom_call.1} parent=11 // pred_check
          %p242 = pneg %p111
        $region22: #{tpu_custom_call.1} parent=11 // pred_check_branch
          %244 = sbr.rel (%p242) target = $region24
        $region23: #{tpu_custom_call.1} parent=11 // pred_region
          _
        $region24: #{tpu_custom_call.1} parent=11 // pred_fallthru
          _
        // Predicated region
        $region25: #{tpu_custom_call.1} parent=11 // pred_check
          %p245 = pneg %p132
        $region26: #{tpu_custom_call.1} parent=11 // pred_check_branch
          %247 = sbr.rel (%p245) target = $region28
        $region27: #{tpu_custom_call.1} parent=11 // pred_region
          _
        $region28: #{tpu_custom_call.1} parent=11 // pred_fallthru
          _
        // Predicated region
        $region29: #{tpu_custom_call.1} parent=11 // pred_check
          %p248 = pneg %p153
        $region30: #{tpu_custom_call.1} parent=11 // pred_check_branch
          %250 = sbr.rel (%p248) target = $region32
        $region31: #{tpu_custom_call.1} parent=11 // pred_region
          _
        $region32: #{tpu_custom_call.1} parent=11 // pred_fallthru
          _
        // Predicated region
        $region33: #{tpu_custom_call.1} parent=11 // pred_check
          %p251 = pneg %p174
        $region34: #{tpu_custom_call.1} parent=11 // pred_check_branch
          %253 = sbr.rel (%p251) target = $region36
        $region35: #{tpu_custom_call.1} parent=11 // pred_region
          %s255 = ssub.s32 16, 16
          %256 = vsyncadd [#allocation8], %s255
          %s258 = sshll.u32 %s6, 4
          %s259 = int_to_ptr.vmem [resolvable:$true] %s258
          %261 = dma.vmem_to_smem %s259, 16, [#allocation9], [#allocation8]
        $region36: #{tpu_custom_call.1} parent=11 // pred_fallthru
          _
        // Predicated region
        $region37: #{tpu_custom_call.1} parent=11 // pred_check
          %p262 = pneg %p195
        $region38: #{tpu_custom_call.1} parent=11 // pred_check_branch
          %264 = sbr.rel (%p262) target = $region40
        $region39: #{tpu_custom_call.1} parent=11 // pred_region
          _
        $region40: #{tpu_custom_call.1} parent=11 // pred_fallthru
          _
      $region12: #{tpu_custom_call.1} parent=5 // pred_fallthru
        _
      %p265 = scmp.lt.s32.totalorder %s22, 2
      // Predicated region
      $region41: #{tpu_custom_call.1} parent=5 // pred_check
        %p266 = pneg %p265
      $region42: #{tpu_custom_call.1} parent=5 // pred_check_branch
        %268 = sbr.rel (%p266) target = $region44
      $region43: #{tpu_custom_call.1} parent=5 // pred_region
        // Predicated region
        $region45: #{tpu_custom_call.1} parent=43 // pred_check
          %p269 = pneg %p42
        $region46: #{tpu_custom_call.1} parent=43 // pred_check_branch
          %271 = sbr.rel (%p269) target = $region48
        $region47: #{tpu_custom_call.1} parent=43 // pred_region
          %s272 = sand.u32 %s32, 1
          %s273 = scalar_lea.sflag [#allocation6], %s272
          %s274 = sand.u32 %s32, 1
          %s275 = smul.addr %s274, 256
          %s276 = scalar_lea.vmem [#allocation5], %s275
          %s277 = smul.u32 4, %s22
          %s279 = ssub.s32 4096, 4096
          %280 = vsyncadd %s273, %s279
          %s281 = smul.addr %s277, 8
          %s282 = smul.addr %s281, 128
          %s283 = scalar_lea.hbm %s0, %s282
          %s284 = sshll.u32 %s276, 4
          %s285 = int_to_ptr.vmem [resolvable:$true] %s284
          %290 = dma.hbm_to_vmem [thread:$0]  %s283, 4096, %s285, %s273, 256, 256, 16
        $region48: #{tpu_custom_call.1} parent=43 // pred_fallthru
          _
      $region44: #{tpu_custom_call.1} parent=5 // pred_fallthru
        _
      %p291 = scmp.le.s32.totalorder 1, %s22
      %p292 = scmp.lt.s32.totalorder %s22, 3
      %p293 = pnand %p291, %p292
      %p294 = pneg %p293
      // Predicated region
      $region49: #{tpu_custom_call.1} parent=5 // pred_check
        _
      $region50: #{tpu_custom_call.1} parent=5 // pred_check_branch
        %296 = sbr.rel (%p293) target = $region52
      $region51: #{tpu_custom_call.1} parent=5 // pred_region
        %s297 = ssub.s32 %s22, 1
        %s298 = sand.u32 %s35, 1
        %s299 = scalar_lea.sflag [#allocation6], %s298
        %s300 = sand.u32 %s35, 1
        %s301 = smul.addr %s300, 256
        %s302 = scalar_lea.vmem [#allocation5], %s301
        // Predicated region
        $region53: #{tpu_custom_call.1} parent=51 // pred_check
          %p303 = pneg %p48
        $region54: #{tpu_custom_call.1} parent=51 // pred_check_branch
          %305 = sbr.rel (%p303) target = $region56
        $region55: #{tpu_custom_call.1} parent=51 // pred_region
          %306 = dma.done %s299, 4096
        $region56: #{tpu_custom_call.1} parent=51 // pred_fallthru
          _
        // Predicated region
        $region57: #{tpu_custom_call.1} parent=51 // pred_check
          %p307 = pneg %p174
        $region58: #{tpu_custom_call.1} parent=51 // pred_check_branch
          %309 = sbr.rel (%p307) target = $region60
        $region59: #{tpu_custom_call.1} parent=51 // pred_region
          %310 = dma.done [#allocation8], 16
        $region60: #{tpu_custom_call.1} parent=51 // pred_fallthru
          _
        %311 = sfence
        %s312 = sand.u32 %s35, 1
        %s313 = scalar_lea.sflag [#allocation6], %s312
        %s314 = sand.u32 %s35, 1
        %s315 = smul.addr %s314, 256
        %s316 = scalar_lea.vmem [#allocation5], %s315
        %p317 = pneg %p48
        %p318 = pneg %p45
        %p319 = pneg %p69
        %p320 = pneg %p66
        %p321 = pneg %p90
        %p322 = pneg %p87
        %p323 = pneg %p111
        %p324 = pneg %p108
        %p325 = pneg %p132
        %p326 = pneg %p129
        %p327 = pneg %p153
        %p328 = pneg %p150
        %p329 = pneg %p174
        %p330 = pneg %p171
        %p331 = pneg %p195
        %p332 = pneg %p192
        %p333 = pneg %p221
        %p334 = pneg %p218
        %s335 = sand.u32 %s208, 1
        %s336 = scalar_lea.sflag [#allocation7], %s335
        %s337 = sand.u32 %s208, 1
        %s338 = smul.addr %s337, 256
        %s339 = scalar_lea.vmem [#allocation10], %s338
        %s340 = smul.u32 4, %s27
        %s341 = smul.u32 4, %s27
        %v342 = vld [vmem:[%s1] sm:$0xff]
        %v343 = vld [vmem:[%s1 + $0x8] sm:$0xff]
        %v344 = vld [vmem:[%s1 + $0x10] sm:$0xff]
        %v345 = vld [vmem:[%s1 + $0x18] sm:$0xff]
        %v346 = vld [vmem:[%s3] sm:$0xff]
        %v347 = vld [vmem:[%s3 + $0x8] sm:$0xff]
        %v348 = vld [vmem:[%s3 + $0x10] sm:$0xff]
        %v349 = vld [vmem:[%s3 + $0x18] sm:$0xff]
        %v350 = vld [vmem:[%s2] sm:$0x1]
        %v351 = vld [vmem:[%s4] sm:$0xff]
        %v352 = vld [vmem:[%s4 + $0x8] sm:$0xff]
        %v353 = vld [vmem:[%s4 + $0x10] sm:$0xff]
        %v354 = vld [vmem:[%s4 + $0x18] sm:$0xff]
        %355 = vst [vmem:[#allocation3] sm:$0xff] 0.0
        %356 = vst [vmem:[#allocation3 + $0x18] sm:$0xff] 0.0
        %v357 = vld [vmem:[%s302] sm:$0xff]
        %v358 = vld [vmem:[%s302 + $0x8] sm:$0xff]
        %v359 = vld [vmem:[%s302 + $0x10] sm:$0xff]
        %v360 = vld [vmem:[%s302 + $0x18] sm:$0xff]
        %v361 = vld [vmem:[%s302 + $0x20] sm:$0xff]
        %v362 = vld [vmem:[%s302 + $0x28] sm:$0xff]
        %v363 = vld [vmem:[%s302 + $0x30] sm:$0xff]
        %v364 = vld [vmem:[%s302 + $0x38] sm:$0xff]
        %v365 = vadd.f32 %v357, %v358
        %366 = vadd.xlane.f32.xlu0 %v365
        %v367 = vpop.xlane.xlu0 %366
        %v368 = vadd.f32 %v359, %v360
        %369 = vadd.xlane.f32.xlu0 %v368
        %v370 = vpop.xlane.xlu0 %369
        %v371 = vadd.f32 %v361, %v362
        %372 = vadd.xlane.f32.xlu0 %v371
        %v373 = vpop.xlane.xlu0 %372
        %v374 = vadd.f32 %v363, %v364
        %375 = vadd.xlane.f32.xlu0 %v374
        %v376 = vpop.xlane.xlu0 %375
        %v377 = vrcp.pop 256.0
        %v378 = vmul.f32 %v367, %v377
        %v379 = vmul.f32 %v370, %v377
        %v380 = vmul.f32 %v373, %v377
        %v381 = vmul.f32 %v376, %v377
        %v382 = vmul.f32 %v378, %v342
        %v383 = vmul.f32 %v379, %v343
        %v384 = vmul.f32 %v380, %v344
        %v385 = vmul.f32 %v381, %v345
        %vm386 = vcmask 15360
        %v387 = vsel %vm386, %v382, 0.0
        %v388 = vsel %vm386, %v383, 0.0
        %v389 = vadd.f32 %v387, %v388
        %v390 = vsel %vm386, %v384, 0.0
        %v391 = vadd.f32 %v389, %v390
        %v392 = vsel %vm386, %v385, 0.0
        %v393 = vadd.f32 %v391, %v392
        %v394 = vrot.slane %v393, 4
        %v395 = vadd.f32 %v393, %v394
        %v396 = vrot.slane %v395, 2
        %v397 = vadd.f32 %v395, %v396
        %v398 = vrot.slane %v397, 1
        %v399 = vadd.f32 %v397, %v398
        %v400 = vadd.f32 %v399, %v350
        %v401 = vmax.f32 %v400, 0.0
        %v402 = vlaneseq
        %v403 = vshrl.u32 %v402, 7
        %v404 = vsub.s32 0, %v403
        %v405 = vrot.slane %v401, %v404
        %v406 = vmul.f32 %v405, %v346
        %v407 = vmul.f32 %v405, %v347
        %v408 = vmul.f32 %v405, %v348
        %v409 = vmul.f32 %v405, %v349
        %v410 = vsel %vm386, %v406, 0.0
        %411 = vadd.xlane.f32.xlu0 %v410
        %v412 = vpop.xlane.xlu0 %411
        %v413 = vsel %vm386, %v407, 0.0
        %414 = vadd.xlane.f32.xlu0 %v413
        %v415 = vpop.xlane.xlu0 %414
        %v416 = vsel %vm386, %v408, 0.0
        %417 = vadd.xlane.f32.xlu0 %v416
        %v418 = vpop.xlane.xlu0 %417
        %v419 = vsel %vm386, %v409, 0.0
        %420 = vadd.xlane.f32.xlu0 %v419
        %v421 = vpop.xlane.xlu0 %420
        %v422 = vadd.f32 %v412, %v351
        %v423 = vadd.f32 %v415, %v352
        %v424 = vadd.f32 %v418, %v353
        %v425 = vadd.f32 %v421, %v354
        %v426 = vxor.u32 %v422, 2147483648
        %v427 = vxor.u32 %v423, 2147483648
        %v428 = vxor.u32 %v424, 2147483648
        %v429 = vxor.u32 %v425, 2147483648
        %v430 = vmul.f32 %v426, 1.442695
        %v431 = vpow.pop %v430
        %v432 = vmul.f32 %v427, 1.442695
        %v433 = vpow.pop %v432
        %v434 = vmul.f32 %v428, 1.442695
        %v435 = vpow.pop %v434
        %v436 = vmul.f32 %v429, 1.442695
        %v437 = vpow.pop %v436
        %v438 = vadd.f32 %v431, 1.0
        %v439 = vadd.f32 %v433, 1.0
        %v440 = vadd.f32 %v435, 1.0
        %v441 = vadd.f32 %v437, 1.0
        %v442 = vrcp.pop %v438
        %v443 = vmul.f32 1.0, %v442
        %v444 = vrcp.pop %v439
        %v445 = vmul.f32 1.0, %v444
        %v446 = vrcp.pop %v440
        %v447 = vmul.f32 1.0, %v446
        %v448 = vrcp.pop %v441
        %v449 = vmul.f32 1.0, %v448
        %451 = vset.pattern.permute.xlu0 0
        %452 = vperm.xlu0 %451, %v443
        %v453 = vpop.permute.xlu0 %452
        %456 = vset.pattern.permute.xlu0 0
        %457 = vperm.xlu0 %456, %v445
        %v458 = vpop.permute.xlu0 %457
        %461 = vset.pattern.permute.xlu0 0
        %462 = vperm.xlu0 %461, %v447
        %v463 = vpop.permute.xlu0 %462
        %466 = vset.pattern.permute.xlu0 0
        %467 = vperm.xlu0 %466, %v449
        %v468 = vpop.permute.xlu0 %467
        %v470 = vmul.f32 %v357, %v453
        %v471 = vmul.f32 %v358, %v453
        %v472 = vmul.f32 %v359, %v458
        %v473 = vmul.f32 %v360, %v458
        %v474 = vmul.f32 %v361, %v463
        %v475 = vmul.f32 %v362, %v463
        %v476 = vmul.f32 %v363, %v468
        %v477 = vmul.f32 %v364, %v468
        %478 = vst [vmem:[#allocation2] sm:$0xff] %v470
        %479 = vst [vmem:[#allocation2 + $0x8] sm:$0xff] %v471
        %480 = vst [vmem:[#allocation2 + $0x10] sm:$0xff] %v472
        %481 = vst [vmem:[#allocation2 + $0x18] sm:$0xff] %v473
        %482 = vst [vmem:[#allocation2 + $0x20] sm:$0xff] %v474
        %483 = vst [vmem:[#allocation2 + $0x28] sm:$0xff] %v475
        %484 = vst [vmem:[#allocation2 + $0x30] sm:$0xff] %v476
        %485 = vst [vmem:[#allocation2 + $0x38] sm:$0xff] %v477
        %v486 = vadd.f32 %v470, %v472
        %v487 = vadd.f32 %v486, %v474
        %v488 = vadd.f32 %v487, %v476
        %v489 = vrot.slane %v488, 4
        %v490 = vadd.f32 %v488, %v489
        %v491 = vrot.slane %v490, 2
        %v492 = vadd.f32 %v490, %v491
        %v493 = vrot.slane %v492, 1
        %v494 = vadd.f32 %v492, %v493
        %v495 = vadd.f32 %v471, %v473
        %v496 = vadd.f32 %v495, %v475
        %v497 = vadd.f32 %v496, %v477
        %v498 = vrot.slane %v497, 4
        %v499 = vadd.f32 %v497, %v498
        %v500 = vrot.slane %v499, 2
        %v501 = vadd.f32 %v499, %v500
        %v502 = vrot.slane %v501, 1
        %v503 = vadd.f32 %v501, %v502
        %v504 = vrcp.pop 32.0
        %v505 = vmul.f32 %v494, %v504
        %v506 = vmul.f32 %v503, %v504
        %v509 = vcombine.low %v505, %v506
        %v511 = vunpack.c.l.s4 1966171168
        %v512 = vunpack.c.0.s8 %v511
        %v513 = vlaneseq
        %v514 = vshrl.u32 %v513, 7
        %v515 = vsub.s32 %v512, %v514
        %v516 = vrot.slane %v509, %v515
        %v518 = vunpack.c.l.s4 1966171168
        %v519 = vunpack.c.0.s8 %v518
        %v520 = vlaneseq
        %v521 = vshrl.u32 %v520, 7
        %v522 = vsub.s32 %v519, %v521
        %v523 = vrot.slane %v516, %v522
        %v525 = vlaneseq
        %vm526 = vcmp.ge.s32.totalorder %v525, 0
        %vm527 = vcmp.lt.s32.totalorder %v525, 256
        %vm528 = vmand %vm526, %vm527
        %s529 = scalar_lea.vmem [#allocation3], 8
        %530 = vst.msk [vmem:[%s529] ss:$8 sm:$0x3] %vm528, %v523
        %531 = vst.msk [vmem:[%s529] ss:$8 sm:$0x0] %vm528, %v523
        %v532 = vmax.f32 %v470, %v474
        %v533 = vmax.f32 %v472, %v476
        %v534 = vmax.f32 %v532, %v533
        %v535 = vrot.slane %v534, 4
        %v536 = vmax.f32 %v534, %v535
        %v537 = vrot.slane %v536, 2
        %v538 = vmax.f32 %v536, %v537
        %v539 = vrot.slane %v538, 1
        %v540 = vmax.f32 %v538, %v539
        %v541 = vmax.f32 %v471, %v475
        %v542 = vmax.f32 %v473, %v477
        %v543 = vmax.f32 %v541, %v542
        %v544 = vrot.slane %v543, 4
        %v545 = vmax.f32 %v543, %v544
        %v546 = vrot.slane %v545, 2
        %v547 = vmax.f32 %v545, %v546
        %v548 = vrot.slane %v547, 1
        %v549 = vmax.f32 %v547, %v548
        %v552 = vcombine.low %v540, %v549
        %v554 = vunpack.c.l.s4 1966171168
        %v555 = vunpack.c.0.s8 %v554
        %v556 = vlaneseq
        %v557 = vshrl.u32 %v556, 7
        %v558 = vsub.s32 %v555, %v557
        %v559 = vrot.slane %v552, %v558
        %v561 = vunpack.c.l.s4 1966171168
        %v562 = vunpack.c.0.s8 %v561
        %v563 = vlaneseq
        %v564 = vshrl.u32 %v563, 7
        %v565 = vsub.s32 %v562, %v564
        %v566 = vrot.slane %v559, %v565
        %s568 = scalar_lea.vmem [#allocation3], 12
        %569 = vst.msk [vmem:[%s568] ss:$8 sm:$0x3] %vm528, %v566
        %570 = vst.msk [vmem:[%s568] ss:$8 sm:$0x0] %vm528, %v566
        %s571 = scalar_lea.vmem %s302, 64 [#allocation5]
        %v572 = vld [vmem:[%s571] sm:$0xff]
        %v573 = vld [vmem:[%s571 + $0x8] sm:$0xff]
        %v574 = vld [vmem:[%s571 + $0x10] sm:$0xff]
        %v575 = vld [vmem:[%s571 + $0x18] sm:$0xff]
        %v576 = vld [vmem:[%s571 + $0x20] sm:$0xff]
        %v577 = vld [vmem:[%s571 + $0x28] sm:$0xff]
        %v578 = vld [vmem:[%s571 + $0x30] sm:$0xff]
        %v579 = vld [vmem:[%s571 + $0x38] sm:$0xff]
        %v580 = vadd.f32 %v572, %v573
        %581 = vadd.xlane.f32.xlu0 %v580
        %v582 = vpop.xlane.xlu0 %581
        %v583 = vadd.f32 %v574, %v575
        %584 = vadd.xlane.f32.xlu0 %v583
        %v585 = vpop.xlane.xlu0 %584
        %v586 = vadd.f32 %v576, %v577
        %587 = vadd.xlane.f32.xlu0 %v586
        %v588 = vpop.xlane.xlu0 %587
        %v589 = vadd.f32 %v578, %v579
        %590 = vadd.xlane.f32.xlu0 %v589
        %v591 = vpop.xlane.xlu0 %590
        %v592 = vmul.f32 %v582, %v377
        %v593 = vmul.f32 %v585, %v377
        %v594 = vmul.f32 %v588, %v377
        %v595 = vmul.f32 %v591, %v377
        %v596 = vmul.f32 %v592, %v342
        %v597 = vmul.f32 %v593, %v343
        %v598 = vmul.f32 %v594, %v344
        %v599 = vmul.f32 %v595, %v345
        %v600 = vsel %vm386, %v596, 0.0
        %v601 = vsel %vm386, %v597, 0.0
        %v602 = vadd.f32 %v600, %v601
        %v603 = vsel %vm386, %v598, 0.0
        %v604 = vadd.f32 %v602, %v603
        %v605 = vsel %vm386, %v599, 0.0
        %v606 = vadd.f32 %v604, %v605
        %v607 = vrot.slane %v606, 4
        %v608 = vadd.f32 %v606, %v607
        %v609 = vrot.slane %v608, 2
        %v610 = vadd.f32 %v608, %v609
        %v611 = vrot.slane %v610, 1
        %v612 = vadd.f32 %v610, %v611
        %v613 = vadd.f32 %v612, %v350
        %v614 = vmax.f32 %v613, 0.0
        %v615 = vlaneseq
        %v616 = vshrl.u32 %v615, 7
        %v617 = vsub.s32 0, %v616
        %v618 = vrot.slane %v614, %v617
        %v619 = vmul.f32 %v618, %v346
        %v620 = vmul.f32 %v618, %v347
        %v621 = vmul.f32 %v618, %v348
        %v622 = vmul.f32 %v618, %v349
        %v623 = vsel %vm386, %v619, 0.0
        %624 = vadd.xlane.f32.xlu0 %v623
        %v625 = vpop.xlane.xlu0 %624
        %v626 = vsel %vm386, %v620, 0.0
        %627 = vadd.xlane.f32.xlu0 %v626
        %v628 = vpop.xlane.xlu0 %627
        %v629 = vsel %vm386, %v621, 0.0
        %630 = vadd.xlane.f32.xlu0 %v629
        %v631 = vpop.xlane.xlu0 %630
        %v632 = vsel %vm386, %v622, 0.0
        %633 = vadd.xlane.f32.xlu0 %v632
        %v634 = vpop.xlane.xlu0 %633
        %v635 = vadd.f32 %v625, %v351
        %v636 = vadd.f32 %v628, %v352
        %v637 = vadd.f32 %v631, %v353
        %v638 = vadd.f32 %v634, %v354
        %v639 = vxor.u32 %v635, 2147483648
        %v640 = vxor.u32 %v636, 2147483648
        %v641 = vxor.u32 %v637, 2147483648
        %v642 = vxor.u32 %v638, 2147483648
        %v643 = vmul.f32 %v639, 1.442695
        %v644 = vpow.pop %v643
        %v645 = vmul.f32 %v640, 1.442695
        %v646 = vpow.pop %v645
        %v647 = vmul.f32 %v641, 1.442695
        %v648 = vpow.pop %v647
        %v649 = vmul.f32 %v642, 1.442695
        %v650 = vpow.pop %v649
        %v651 = vadd.f32 %v644, 1.0
        %v652 = vadd.f32 %v646, 1.0
        %v653 = vadd.f32 %v648, 1.0
        %v654 = vadd.f32 %v650, 1.0
        %v655 = vrcp.pop %v651
        %v656 = vmul.f32 1.0, %v655
        %v657 = vrcp.pop %v652
        %v658 = vmul.f32 1.0, %v657
        %v659 = vrcp.pop %v653
        %v660 = vmul.f32 1.0, %v659
        %v661 = vrcp.pop %v654
        %v662 = vmul.f32 1.0, %v661
        %664 = vset.pattern.permute.xlu0 0
        %665 = vperm.xlu0 %664, %v656
        %v666 = vpop.permute.xlu0 %665
        %669 = vset.pattern.permute.xlu0 0
        %670 = vperm.xlu0 %669, %v658
        %v671 = vpop.permute.xlu0 %670
        %674 = vset.pattern.permute.xlu0 0
        %675 = vperm.xlu0 %674, %v660
        %v676 = vpop.permute.xlu0 %675
        %679 = vset.pattern.permute.xlu0 0
        %680 = vperm.xlu0 %679, %v662
        %v681 = vpop.permute.xlu0 %680
        %v683 = vmul.f32 %v572, %v666
        %v684 = vmul.f32 %v573, %v666
        %v685 = vmul.f32 %v574, %v671
        %v686 = vmul.f32 %v575, %v671
        %v687 = vmul.f32 %v576, %v676
        %v688 = vmul.f32 %v577, %v676
        %v689 = vmul.f32 %v578, %v681
        %v690 = vmul.f32 %v579, %v681
        %s691 = scalar_lea.vmem [#allocation2], 64
        %692 = vst [vmem:[%s691] sm:$0xff] %v683
        %693 = vst [vmem:[%s691 + $0x8] sm:$0xff] %v684
        %694 = vst [vmem:[%s691 + $0x10] sm:$0xff] %v685
        %695 = vst [vmem:[%s691 + $0x18] sm:$0xff] %v686
        %696 = vst [vmem:[%s691 + $0x20] sm:$0xff] %v687
        %697 = vst [vmem:[%s691 + $0x28] sm:$0xff] %v688
        %698 = vst [vmem:[%s691 + $0x30] sm:$0xff] %v689
        %699 = vst [vmem:[%s691 + $0x38] sm:$0xff] %v690
        %v700 = vadd.f32 %v683, %v685
        %v701 = vadd.f32 %v700, %v687
        %v702 = vadd.f32 %v701, %v689
        %v703 = vrot.slane %v702, 4
        %v704 = vadd.f32 %v702, %v703
        %v705 = vrot.slane %v704, 2
        %v706 = vadd.f32 %v704, %v705
        %v707 = vrot.slane %v706, 1
        %v708 = vadd.f32 %v706, %v707
        %v709 = vadd.f32 %v684, %v686
        %v710 = vadd.f32 %v709, %v688
        %v711 = vadd.f32 %v710, %v690
        %v712 = vrot.slane %v711, 4
        %v713 = vadd.f32 %v711, %v712
        %v714 = vrot.slane %v713, 2
        %v715 = vadd.f32 %v713, %v714
        %v716 = vrot.slane %v715, 1
        %v717 = vadd.f32 %v715, %v716
        %v718 = vmul.f32 %v708, %v504
        %v719 = vmul.f32 %v717, %v504
        %v722 = vcombine.low %v718, %v719
        %v724 = vunpack.c.l.s4 1966171168
        %v725 = vunpack.c.0.s8 %v724
        %v726 = vlaneseq
        %v727 = vshrl.u32 %v726, 7
        %v728 = vsub.s32 %v725, %v727
        %v729 = vrot.slane %v722, %v728
        %v731 = vunpack.c.l.s4 1966171168
        %v732 = vunpack.c.0.s8 %v731
        %v733 = vlaneseq
        %v734 = vshrl.u32 %v733, 7
        %v735 = vsub.s32 %v732, %v734
        %v736 = vrot.slane %v729, %v735
        %s738 = scalar_lea.vmem [#allocation3], 9
        %739 = vst.msk [vmem:[%s738] ss:$8 sm:$0x3] %vm528, %v736
        %740 = vst.msk [vmem:[%s738] ss:$8 sm:$0x0] %vm528, %v736
        %v741 = vmax.f32 %v683, %v687
        %v742 = vmax.f32 %v685, %v689
        %v743 = vmax.f32 %v741, %v742
        %v744 = vrot.slane %v743, 4
        %v745 = vmax.f32 %v743, %v744
        %v746 = vrot.slane %v745, 2
        %v747 = vmax.f32 %v745, %v746
        %v748 = vrot.slane %v747, 1
        %v749 = vmax.f32 %v747, %v748
        %v750 = vmax.f32 %v684, %v688
        %v751 = vmax.f32 %v686, %v690
        %v752 = vmax.f32 %v750, %v751
        %v753 = vrot.slane %v752, 4
        %v754 = vmax.f32 %v752, %v753
        %v755 = vrot.slane %v754, 2
        %v756 = vmax.f32 %v754, %v755
        %v757 = vrot.slane %v756, 1
        %v758 = vmax.f32 %v756, %v757
        %v761 = vcombine.low %v749, %v758
        %v763 = vunpack.c.l.s4 1966171168
        %v764 = vunpack.c.0.s8 %v763
        %v765 = vlaneseq
        %v766 = vshrl.u32 %v765, 7
        %v767 = vsub.s32 %v764, %v766
        %v768 = vrot.slane %v761, %v767
        %v770 = vunpack.c.l.s4 1966171168
        %v771 = vunpack.c.0.s8 %v770
        %v772 = vlaneseq
        %v773 = vshrl.u32 %v772, 7
        %v774 = vsub.s32 %v771, %v773
        %v775 = vrot.slane %v768, %v774
        %s777 = scalar_lea.vmem [#allocation3], 13
        %778 = vst.msk [vmem:[%s777] ss:$8 sm:$0x3] %vm528, %v775
        %779 = vst.msk [vmem:[%s777] ss:$8 sm:$0x0] %vm528, %v775
        %s780 = scalar_lea.vmem %s302, 128 [#allocation5]
        %v781 = vld [vmem:[%s780] sm:$0xff]
        %v782 = vld [vmem:[%s780 + $0x8] sm:$0xff]
        %v783 = vld [vmem:[%s780 + $0x10] sm:$0xff]
        %v784 = vld [vmem:[%s780 + $0x18] sm:$0xff]
        %v785 = vld [vmem:[%s780 + $0x20] sm:$0xff]
        %v786 = vld [vmem:[%s780 + $0x28] sm:$0xff]
        %v787 = vld [vmem:[%s780 + $0x30] sm:$0xff]
        %v788 = vld [vmem:[%s780 + $0x38] sm:$0xff]
        %v789 = vadd.f32 %v781, %v782
        %790 = vadd.xlane.f32.xlu0 %v789
        %v791 = vpop.xlane.xlu0 %790
        %v792 = vadd.f32 %v783, %v784
        %793 = vadd.xlane.f32.xlu0 %v792
        %v794 = vpop.xlane.xlu0 %793
        %v795 = vadd.f32 %v785, %v786
        %796 = vadd.xlane.f32.xlu0 %v795
        %v797 = vpop.xlane.xlu0 %796
        %v798 = vadd.f32 %v787, %v788
        %799 = vadd.xlane.f32.xlu0 %v798
        %v800 = vpop.xlane.xlu0 %799
        %v801 = vmul.f32 %v791, %v377
        %v802 = vmul.f32 %v794, %v377
        %v803 = vmul.f32 %v797, %v377
        %v804 = vmul.f32 %v800, %v377
        %v805 = vmul.f32 %v801, %v342
        %v806 = vmul.f32 %v802, %v343
        %v807 = vmul.f32 %v803, %v344
        %v808 = vmul.f32 %v804, %v345
        %v809 = vsel %vm386, %v805, 0.0
        %v810 = vsel %vm386, %v806, 0.0
        %v811 = vadd.f32 %v809, %v810
        %v812 = vsel %vm386, %v807, 0.0
        %v813 = vadd.f32 %v811, %v812
        %v814 = vsel %vm386, %v808, 0.0
        %v815 = vadd.f32 %v813, %v814
        %v816 = vrot.slane %v815, 4
        %v817 = vadd.f32 %v815, %v816
        %v818 = vrot.slane %v817, 2
        %v819 = vadd.f32 %v817, %v818
        %v820 = vrot.slane %v819, 1
        %v821 = vadd.f32 %v819, %v820
        %v822 = vadd.f32 %v821, %v350
        %v823 = vmax.f32 %v822, 0.0
        %v824 = vlaneseq
        %v825 = vshrl.u32 %v824, 7
        %v826 = vsub.s32 0, %v825
        %v827 = vrot.slane %v823, %v826
        %v828 = vmul.f32 %v827, %v346
        %v829 = vmul.f32 %v827, %v347
        %v830 = vmul.f32 %v827, %v348
        %v831 = vmul.f32 %v827, %v349
        %v832 = vsel %vm386, %v828, 0.0
        %833 = vadd.xlane.f32.xlu0 %v832
        %v834 = vpop.xlane.xlu0 %833
        %v835 = vsel %vm386, %v829, 0.0
        %836 = vadd.xlane.f32.xlu0 %v835
        %v837 = vpop.xlane.xlu0 %836
        %v838 = vsel %vm386, %v830, 0.0
        %839 = vadd.xlane.f32.xlu0 %v838
        %v840 = vpop.xlane.xlu0 %839
        %v841 = vsel %vm386, %v831, 0.0
        %842 = vadd.xlane.f32.xlu0 %v841
        %v843 = vpop.xlane.xlu0 %842
        %v844 = vadd.f32 %v834, %v351
        %v845 = vadd.f32 %v837, %v352
        %v846 = vadd.f32 %v840, %v353
        %v847 = vadd.f32 %v843, %v354
        %v848 = vxor.u32 %v844, 2147483648
        %v849 = vxor.u32 %v845, 2147483648
        %v850 = vxor.u32 %v846, 2147483648
        %v851 = vxor.u32 %v847, 2147483648
        %v852 = vmul.f32 %v848, 1.442695
        %v853 = vpow.pop %v852
        %v854 = vmul.f32 %v849, 1.442695
        %v855 = vpow.pop %v854
        %v856 = vmul.f32 %v850, 1.442695
        %v857 = vpow.pop %v856
        %v858 = vmul.f32 %v851, 1.442695
        %v859 = vpow.pop %v858
        %v860 = vadd.f32 %v853, 1.0
        %v861 = vadd.f32 %v855, 1.0
        %v862 = vadd.f32 %v857, 1.0
        %v863 = vadd.f32 %v859, 1.0
        %v864 = vrcp.pop %v860
        %v865 = vmul.f32 1.0, %v864
        %v866 = vrcp.pop %v861
        %v867 = vmul.f32 1.0, %v866
        %v868 = vrcp.pop %v862
        %v869 = vmul.f32 1.0, %v868
        %v870 = vrcp.pop %v863
        %v871 = vmul.f32 1.0, %v870
        %873 = vset.pattern.permute.xlu0 0
        %874 = vperm.xlu0 %873, %v865
        %v875 = vpop.permute.xlu0 %874
        %878 = vset.pattern.permute.xlu0 0
        %879 = vperm.xlu0 %878, %v867
        %v880 = vpop.permute.xlu0 %879
        %883 = vset.pattern.permute.xlu0 0
        %884 = vperm.xlu0 %883, %v869
        %v885 = vpop.permute.xlu0 %884
        %888 = vset.pattern.permute.xlu0 0
        %889 = vperm.xlu0 %888, %v871
        %v890 = vpop.permute.xlu0 %889
        %v892 = vmul.f32 %v781, %v875
        %v893 = vmul.f32 %v782, %v875
        %v894 = vmul.f32 %v783, %v880
        %v895 = vmul.f32 %v784, %v880
        %v896 = vmul.f32 %v785, %v885
        %v897 = vmul.f32 %v786, %v885
        %v898 = vmul.f32 %v787, %v890
        %v899 = vmul.f32 %v788, %v890
        %s900 = scalar_lea.vmem [#allocation2], 128
        %901 = vst [vmem:[%s900] sm:$0xff] %v892
        %902 = vst [vmem:[%s900 + $0x8] sm:$0xff] %v893
        %903 = vst [vmem:[%s900 + $0x10] sm:$0xff] %v894
        %904 = vst [vmem:[%s900 + $0x18] sm:$0xff] %v895
        %905 = vst [vmem:[%s900 + $0x20] sm:$0xff] %v896
        %906 = vst [vmem:[%s900 + $0x28] sm:$0xff] %v897
        %907 = vst [vmem:[%s900 + $0x30] sm:$0xff] %v898
        %908 = vst [vmem:[%s900 + $0x38] sm:$0xff] %v899
        %v909 = vadd.f32 %v892, %v894
        %v910 = vadd.f32 %v909, %v896
        %v911 = vadd.f32 %v910, %v898
        %v912 = vrot.slane %v911, 4
        %v913 = vadd.f32 %v911, %v912
        %v914 = vrot.slane %v913, 2
        %v915 = vadd.f32 %v913, %v914
        %v916 = vrot.slane %v915, 1
        %v917 = vadd.f32 %v915, %v916
        %v918 = vadd.f32 %v893, %v895
        %v919 = vadd.f32 %v918, %v897
        %v920 = vadd.f32 %v919, %v899
        %v921 = vrot.slane %v920, 4
        %v922 = vadd.f32 %v920, %v921
        %v923 = vrot.slane %v922, 2
        %v924 = vadd.f32 %v922, %v923
        %v925 = vrot.slane %v924, 1
        %v926 = vadd.f32 %v924, %v925
        %v927 = vmul.f32 %v917, %v504
        %v928 = vmul.f32 %v926, %v504
        %v931 = vcombine.low %v927, %v928
        %v933 = vunpack.c.l.s4 1966171168
        %v934 = vunpack.c.0.s8 %v933
        %v935 = vlaneseq
        %v936 = vshrl.u32 %v935, 7
        %v937 = vsub.s32 %v934, %v936
        %v938 = vrot.slane %v931, %v937
        %v940 = vunpack.c.l.s4 1966171168
        %v941 = vunpack.c.0.s8 %v940
        %v942 = vlaneseq
        %v943 = vshrl.u32 %v942, 7
        %v944 = vsub.s32 %v941, %v943
        %v945 = vrot.slane %v938, %v944
        %s947 = scalar_lea.vmem [#allocation3], 10
        %948 = vst.msk [vmem:[%s947] ss:$8 sm:$0x3] %vm528, %v945
        %949 = vst.msk [vmem:[%s947] ss:$8 sm:$0x0] %vm528, %v945
        %v950 = vmax.f32 %v892, %v896
        %v951 = vmax.f32 %v894, %v898
        %v952 = vmax.f32 %v950, %v951
        %v953 = vrot.slane %v952, 4
        %v954 = vmax.f32 %v952, %v953
        %v955 = vrot.slane %v954, 2
        %v956 = vmax.f32 %v954, %v955
        %v957 = vrot.slane %v956, 1
        %v958 = vmax.f32 %v956, %v957
        %v959 = vmax.f32 %v893, %v897
        %v960 = vmax.f32 %v895, %v899
        %v961 = vmax.f32 %v959, %v960
        %v962 = vrot.slane %v961, 4
        %v963 = vmax.f32 %v961, %v962
        %v964 = vrot.slane %v963, 2
        %v965 = vmax.f32 %v963, %v964
        %v966 = vrot.slane %v965, 1
        %v967 = vmax.f32 %v965, %v966
        %v970 = vcombine.low %v958, %v967
        %v972 = vunpack.c.l.s4 1966171168
        %v973 = vunpack.c.0.s8 %v972
        %v974 = vlaneseq
        %v975 = vshrl.u32 %v974, 7
        %v976 = vsub.s32 %v973, %v975
        %v977 = vrot.slane %v970, %v976
        %v979 = vunpack.c.l.s4 1966171168
        %v980 = vunpack.c.0.s8 %v979
        %v981 = vlaneseq
        %v982 = vshrl.u32 %v981, 7
        %v983 = vsub.s32 %v980, %v982
        %v984 = vrot.slane %v977, %v983
        %s986 = scalar_lea.vmem [#allocation3], 14
        %987 = vst.msk [vmem:[%s986] ss:$8 sm:$0x3] %vm528, %v984
        %988 = vst.msk [vmem:[%s986] ss:$8 sm:$0x0] %vm528, %v984
        %s989 = scalar_lea.vmem %s302, 192 [#allocation5]
        %v990 = vld [vmem:[%s989] sm:$0xff]
        %v991 = vld [vmem:[%s989 + $0x8] sm:$0xff]
        %v992 = vld [vmem:[%s989 + $0x10] sm:$0xff]
        %v993 = vld [vmem:[%s989 + $0x18] sm:$0xff]
        %v994 = vld [vmem:[%s989 + $0x20] sm:$0xff]
        %v995 = vld [vmem:[%s989 + $0x28] sm:$0xff]
        %v996 = vld [vmem:[%s989 + $0x30] sm:$0xff]
        %v997 = vld [vmem:[%s989 + $0x38] sm:$0xff]
        %v998 = vadd.f32 %v990, %v991
        %999 = vadd.xlane.f32.xlu0 %v998
        %v1000 = vpop.xlane.xlu0 %999
        %v1001 = vadd.f32 %v992, %v993
        %1002 = vadd.xlane.f32.xlu0 %v1001
        %v1003 = vpop.xlane.xlu0 %1002
        %v1004 = vadd.f32 %v994, %v995
        %1005 = vadd.xlane.f32.xlu0 %v1004
        %v1006 = vpop.xlane.xlu0 %1005
        %v1007 = vadd.f32 %v996, %v997
        %1008 = vadd.xlane.f32.xlu0 %v1007
        %v1009 = vpop.xlane.xlu0 %1008
        %v1010 = vmul.f32 %v1000, %v377
        %v1011 = vmul.f32 %v1003, %v377
        %v1012 = vmul.f32 %v1006, %v377
        %v1013 = vmul.f32 %v1009, %v377
        %v1014 = vmul.f32 %v1010, %v342
        %v1015 = vmul.f32 %v1011, %v343
        %v1016 = vmul.f32 %v1012, %v344
        %v1017 = vmul.f32 %v1013, %v345
        %v1018 = vsel %vm386, %v1014, 0.0
        %v1019 = vsel %vm386, %v1015, 0.0
        %v1020 = vadd.f32 %v1018, %v1019
        %v1021 = vsel %vm386, %v1016, 0.0
        %v1022 = vadd.f32 %v1020, %v1021
        %v1023 = vsel %vm386, %v1017, 0.0
        %v1024 = vadd.f32 %v1022, %v1023
        %v1025 = vrot.slane %v1024, 4
        %v1026 = vadd.f32 %v1024, %v1025
        %v1027 = vrot.slane %v1026, 2
        %v1028 = vadd.f32 %v1026, %v1027
        %v1029 = vrot.slane %v1028, 1
        %v1030 = vadd.f32 %v1028, %v1029
        %v1031 = vadd.f32 %v1030, %v350
        %v1032 = vmax.f32 %v1031, 0.0
        %v1033 = vlaneseq
        %v1034 = vshrl.u32 %v1033, 7
        %v1035 = vsub.s32 0, %v1034
        %v1036 = vrot.slane %v1032, %v1035
        %v1037 = vmul.f32 %v1036, %v346
        %v1038 = vmul.f32 %v1036, %v347
        %v1039 = vmul.f32 %v1036, %v348
        %v1040 = vmul.f32 %v1036, %v349
        %v1041 = vsel %vm386, %v1037, 0.0
        %1042 = vadd.xlane.f32.xlu0 %v1041
        %v1043 = vpop.xlane.xlu0 %1042
        %v1044 = vsel %vm386, %v1038, 0.0
        %1045 = vadd.xlane.f32.xlu0 %v1044
        %v1046 = vpop.xlane.xlu0 %1045
        %v1047 = vsel %vm386, %v1039, 0.0
        %1048 = vadd.xlane.f32.xlu0 %v1047
        %v1049 = vpop.xlane.xlu0 %1048
        %v1050 = vsel %vm386, %v1040, 0.0
        %1051 = vadd.xlane.f32.xlu0 %v1050
        %v1052 = vpop.xlane.xlu0 %1051
        %v1053 = vadd.f32 %v1043, %v351
        %v1054 = vadd.f32 %v1046, %v352
        %v1055 = vadd.f32 %v1049, %v353
        %v1056 = vadd.f32 %v1052, %v354
        %v1057 = vxor.u32 %v1053, 2147483648
        %v1058 = vxor.u32 %v1054, 2147483648
        %v1059 = vxor.u32 %v1055, 2147483648
        %v1060 = vxor.u32 %v1056, 2147483648
        %v1061 = vmul.f32 %v1057, 1.442695
        %v1062 = vpow.pop %v1061
        %v1063 = vmul.f32 %v1058, 1.442695
        %v1064 = vpow.pop %v1063
        %v1065 = vmul.f32 %v1059, 1.442695
        %v1066 = vpow.pop %v1065
        %v1067 = vmul.f32 %v1060, 1.442695
        %v1068 = vpow.pop %v1067
        %v1069 = vadd.f32 %v1062, 1.0
        %v1070 = vadd.f32 %v1064, 1.0
        %v1071 = vadd.f32 %v1066, 1.0
        %v1072 = vadd.f32 %v1068, 1.0
        %v1073 = vrcp.pop %v1069
        %v1074 = vmul.f32 1.0, %v1073
        %v1075 = vrcp.pop %v1070
        %v1076 = vmul.f32 1.0, %v1075
        %v1077 = vrcp.pop %v1071
        %v1078 = vmul.f32 1.0, %v1077
        %v1079 = vrcp.pop %v1072
        %v1080 = vmul.f32 1.0, %v1079
        %1082 = vset.pattern.permute.xlu0 0
        %1083 = vperm.xlu0 %1082, %v1074
        %v1084 = vpop.permute.xlu0 %1083
        %1087 = vset.pattern.permute.xlu0 0
        %1088 = vperm.xlu0 %1087, %v1076
        %v1089 = vpop.permute.xlu0 %1088
        %1092 = vset.pattern.permute.xlu0 0
        %1093 = vperm.xlu0 %1092, %v1078
        %v1094 = vpop.permute.xlu0 %1093
        %1097 = vset.pattern.permute.xlu0 0
        %1098 = vperm.xlu0 %1097, %v1080
        %v1099 = vpop.permute.xlu0 %1098
        %v1101 = vmul.f32 %v990, %v1084
        %v1102 = vmul.f32 %v991, %v1084
        %v1103 = vmul.f32 %v992, %v1089
        %v1104 = vmul.f32 %v993, %v1089
        %v1105 = vmul.f32 %v994, %v1094
        %v1106 = vmul.f32 %v995, %v1094
        %v1107 = vmul.f32 %v996, %v1099
        %v1108 = vmul.f32 %v997, %v1099
        %s1109 = scalar_lea.vmem [#allocation2], 192
        %1110 = vst [vmem:[%s1109] sm:$0xff] %v1101
        %1111 = vst [vmem:[%s1109 + $0x8] sm:$0xff] %v1102
        %1112 = vst [vmem:[%s1109 + $0x10] sm:$0xff] %v1103
        %1113 = vst [vmem:[%s1109 + $0x18] sm:$0xff] %v1104
        %1114 = vst [vmem:[%s1109 + $0x20] sm:$0xff] %v1105
        %1115 = vst [vmem:[%s1109 + $0x28] sm:$0xff] %v1106
        %1116 = vst [vmem:[%s1109 + $0x30] sm:$0xff] %v1107
        %1117 = vst [vmem:[%s1109 + $0x38] sm:$0xff] %v1108
        %v1118 = vadd.f32 %v1101, %v1103
        %v1119 = vadd.f32 %v1118, %v1105
        %v1120 = vadd.f32 %v1119, %v1107
        %v1121 = vrot.slane %v1120, 4
        %v1122 = vadd.f32 %v1120, %v1121
        %v1123 = vrot.slane %v1122, 2
        %v1124 = vadd.f32 %v1122, %v1123
        %v1125 = vrot.slane %v1124, 1
        %v1126 = vadd.f32 %v1124, %v1125
        %v1127 = vadd.f32 %v1102, %v1104
        %v1128 = vadd.f32 %v1127, %v1106
        %v1129 = vadd.f32 %v1128, %v1108
        %v1130 = vrot.slane %v1129, 4
        %v1131 = vadd.f32 %v1129, %v1130
        %v1132 = vrot.slane %v1131, 2
        %v1133 = vadd.f32 %v1131, %v1132
        %v1134 = vrot.slane %v1133, 1
        %v1135 = vadd.f32 %v1133, %v1134
        %v1136 = vmul.f32 %v1126, %v504
        %v1137 = vmul.f32 %v1135, %v504
        %v1140 = vcombine.low %v1136, %v1137
        %v1142 = vunpack.c.l.s4 1966171168
        %v1143 = vunpack.c.0.s8 %v1142
        %v1144 = vlaneseq
        %v1145 = vshrl.u32 %v1144, 7
        %v1146 = vsub.s32 %v1143, %v1145
        %v1147 = vrot.slane %v1140, %v1146
        %v1149 = vunpack.c.l.s4 1966171168
        %v1150 = vunpack.c.0.s8 %v1149
        %v1151 = vlaneseq
        %v1152 = vshrl.u32 %v1151, 7
        %v1153 = vsub.s32 %v1150, %v1152
        %v1154 = vrot.slane %v1147, %v1153
        %s1156 = scalar_lea.vmem [#allocation3], 11
        %1157 = vst.msk [vmem:[%s1156] ss:$8 sm:$0x3] %vm528, %v1154
        %1158 = vst.msk [vmem:[%s1156] ss:$8 sm:$0x0] %vm528, %v1154
        %v1159 = vmax.f32 %v1101, %v1105
        %v1160 = vmax.f32 %v1103, %v1107
        %v1161 = vmax.f32 %v1159, %v1160
        %v1162 = vrot.slane %v1161, 4
        %v1163 = vmax.f32 %v1161, %v1162
        %v1164 = vrot.slane %v1163, 2
        %v1165 = vmax.f32 %v1163, %v1164
        %v1166 = vrot.slane %v1165, 1
        %v1167 = vmax.f32 %v1165, %v1166
        %v1168 = vmax.f32 %v1102, %v1106
        %v1169 = vmax.f32 %v1104, %v1108
        %v1170 = vmax.f32 %v1168, %v1169
        %v1171 = vrot.slane %v1170, 4
        %v1172 = vmax.f32 %v1170, %v1171
        %v1173 = vrot.slane %v1172, 2
        %v1174 = vmax.f32 %v1172, %v1173
        %v1175 = vrot.slane %v1174, 1
        %v1176 = vmax.f32 %v1174, %v1175
        %v1179 = vcombine.low %v1167, %v1176
        %v1181 = vunpack.c.l.s4 1966171168
        %v1182 = vunpack.c.0.s8 %v1181
        %v1183 = vlaneseq
        %v1184 = vshrl.u32 %v1183, 7
        %v1185 = vsub.s32 %v1182, %v1184
        %v1186 = vrot.slane %v1179, %v1185
        %v1188 = vunpack.c.l.s4 1966171168
        %v1189 = vunpack.c.0.s8 %v1188
        %v1190 = vlaneseq
        %v1191 = vshrl.u32 %v1190, 7
        %v1192 = vsub.s32 %v1189, %v1191
        %v1193 = vrot.slane %v1186, %v1192
        %s1195 = scalar_lea.vmem [#allocation3], 15
        %1196 = vst.msk [vmem:[%s1195] ss:$8 sm:$0x3] %vm528, %v1193
        %1197 = vst.msk [vmem:[%s1195] ss:$8 sm:$0x0] %vm528, %v1193
        %v1198 = vlaneseq
        %v1199 = vshrl.u32 %v1198, 7
        %vm1200 = vcmp.lt.s32.totalorder %v1199, 4
        %v1201 = vld [vmem:[%s5] sm:$0x7f]
        %v1202 = vld [vmem:[%s5 + $0x8] sm:$0x7f]
        %s1203 = sld [smem:[#allocation9]]
        %s1204 = sld [smem:[#allocation9 + $0x31]]
        %v1205 = vstv %s1203
        %v1206 = vstv %s1204
        %v1207 = vsel %vm1200, %v1205, %v1206
        %v1208 = vld [vmem:[#allocation3] sm:$0xff]
        %v1209 = vld [vmem:[#allocation3 + $0x8] sm:$0xff]
        %v1210 = vld [vmem:[#allocation3 + $0x10] sm:$0xff]
        %v1211 = vmul.f32 %v1207, %v1208
        %v1212 = vmul.f32 %v1207, %v1209
        %v1213 = vmul.f32 %v1207, %v1210
        %s1214 = sld [smem:[#allocation9 + $0x7]]
        %s1215 = sld [smem:[#allocation9 + $0x38]]
        %v1216 = vstv %s1214
        %v1217 = vstv %s1215
        %v1218 = vsel %vm1200, %v1216, %v1217
        %v1219 = vmul.f32 %v1218, %v1208
        %v1220 = vmul.f32 %v1218, %v1209
        %v1221 = vmul.f32 %v1218, %v1210
        %s1222 = sld [smem:[#allocation9 + $0xe]]
        %s1223 = sld [smem:[#allocation9 + $0x3f]]
        %v1224 = vstv %s1222
        %v1225 = vstv %s1223
        %v1226 = vsel %vm1200, %v1224, %v1225
        %v1227 = vmul.f32 %v1226, %v1208
        %v1228 = vmul.f32 %v1226, %v1209
        %v1229 = vmul.f32 %v1226, %v1210
        %1233 = vrot.lane.b32.xlu0 %v1227, 96
        %v1234 = vpop.permute.xlu0 %1233
        %1235 = vrot.lane.b32.xlu0 %v1228, 96
        %v1236 = vpop.permute.xlu0 %1235
        %1237 = vrot.lane.b32.xlu0 %v1229, 96
        %v1238 = vpop.permute.xlu0 %1237
        %vm1239 = vcmask 785408
        %v1240 = vsel %vm1239, %v1234, %v1236
        %v1241 = vsel %vm1239, %v1236, %v1238
        %v1245 = vadd.f32 %v1211, %v1240
        %v1246 = vadd.f32 %v1212, %v1241
        %v1247 = vadd.f32 %v1213, %v1238
        %s1248 = sld [smem:[#allocation9 + $0x15]]
        %s1249 = sld [smem:[#allocation9 + $0x46]]
        %v1250 = vstv %s1248
        %v1251 = vstv %s1249
        %v1252 = vsel %vm1200, %v1250, %v1251
        %v1253 = vmul.f32 %v1252, %v1208
        %v1254 = vmul.f32 %v1252, %v1209
        %v1255 = vmul.f32 %v1252, %v1210
        %1259 = vrot.lane.b32.xlu0 %v1253, 96
        %v1260 = vpop.permute.xlu0 %1259
        %1261 = vrot.lane.b32.xlu0 %v1254, 96
        %v1262 = vpop.permute.xlu0 %1261
        %1263 = vrot.lane.b32.xlu0 %v1255, 96
        %v1264 = vpop.permute.xlu0 %1263
        %v1265 = vsel %vm1239, %v1260, %v1262
        %v1266 = vsel %vm1239, %v1262, %v1264
        %v1270 = vadd.f32 %v1219, %v1265
        %v1271 = vadd.f32 %v1220, %v1266
        %v1272 = vadd.f32 %v1221, %v1264
        %s1273 = sld [smem:[#allocation9 + $0x1c]]
        %s1274 = sld [smem:[#allocation9 + $0x4d]]
        %v1275 = vstv %s1273
        %v1276 = vstv %s1274
        %v1277 = vsel %vm1200, %v1275, %v1276
        %v1278 = vld [vmem:[#allocation3 + $0x8] sm:$0xff]
        %v1279 = vld [vmem:[#allocation3 + $0x10] sm:$0xff]
        %v1280 = vld [vmem:[#allocation3 + $0x18] sm:$0xff]
        %v1281 = vmul.f32 %v1277, %v1278
        %v1282 = vmul.f32 %v1277, %v1279
        %v1283 = vmul.f32 %v1277, %v1280
        %1287 = vrot.lane.b32.xlu0 %v1281, 64
        %v1288 = vpop.permute.xlu0 %1287
        %1289 = vrot.lane.b32.xlu0 %v1282, 64
        %v1290 = vpop.permute.xlu0 %1289
        %1291 = vrot.lane.b32.xlu0 %v1283, 64
        %v1292 = vpop.permute.xlu0 %1291
        %vm1293 = vcmask 523264
        %v1294 = vsel %vm1293, %v1288, %v1290
        %v1295 = vsel %vm1293, %v1290, %v1292
        %v1299 = vadd.f32 %v1245, %v1288
        %v1300 = vadd.f32 %v1246, %v1294
        %v1301 = vadd.f32 %v1247, %v1295
        %s1302 = sld [smem:[#allocation9 + $0x23]]
        %s1303 = sld [smem:[#allocation9 + $0x54]]
        %v1304 = vstv %s1302
        %v1305 = vstv %s1303
        %v1306 = vsel %vm1200, %v1304, %v1305
        %v1307 = vmul.f32 %v1306, %v1278
        %v1308 = vmul.f32 %v1306, %v1279
        %v1309 = vmul.f32 %v1306, %v1280
        %1313 = vrot.lane.b32.xlu0 %v1307, 64
        %v1314 = vpop.permute.xlu0 %1313
        %1315 = vrot.lane.b32.xlu0 %v1308, 64
        %v1316 = vpop.permute.xlu0 %1315
        %1317 = vrot.lane.b32.xlu0 %v1309, 64
        %v1318 = vpop.permute.xlu0 %1317
        %v1319 = vsel %vm1293, %v1314, %v1316
        %v1320 = vsel %vm1293, %v1316, %v1318
        %v1324 = vadd.f32 %v1270, %v1314
        %v1325 = vadd.f32 %v1271, %v1319
        %v1326 = vadd.f32 %v1272, %v1320
        %s1327 = sld [smem:[#allocation9 + $0x2a]]
        %s1328 = sld [smem:[#allocation9 + $0x5b]]
        %v1329 = vstv %s1327
        %v1330 = vstv %s1328
        %v1331 = vsel %vm1200, %v1329, %v1330
        %v1332 = vmul.f32 %v1331, %v1278
        %v1333 = vmul.f32 %v1331, %v1279
        %v1334 = vmul.f32 %v1331, %v1280
        %1338 = vrot.lane.b32.xlu0 %v1332, 32
        %v1339 = vpop.permute.xlu0 %1338
        %1340 = vrot.lane.b32.xlu0 %v1333, 32
        %v1341 = vpop.permute.xlu0 %1340
        %1342 = vrot.lane.b32.xlu0 %v1334, 32
        %v1343 = vpop.permute.xlu0 %1342
        %vm1344 = vcmask 261120
        %v1345 = vsel %vm1344, %v1339, %v1341
        %v1346 = vsel %vm1344, %v1341, %v1343
        %v1350 = vadd.f32 %v1299, %v1339
        %v1351 = vadd.f32 %v1300, %v1345
        %v1352 = vadd.f32 %v1301, %v1346
        %1356 = vrot.lane.b32.xlu0 %v1324, 112
        %v1357 = vpop.permute.xlu0 %1356
        %1358 = vrot.lane.b32.xlu0 %v1325, 112
        %v1359 = vpop.permute.xlu0 %1358
        %1360 = vrot.lane.b32.xlu0 %v1326, 112
        %v1361 = vpop.permute.xlu0 %1360
        %vm1362 = vcmask 916480
        %v1363 = vsel %vm1362, %v1357, %v1359
        %v1364 = vsel %vm1362, %v1359, %v1361
        %v1368 = vadd.f32 %v1350, %v1363
        %v1369 = vadd.f32 %v1351, %v1364
        %v1370 = vadd.f32 %v1352, %v1361
        %v1371 = vlaneseq
        %v1372 = vshrl.u32 %v1371, 7
        %v1373 = vsub.s32 0, %v1372
        %v1374 = vrot.slane %v1201, %v1373
        %v1375 = vlaneseq
        %v1376 = vshrl.u32 %v1375, 7
        %v1377 = vsub.s32 0, %v1376
        %v1378 = vrot.slane %v1202, %v1377
        %1381 = vrot.lane.b32.xlu0 %v1374, 77
        %v1382 = vpop.permute.xlu0 %1381
        %1383 = vrot.lane.b32.xlu0 %v1378, 77
        %v1384 = vpop.permute.xlu0 %1383
        %vm1385 = vcmask 629760
        %v1386 = vsel %vm1385, %v1382, %v1384
        %v1390 = vmul.f32 %v1368, %v1382
        %v1391 = vmul.f32 %v1369, %v1386
        %v1392 = vmul.f32 %v1370, %v1384
        %s1393 = sld [smem:[#allocation9 + $0x1]]
        %s1394 = sld [smem:[#allocation9 + $0x32]]
        %v1395 = vstv %s1393
        %v1396 = vstv %s1394
        %v1397 = vsel %vm1200, %v1395, %v1396
        %v1398 = vmul.f32 %v1397, %v1208
        %v1399 = vmul.f32 %v1397, %v1209
        %v1400 = vmul.f32 %v1397, %v1210
        %s1401 = sld [smem:[#allocation9 + $0x8]]
        %s1402 = sld [smem:[#allocation9 + $0x39]]
        %v1403 = vstv %s1401
        %v1404 = vstv %s1402
        %v1405 = vsel %vm1200, %v1403, %v1404
        %v1406 = vmul.f32 %v1405, %v1208
        %v1407 = vmul.f32 %v1405, %v1209
        %v1408 = vmul.f32 %v1405, %v1210
        %s1409 = sld [smem:[#allocation9 + $0xf]]
        %s1410 = sld [smem:[#allocation9 + $0x40]]
        %v1411 = vstv %s1409
        %v1412 = vstv %s1410
        %v1413 = vsel %vm1200, %v1411, %v1412
        %v1414 = vmul.f32 %v1413, %v1208
        %v1415 = vmul.f32 %v1413, %v1209
        %v1416 = vmul.f32 %v1413, %v1210
        %1420 = vrot.lane.b32.xlu0 %v1414, 96
        %v1421 = vpop.permute.xlu0 %1420
        %1422 = vrot.lane.b32.xlu0 %v1415, 96
        %v1423 = vpop.permute.xlu0 %1422
        %1424 = vrot.lane.b32.xlu0 %v1416, 96
        %v1425 = vpop.permute.xlu0 %1424
        %v1426 = vsel %vm1239, %v1421, %v1423
        %v1427 = vsel %vm1239, %v1423, %v1425
        %v1431 = vadd.f32 %v1398, %v1426
        %v1432 = vadd.f32 %v1399, %v1427
        %v1433 = vadd.f32 %v1400, %v1425
        %s1434 = sld [smem:[#allocation9 + $0x16]]
        %s1435 = sld [smem:[#allocation9 + $0x47]]
        %v1436 = vstv %s1434
        %v1437 = vstv %s1435
        %v1438 = vsel %vm1200, %v1436, %v1437
        %v1439 = vmul.f32 %v1438, %v1208
        %v1440 = vmul.f32 %v1438, %v1209
        %v1441 = vmul.f32 %v1438, %v1210
        %1445 = vrot.lane.b32.xlu0 %v1439, 96
        %v1446 = vpop.permute.xlu0 %1445
        %1447 = vrot.lane.b32.xlu0 %v1440, 96
        %v1448 = vpop.permute.xlu0 %1447
        %1449 = vrot.lane.b32.xlu0 %v1441, 96
        %v1450 = vpop.permute.xlu0 %1449
        %v1451 = vsel %vm1239, %v1446, %v1448
        %v1452 = vsel %vm1239, %v1448, %v1450
        %v1456 = vadd.f32 %v1406, %v1451
        %v1457 = vadd.f32 %v1407, %v1452
        %v1458 = vadd.f32 %v1408, %v1450
        %s1459 = sld [smem:[#allocation9 + $0x1d]]
        %s1460 = sld [smem:[#allocation9 + $0x4e]]
        %v1461 = vstv %s1459
        %v1462 = vstv %s1460
        %v1463 = vsel %vm1200, %v1461, %v1462
        %v1464 = vmul.f32 %v1463, %v1278
        %v1465 = vmul.f32 %v1463, %v1279
        %v1466 = vmul.f32 %v1463, %v1280
        %1470 = vrot.lane.b32.xlu0 %v1464, 64
        %v1471 = vpop.permute.xlu0 %1470
        %1472 = vrot.lane.b32.xlu0 %v1465, 64
        %v1473 = vpop.permute.xlu0 %1472
        %1474 = vrot.lane.b32.xlu0 %v1466, 64
        %v1475 = vpop.permute.xlu0 %1474
        %v1476 = vsel %vm1293, %v1471, %v1473
        %v1477 = vsel %vm1293, %v1473, %v1475
        %v1481 = vadd.f32 %v1431, %v1471
        %v1482 = vadd.f32 %v1432, %v1476
        %v1483 = vadd.f32 %v1433, %v1477
        %s1484 = sld [smem:[#allocation9 + $0x24]]
        %s1485 = sld [smem:[#allocation9 + $0x55]]
        %v1486 = vstv %s1484
        %v1487 = vstv %s1485
        %v1488 = vsel %vm1200, %v1486, %v1487
        %v1489 = vmul.f32 %v1488, %v1278
        %v1490 = vmul.f32 %v1488, %v1279
        %v1491 = vmul.f32 %v1488, %v1280
        %1495 = vrot.lane.b32.xlu0 %v1489, 64
        %v1496 = vpop.permute.xlu0 %1495
        %1497 = vrot.lane.b32.xlu0 %v1490, 64
        %v1498 = vpop.permute.xlu0 %1497
        %1499 = vrot.lane.b32.xlu0 %v1491, 64
        %v1500 = vpop.permute.xlu0 %1499
        %v1501 = vsel %vm1293, %v1496, %v1498
        %v1502 = vsel %vm1293, %v1498, %v1500
        %v1506 = vadd.f32 %v1456, %v1496
        %v1507 = vadd.f32 %v1457, %v1501
        %v1508 = vadd.f32 %v1458, %v1502
        %s1509 = sld [smem:[#allocation9 + $0x2b]]
        %s1510 = sld [smem:[#allocation9 + $0x5c]]
        %v1511 = vstv %s1509
        %v1512 = vstv %s1510
        %v1513 = vsel %vm1200, %v1511, %v1512
        %v1514 = vmul.f32 %v1513, %v1278
        %v1515 = vmul.f32 %v1513, %v1279
        %v1516 = vmul.f32 %v1513, %v1280
        %1520 = vrot.lane.b32.xlu0 %v1514, 32
        %v1521 = vpop.permute.xlu0 %1520
        %1522 = vrot.lane.b32.xlu0 %v1515, 32
        %v1523 = vpop.permute.xlu0 %1522
        %1524 = vrot.lane.b32.xlu0 %v1516, 32
        %v1525 = vpop.permute.xlu0 %1524
        %v1526 = vsel %vm1344, %v1521, %v1523
        %v1527 = vsel %vm1344, %v1523, %v1525
        %v1531 = vadd.f32 %v1481, %v1521
        %v1532 = vadd.f32 %v1482, %v1526
        %v1533 = vadd.f32 %v1483, %v1527
        %1537 = vrot.lane.b32.xlu0 %v1506, 112
        %v1538 = vpop.permute.xlu0 %1537
        %1539 = vrot.lane.b32.xlu0 %v1507, 112
        %v1540 = vpop.permute.xlu0 %1539
        %1541 = vrot.lane.b32.xlu0 %v1508, 112
        %v1542 = vpop.permute.xlu0 %1541
        %v1543 = vsel %vm1362, %v1538, %v1540
        %v1544 = vsel %vm1362, %v1540, %v1542
        %v1548 = vadd.f32 %v1531, %v1543
        %v1549 = vadd.f32 %v1532, %v1544
        %v1550 = vadd.f32 %v1533, %v1542
        %v1551 = vlaneseq
        %v1552 = vshrl.u32 %v1551, 7
        %v1553 = vsub.s32 1, %v1552
        %v1554 = vrot.slane %v1201, %v1553
        %v1555 = vlaneseq
        %v1556 = vshrl.u32 %v1555, 7
        %v1557 = vsub.s32 1, %v1556
        %v1558 = vrot.slane %v1202, %v1557
        %1561 = vrot.lane.b32.xlu0 %v1554, 78
        %v1562 = vpop.permute.xlu0 %1561
        %1563 = vrot.lane.b32.xlu0 %v1558, 78
        %v1564 = vpop.permute.xlu0 %1563
        %vm1565 = vcmask 637952
        %v1566 = vsel %vm1565, %v1562, %v1564
        %v1570 = vmul.f32 %v1548, %v1562
        %v1571 = vmul.f32 %v1549, %v1566
        %v1572 = vmul.f32 %v1550, %v1564
        %s1573 = sld [smem:[#allocation9 + $0x2]]
        %s1574 = sld [smem:[#allocation9 + $0x33]]
        %v1575 = vstv %s1573
        %v1576 = vstv %s1574
        %v1577 = vsel %vm1200, %v1575, %v1576
        %v1578 = vmul.f32 %v1577, %v1208
        %v1579 = vmul.f32 %v1577, %v1209
        %v1580 = vmul.f32 %v1577, %v1210
        %s1581 = sld [smem:[#allocation9 + $0x9]]
        %s1582 = sld [smem:[#allocation9 + $0x3a]]
        %v1583 = vstv %s1581
        %v1584 = vstv %s1582
        %v1585 = vsel %vm1200, %v1583, %v1584
        %v1586 = vmul.f32 %v1585, %v1208
        %v1587 = vmul.f32 %v1585, %v1209
        %v1588 = vmul.f32 %v1585, %v1210
        %s1589 = sld [smem:[#allocation9 + $0x10]]
        %s1590 = sld [smem:[#allocation9 + $0x41]]
        %v1591 = vstv %s1589
        %v1592 = vstv %s1590
        %v1593 = vsel %vm1200, %v1591, %v1592
        %v1594 = vmul.f32 %v1593, %v1208
        %v1595 = vmul.f32 %v1593, %v1209
        %v1596 = vmul.f32 %v1593, %v1210
        %1600 = vrot.lane.b32.xlu0 %v1594, 96
        %v1601 = vpop.permute.xlu0 %1600
        %1602 = vrot.lane.b32.xlu0 %v1595, 96
        %v1603 = vpop.permute.xlu0 %1602
        %1604 = vrot.lane.b32.xlu0 %v1596, 96
        %v1605 = vpop.permute.xlu0 %1604
        %v1606 = vsel %vm1239, %v1601, %v1603
        %v1607 = vsel %vm1239, %v1603, %v1605
        %v1611 = vadd.f32 %v1578, %v1606
        %v1612 = vadd.f32 %v1579, %v1607
        %v1613 = vadd.f32 %v1580, %v1605
        %s1614 = sld [smem:[#allocation9 + $0x17]]
        %s1615 = sld [smem:[#allocation9 + $0x48]]
        %v1616 = vstv %s1614
        %v1617 = vstv %s1615
        %v1618 = vsel %vm1200, %v1616, %v1617
        %v1619 = vmul.f32 %v1618, %v1208
        %v1620 = vmul.f32 %v1618, %v1209
        %v1621 = vmul.f32 %v1618, %v1210
        %1625 = vrot.lane.b32.xlu0 %v1619, 96
        %v1626 = vpop.permute.xlu0 %1625
        %1627 = vrot.lane.b32.xlu0 %v1620, 96
        %v1628 = vpop.permute.xlu0 %1627
        %1629 = vrot.lane.b32.xlu0 %v1621, 96
        %v1630 = vpop.permute.xlu0 %1629
        %v1631 = vsel %vm1239, %v1626, %v1628
        %v1632 = vsel %vm1239, %v1628, %v1630
        %v1636 = vadd.f32 %v1586, %v1631
        %v1637 = vadd.f32 %v1587, %v1632
        %v1638 = vadd.f32 %v1588, %v1630
        %s1639 = sld [smem:[#allocation9 + $0x1e]]
        %s1640 = sld [smem:[#allocation9 + $0x4f]]
        %v1641 = vstv %s1639
        %v1642 = vstv %s1640
        %v1643 = vsel %vm1200, %v1641, %v1642
        %v1644 = vmul.f32 %v1643, %v1278
        %v1645 = vmul.f32 %v1643, %v1279
        %v1646 = vmul.f32 %v1643, %v1280
        %1650 = vrot.lane.b32.xlu0 %v1644, 64
        %v1651 = vpop.permute.xlu0 %1650
        %1652 = vrot.lane.b32.xlu0 %v1645, 64
        %v1653 = vpop.permute.xlu0 %1652
        %1654 = vrot.lane.b32.xlu0 %v1646, 64
        %v1655 = vpop.permute.xlu0 %1654
        %v1656 = vsel %vm1293, %v1651, %v1653
        %v1657 = vsel %vm1293, %v1653, %v1655
        %v1661 = vadd.f32 %v1611, %v1651
        %v1662 = vadd.f32 %v1612, %v1656
        %v1663 = vadd.f32 %v1613, %v1657
        %s1664 = sld [smem:[#allocation9 + $0x25]]
        %s1665 = sld [smem:[#allocation9 + $0x56]]
        %v1666 = vstv %s1664
        %v1667 = vstv %s1665
        %v1668 = vsel %vm1200, %v1666, %v1667
        %v1669 = vmul.f32 %v1668, %v1278
        %v1670 = vmul.f32 %v1668, %v1279
        %v1671 = vmul.f32 %v1668, %v1280
        %1675 = vrot.lane.b32.xlu0 %v1669, 64
        %v1676 = vpop.permute.xlu0 %1675
        %1677 = vrot.lane.b32.xlu0 %v1670, 64
        %v1678 = vpop.permute.xlu0 %1677
        %1679 = vrot.lane.b32.xlu0 %v1671, 64
        %v1680 = vpop.permute.xlu0 %1679
        %v1681 = vsel %vm1293, %v1676, %v1678
        %v1682 = vsel %vm1293, %v1678, %v1680
        %v1686 = vadd.f32 %v1636, %v1676
        %v1687 = vadd.f32 %v1637, %v1681
        %v1688 = vadd.f32 %v1638, %v1682
        %s1689 = sld [smem:[#allocation9 + $0x2c]]
        %s1690 = sld [smem:[#allocation9 + $0x5d]]
        %v1691 = vstv %s1689
        %v1692 = vstv %s1690
        %v1693 = vsel %vm1200, %v1691, %v1692
        %v1694 = vmul.f32 %v1693, %v1278
        %v1695 = vmul.f32 %v1693, %v1279
        %v1696 = vmul.f32 %v1693, %v1280
        %1700 = vrot.lane.b32.xlu0 %v1694, 32
        %v1701 = vpop.permute.xlu0 %1700
        %1702 = vrot.lane.b32.xlu0 %v1695, 32
        %v1703 = vpop.permute.xlu0 %1702
        %1704 = vrot.lane.b32.xlu0 %v1696, 32
        %v1705 = vpop.permute.xlu0 %1704
        %v1706 = vsel %vm1344, %v1701, %v1703
        %v1707 = vsel %vm1344, %v1703, %v1705
        %v1711 = vadd.f32 %v1661, %v1701
        %v1712 = vadd.f32 %v1662, %v1706
        %v1713 = vadd.f32 %v1663, %v1707
        %1717 = vrot.lane.b32.xlu0 %v1686, 112
        %v1718 = vpop.permute.xlu0 %1717
        %1719 = vrot.lane.b32.xlu0 %v1687, 112
        %v1720 = vpop.permute.xlu0 %1719
        %1721 = vrot.lane.b32.xlu0 %v1688, 112
        %v1722 = vpop.permute.xlu0 %1721
        %v1723 = vsel %vm1362, %v1718, %v1720
        %v1724 = vsel %vm1362, %v1720, %v1722
        %v1728 = vadd.f32 %v1711, %v1723
        %v1729 = vadd.f32 %v1712, %v1724
        %v1730 = vadd.f32 %v1713, %v1722
        %v1731 = vlaneseq
        %v1732 = vshrl.u32 %v1731, 7
        %v1733 = vsub.s32 2, %v1732
        %v1734 = vrot.slane %v1201, %v1733
        %v1735 = vlaneseq
        %v1736 = vshrl.u32 %v1735, 7
        %v1737 = vsub.s32 2, %v1736
        %v1738 = vrot.slane %v1202, %v1737
        %1741 = vrot.lane.b32.xlu0 %v1734, 79
        %v1742 = vpop.permute.xlu0 %1741
        %1743 = vrot.lane.b32.xlu0 %v1738, 79
        %v1744 = vpop.permute.xlu0 %1743
        %vm1745 = vcmask 646144
        %v1746 = vsel %vm1745, %v1742, %v1744
        %v1750 = vmul.f32 %v1728, %v1742
        %v1751 = vmul.f32 %v1729, %v1746
        %v1752 = vmul.f32 %v1730, %v1744
        %1756 = vrot.lane.b32.xlu0 %v1750, 126
        %v1757 = vpop.permute.xlu0 %1756
        %1758 = vrot.lane.b32.xlu0 %v1751, 126
        %v1759 = vpop.permute.xlu0 %1758
        %1760 = vrot.lane.b32.xlu0 %v1752, 126
        %v1761 = vpop.permute.xlu0 %1760
        %vm1762 = vcmask 1031168
        %v1763 = vsel %vm1762, %v1757, %v1759
        %v1764 = vsel %vm1762, %v1759, %v1761
        %v1768 = vadd.f32 %v1390, %v1763
        %v1769 = vadd.f32 %v1391, %v1764
        %v1770 = vadd.f32 %v1392, %v1761
        %s1771 = sld [smem:[#allocation9 + $0x3]]
        %s1772 = sld [smem:[#allocation9 + $0x34]]
        %v1773 = vstv %s1771
        %v1774 = vstv %s1772
        %v1775 = vsel %vm1200, %v1773, %v1774
        %v1776 = vmul.f32 %v1775, %v1208
        %v1777 = vmul.f32 %v1775, %v1209
        %v1778 = vmul.f32 %v1775, %v1210
        %s1779 = sld [smem:[#allocation9 + $0xa]]
        %s1780 = sld [smem:[#allocation9 + $0x3b]]
        %v1781 = vstv %s1779
        %v1782 = vstv %s1780
        %v1783 = vsel %vm1200, %v1781, %v1782
        %v1784 = vmul.f32 %v1783, %v1208
        %v1785 = vmul.f32 %v1783, %v1209
        %v1786 = vmul.f32 %v1783, %v1210
        %s1787 = sld [smem:[#allocation9 + $0x11]]
        %s1788 = sld [smem:[#allocation9 + $0x42]]
        %v1789 = vstv %s1787
        %v1790 = vstv %s1788
        %v1791 = vsel %vm1200, %v1789, %v1790
        %v1792 = vmul.f32 %v1791, %v1208
        %v1793 = vmul.f32 %v1791, %v1209
        %v1794 = vmul.f32 %v1791, %v1210
        %1798 = vrot.lane.b32.xlu0 %v1792, 96
        %v1799 = vpop.permute.xlu0 %1798
        %1800 = vrot.lane.b32.xlu0 %v1793, 96
        %v1801 = vpop.permute.xlu0 %1800
        %1802 = vrot.lane.b32.xlu0 %v1794, 96
        %v1803 = vpop.permute.xlu0 %1802
        %v1804 = vsel %vm1239, %v1799, %v1801
        %v1805 = vsel %vm1239, %v1801, %v1803
        %v1809 = vadd.f32 %v1776, %v1804
        %v1810 = vadd.f32 %v1777, %v1805
        %v1811 = vadd.f32 %v1778, %v1803
        %s1812 = sld [smem:[#allocation9 + $0x18]]
        %s1813 = sld [smem:[#allocation9 + $0x49]]
        %v1814 = vstv %s1812
        %v1815 = vstv %s1813
        %v1816 = vsel %vm1200, %v1814, %v1815
        %v1817 = vmul.f32 %v1816, %v1209
        %v1818 = vmul.f32 %v1816, %v1210
        %1821 = vrot.lane.b32.xlu0 %v1817, 96
        %v1822 = vpop.permute.xlu0 %1821
        %1823 = vrot.lane.b32.xlu0 %v1818, 96
        %v1824 = vpop.permute.xlu0 %1823
        %v1825 = vsel %vm1239, %v1822, %v1824
        %v1829 = vadd.f32 %v1784, %v1822
        %v1830 = vadd.f32 %v1785, %v1825
        %v1831 = vadd.f32 %v1786, %v1824
        %s1832 = sld [smem:[#allocation9 + $0x1f]]
        %s1833 = sld [smem:[#allocation9 + $0x50]]
        %v1834 = vstv %s1832
        %v1835 = vstv %s1833
        %v1836 = vsel %vm1200, %v1834, %v1835
        %v1837 = vmul.f32 %v1836, %v1278
        %v1838 = vmul.f32 %v1836, %v1279
        %v1839 = vmul.f32 %v1836, %v1280
        %1843 = vrot.lane.b32.xlu0 %v1837, 64
        %v1844 = vpop.permute.xlu0 %1843
        %1845 = vrot.lane.b32.xlu0 %v1838, 64
        %v1846 = vpop.permute.xlu0 %1845
        %1847 = vrot.lane.b32.xlu0 %v1839, 64
        %v1848 = vpop.permute.xlu0 %1847
        %v1849 = vsel %vm1293, %v1844, %v1846
        %v1850 = vsel %vm1293, %v1846, %v1848
        %v1854 = vadd.f32 %v1809, %v1844
        %v1855 = vadd.f32 %v1810, %v1849
        %v1856 = vadd.f32 %v1811, %v1850
        %s1857 = sld [smem:[#allocation9 + $0x26]]
        %s1858 = sld [smem:[#allocation9 + $0x57]]
        %v1859 = vstv %s1857
        %v1860 = vstv %s1858
        %v1861 = vsel %vm1200, %v1859, %v1860
        %v1862 = vmul.f32 %v1861, %v1278
        %v1863 = vmul.f32 %v1861, %v1279
        %v1864 = vmul.f32 %v1861, %v1280
        %1868 = vrot.lane.b32.xlu0 %v1862, 64
        %v1869 = vpop.permute.xlu0 %1868
        %1870 = vrot.lane.b32.xlu0 %v1863, 64
        %v1871 = vpop.permute.xlu0 %1870
        %1872 = vrot.lane.b32.xlu0 %v1864, 64
        %v1873 = vpop.permute.xlu0 %1872
        %v1874 = vsel %vm1293, %v1869, %v1871
        %v1875 = vsel %vm1293, %v1871, %v1873
        %v1879 = vadd.f32 %v1829, %v1869
        %v1880 = vadd.f32 %v1830, %v1874
        %v1881 = vadd.f32 %v1831, %v1875
        %s1882 = sld [smem:[#allocation9 + $0x2d]]
        %s1883 = sld [smem:[#allocation9 + $0x5e]]
        %v1884 = vstv %s1882
        %v1885 = vstv %s1883
        %v1886 = vsel %vm1200, %v1884, %v1885
        %v1887 = vmul.f32 %v1886, %v1278
        %v1888 = vmul.f32 %v1886, %v1279
        %v1889 = vmul.f32 %v1886, %v1280
        %1893 = vrot.lane.b32.xlu0 %v1887, 32
        %v1894 = vpop.permute.xlu0 %1893
        %1895 = vrot.lane.b32.xlu0 %v1888, 32
        %v1896 = vpop.permute.xlu0 %1895
        %1897 = vrot.lane.b32.xlu0 %v1889, 32
        %v1898 = vpop.permute.xlu0 %1897
        %v1899 = vsel %vm1344, %v1894, %v1896
        %v1900 = vsel %vm1344, %v1896, %v1898
        %v1904 = vadd.f32 %v1854, %v1894
        %v1905 = vadd.f32 %v1855, %v1899
        %v1906 = vadd.f32 %v1856, %v1900
        %1910 = vrot.lane.b32.xlu0 %v1879, 112
        %v1911 = vpop.permute.xlu0 %1910
        %1912 = vrot.lane.b32.xlu0 %v1880, 112
        %v1913 = vpop.permute.xlu0 %1912
        %1914 = vrot.lane.b32.xlu0 %v1881, 112
        %v1915 = vpop.permute.xlu0 %1914
        %v1916 = vsel %vm1362, %v1911, %v1913
        %v1917 = vsel %vm1362, %v1913, %v1915
        %v1921 = vadd.f32 %v1904, %v1916
        %v1922 = vadd.f32 %v1905, %v1917
        %v1923 = vadd.f32 %v1906, %v1915
        %v1924 = vlaneseq
        %v1925 = vshrl.u32 %v1924, 7
        %v1926 = vsub.s32 3, %v1925
        %v1927 = vrot.slane %v1201, %v1926
        %v1928 = vlaneseq
        %v1929 = vshrl.u32 %v1928, 7
        %v1930 = vsub.s32 3, %v1929
        %v1931 = vrot.slane %v1202, %v1930
        %1934 = vrot.lane.b32.xlu0 %v1927, 80
        %v1935 = vpop.permute.xlu0 %1934
        %1936 = vrot.lane.b32.xlu0 %v1931, 80
        %v1937 = vpop.permute.xlu0 %1936
        %vm1938 = vcmask 654336
        %v1939 = vsel %vm1938, %v1935, %v1937
        %v1943 = vmul.f32 %v1921, %v1935
        %v1944 = vmul.f32 %v1922, %v1939
        %v1945 = vmul.f32 %v1923, %v1937
        %1949 = vrot.lane.b32.xlu0 %v1943, 126
        %v1950 = vpop.permute.xlu0 %1949
        %1951 = vrot.lane.b32.xlu0 %v1944, 126
        %v1952 = vpop.permute.xlu0 %1951
        %1953 = vrot.lane.b32.xlu0 %v1945, 126
        %v1954 = vpop.permute.xlu0 %1953
        %v1955 = vsel %vm1762, %v1950, %v1952
        %v1956 = vsel %vm1762, %v1952, %v1954
        %v1960 = vadd.f32 %v1570, %v1955
        %v1961 = vadd.f32 %v1571, %v1956
        %v1962 = vadd.f32 %v1572, %v1954
        %s1963 = sld [smem:[#allocation9 + $0x4]]
        %s1964 = sld [smem:[#allocation9 + $0x35]]
        %v1965 = vstv %s1963
        %v1966 = vstv %s1964
        %v1967 = vsel %vm1200, %v1965, %v1966
        %v1968 = vmul.f32 %v1967, %v1208
        %v1969 = vmul.f32 %v1967, %v1209
        %v1970 = vmul.f32 %v1967, %v1210
        %s1971 = sld [smem:[#allocation9 + $0xb]]
        %s1972 = sld [smem:[#allocation9 + $0x3c]]
        %v1973 = vstv %s1971
        %v1974 = vstv %s1972
        %v1975 = vsel %vm1200, %v1973, %v1974
        %v1976 = vmul.f32 %v1975, %v1208
        %v1977 = vmul.f32 %v1975, %v1209
        %v1978 = vmul.f32 %v1975, %v1210
        %s1979 = sld [smem:[#allocation9 + $0x12]]
        %s1980 = sld [smem:[#allocation9 + $0x43]]
        %v1981 = vstv %s1979
        %v1982 = vstv %s1980
        %v1983 = vsel %vm1200, %v1981, %v1982
        %v1984 = vmul.f32 %v1983, %v1208
        %v1985 = vmul.f32 %v1983, %v1209
        %v1986 = vmul.f32 %v1983, %v1210
        %1990 = vrot.lane.b32.xlu0 %v1984, 96
        %v1991 = vpop.permute.xlu0 %1990
        %1992 = vrot.lane.b32.xlu0 %v1985, 96
        %v1993 = vpop.permute.xlu0 %1992
        %1994 = vrot.lane.b32.xlu0 %v1986, 96
        %v1995 = vpop.permute.xlu0 %1994
        %v1996 = vsel %vm1239, %v1991, %v1993
        %v1997 = vsel %vm1239, %v1993, %v1995
        %v2001 = vadd.f32 %v1968, %v1996
        %v2002 = vadd.f32 %v1969, %v1997
        %v2003 = vadd.f32 %v1970, %v1995
        %s2004 = sld [smem:[#allocation9 + $0x19]]
        %s2005 = sld [smem:[#allocation9 + $0x4a]]
        %v2006 = vstv %s2004
        %v2007 = vstv %s2005
        %v2008 = vsel %vm1200, %v2006, %v2007
        %v2009 = vmul.f32 %v2008, %v1278
        %v2010 = vmul.f32 %v2008, %v1279
        %v2011 = vmul.f32 %v2008, %v1280
        %2015 = vrot.lane.b32.xlu0 %v2009, 96
        %v2016 = vpop.permute.xlu0 %2015
        %2017 = vrot.lane.b32.xlu0 %v2010, 96
        %v2018 = vpop.permute.xlu0 %2017
        %2019 = vrot.lane.b32.xlu0 %v2011, 96
        %v2020 = vpop.permute.xlu0 %2019
        %v2021 = vsel %vm1239, %v2016, %v2018
        %v2022 = vsel %vm1239, %v2018, %v2020
        %v2026 = vadd.f32 %v1976, %v2016
        %v2027 = vadd.f32 %v1977, %v2021
        %v2028 = vadd.f32 %v1978, %v2022
        %s2029 = sld [smem:[#allocation9 + $0x20]]
        %s2030 = sld [smem:[#allocation9 + $0x51]]
        %v2031 = vstv %s2029
        %v2032 = vstv %s2030
        %v2033 = vsel %vm1200, %v2031, %v2032
        %v2034 = vmul.f32 %v2033, %v1278
        %v2035 = vmul.f32 %v2033, %v1279
        %v2036 = vmul.f32 %v2033, %v1280
        %2040 = vrot.lane.b32.xlu0 %v2034, 64
        %v2041 = vpop.permute.xlu0 %2040
        %2042 = vrot.lane.b32.xlu0 %v2035, 64
        %v2043 = vpop.permute.xlu0 %2042
        %2044 = vrot.lane.b32.xlu0 %v2036, 64
        %v2045 = vpop.permute.xlu0 %2044
        %v2046 = vsel %vm1293, %v2041, %v2043
        %v2047 = vsel %vm1293, %v2043, %v2045
        %v2051 = vadd.f32 %v2001, %v2041
        %v2052 = vadd.f32 %v2002, %v2046
        %v2053 = vadd.f32 %v2003, %v2047
        %s2054 = sld [smem:[#allocation9 + $0x27]]
        %s2055 = sld [smem:[#allocation9 + $0x58]]
        %v2056 = vstv %s2054
        %v2057 = vstv %s2055
        %v2058 = vsel %vm1200, %v2056, %v2057
        %v2059 = vmul.f32 %v2058, %v1278
        %v2060 = vmul.f32 %v2058, %v1279
        %v2061 = vmul.f32 %v2058, %v1280
        %2065 = vrot.lane.b32.xlu0 %v2059, 64
        %v2066 = vpop.permute.xlu0 %2065
        %2067 = vrot.lane.b32.xlu0 %v2060, 64
        %v2068 = vpop.permute.xlu0 %2067
        %2069 = vrot.lane.b32.xlu0 %v2061, 64
        %v2070 = vpop.permute.xlu0 %2069
        %v2071 = vsel %vm1293, %v2066, %v2068
        %v2072 = vsel %vm1293, %v2068, %v2070
        %v2076 = vadd.f32 %v2026, %v2066
        %v2077 = vadd.f32 %v2027, %v2071
        %v2078 = vadd.f32 %v2028, %v2072
        %s2079 = sld [smem:[#allocation9 + $0x2e]]
        %s2080 = sld [smem:[#allocation9 + $0x5f]]
        %v2081 = vstv %s2079
        %v2082 = vstv %s2080
        %v2083 = vsel %vm1200, %v2081, %v2082
        %v2084 = vmul.f32 %v2083, %v1278
        %v2085 = vmul.f32 %v2083, %v1279
        %v2086 = vmul.f32 %v2083, %v1280
        %2090 = vrot.lane.b32.xlu0 %v2084, 32
        %v2091 = vpop.permute.xlu0 %2090
        %2092 = vrot.lane.b32.xlu0 %v2085, 32
        %v2093 = vpop.permute.xlu0 %2092
        %2094 = vrot.lane.b32.xlu0 %v2086, 32
        %v2095 = vpop.permute.xlu0 %2094
        %v2096 = vsel %vm1344, %v2091, %v2093
        %v2097 = vsel %vm1344, %v2093, %v2095
        %v2101 = vadd.f32 %v2051, %v2091
        %v2102 = vadd.f32 %v2052, %v2096
        %v2103 = vadd.f32 %v2053, %v2097
        %2107 = vrot.lane.b32.xlu0 %v2076, 112
        %v2108 = vpop.permute.xlu0 %2107
        %2109 = vrot.lane.b32.xlu0 %v2077, 112
        %v2110 = vpop.permute.xlu0 %2109
        %2111 = vrot.lane.b32.xlu0 %v2078, 112
        %v2112 = vpop.permute.xlu0 %2111
        %v2113 = vsel %vm1362, %v2108, %v2110
        %v2114 = vsel %vm1362, %v2110, %v2112
        %v2118 = vadd.f32 %v2101, %v2113
        %v2119 = vadd.f32 %v2102, %v2114
        %v2120 = vadd.f32 %v2103, %v2112
        %v2121 = vlaneseq
        %v2122 = vshrl.u32 %v2121, 7
        %v2123 = vsub.s32 4, %v2122
        %v2124 = vrot.slane %v1201, %v2123
        %v2125 = vlaneseq
        %v2126 = vshrl.u32 %v2125, 7
        %v2127 = vsub.s32 4, %v2126
        %v2128 = vrot.slane %v1202, %v2127
        %2131 = vrot.lane.b32.xlu0 %v2124, 81
        %v2132 = vpop.permute.xlu0 %2131
        %2133 = vrot.lane.b32.xlu0 %v2128, 81
        %v2134 = vpop.permute.xlu0 %2133
        %vm2135 = vcmask 662528
        %v2136 = vsel %vm2135, %v2132, %v2134
        %v2140 = vmul.f32 %v2118, %v2132
        %v2141 = vmul.f32 %v2119, %v2136
        %v2142 = vmul.f32 %v2120, %v2134
        %2146 = vrot.lane.b32.xlu0 %v2140, 124
        %v2147 = vpop.permute.xlu0 %2146
        %2148 = vrot.lane.b32.xlu0 %v2141, 124
        %v2149 = vpop.permute.xlu0 %2148
        %2150 = vrot.lane.b32.xlu0 %v2142, 124
        %v2151 = vpop.permute.xlu0 %2150
        %vm2152 = vcmask 1014784
        %v2153 = vsel %vm2152, %v2147, %v2149
        %v2154 = vsel %vm2152, %v2149, %v2151
        %v2158 = vadd.f32 %v1768, %v2153
        %v2159 = vadd.f32 %v1769, %v2154
        %v2160 = vadd.f32 %v1770, %v2151
        %s2161 = sld [smem:[#allocation9 + $0x5]]
        %s2162 = sld [smem:[#allocation9 + $0x36]]
        %v2163 = vstv %s2161
        %v2164 = vstv %s2162
        %v2165 = vsel %vm1200, %v2163, %v2164
        %v2166 = vmul.f32 %v2165, %v1208
        %v2167 = vmul.f32 %v2165, %v1209
        %v2168 = vmul.f32 %v2165, %v1210
        %s2169 = sld [smem:[#allocation9 + $0xc]]
        %s2170 = sld [smem:[#allocation9 + $0x3d]]
        %v2171 = vstv %s2169
        %v2172 = vstv %s2170
        %v2173 = vsel %vm1200, %v2171, %v2172
        %v2174 = vmul.f32 %v2173, %v1208
        %v2175 = vmul.f32 %v2173, %v1209
        %v2176 = vmul.f32 %v2173, %v1210
        %s2177 = sld [smem:[#allocation9 + $0x13]]
        %s2178 = sld [smem:[#allocation9 + $0x44]]
        %v2179 = vstv %s2177
        %v2180 = vstv %s2178
        %v2181 = vsel %vm1200, %v2179, %v2180
        %v2182 = vmul.f32 %v2181, %v1208
        %v2183 = vmul.f32 %v2181, %v1209
        %v2184 = vmul.f32 %v2181, %v1210
        %2188 = vrot.lane.b32.xlu0 %v2182, 96
        %v2189 = vpop.permute.xlu0 %2188
        %2190 = vrot.lane.b32.xlu0 %v2183, 96
        %v2191 = vpop.permute.xlu0 %2190
        %2192 = vrot.lane.b32.xlu0 %v2184, 96
        %v2193 = vpop.permute.xlu0 %2192
        %v2194 = vsel %vm1239, %v2189, %v2191
        %v2195 = vsel %vm1239, %v2191, %v2193
        %v2199 = vadd.f32 %v2166, %v2194
        %v2200 = vadd.f32 %v2167, %v2195
        %v2201 = vadd.f32 %v2168, %v2193
        %s2202 = sld [smem:[#allocation9 + $0x1a]]
        %s2203 = sld [smem:[#allocation9 + $0x4b]]
        %v2204 = vstv %s2202
        %v2205 = vstv %s2203
        %v2206 = vsel %vm1200, %v2204, %v2205
        %v2207 = vmul.f32 %v2206, %v1278
        %v2208 = vmul.f32 %v2206, %v1279
        %v2209 = vmul.f32 %v2206, %v1280
        %2213 = vrot.lane.b32.xlu0 %v2207, 96
        %v2214 = vpop.permute.xlu0 %2213
        %2215 = vrot.lane.b32.xlu0 %v2208, 96
        %v2216 = vpop.permute.xlu0 %2215
        %2217 = vrot.lane.b32.xlu0 %v2209, 96
        %v2218 = vpop.permute.xlu0 %2217
        %v2219 = vsel %vm1239, %v2214, %v2216
        %v2220 = vsel %vm1239, %v2216, %v2218
        %v2224 = vadd.f32 %v2174, %v2214
        %v2225 = vadd.f32 %v2175, %v2219
        %v2226 = vadd.f32 %v2176, %v2220
        %s2227 = sld [smem:[#allocation9 + $0x21]]
        %s2228 = sld [smem:[#allocation9 + $0x52]]
        %v2229 = vstv %s2227
        %v2230 = vstv %s2228
        %v2231 = vsel %vm1200, %v2229, %v2230
        %v2232 = vmul.f32 %v2231, %v1278
        %v2233 = vmul.f32 %v2231, %v1279
        %v2234 = vmul.f32 %v2231, %v1280
        %2238 = vrot.lane.b32.xlu0 %v2232, 64
        %v2239 = vpop.permute.xlu0 %2238
        %2240 = vrot.lane.b32.xlu0 %v2233, 64
        %v2241 = vpop.permute.xlu0 %2240
        %2242 = vrot.lane.b32.xlu0 %v2234, 64
        %v2243 = vpop.permute.xlu0 %2242
        %v2244 = vsel %vm1293, %v2239, %v2241
        %v2245 = vsel %vm1293, %v2241, %v2243
        %v2249 = vadd.f32 %v2199, %v2239
        %v2250 = vadd.f32 %v2200, %v2244
        %v2251 = vadd.f32 %v2201, %v2245
        %s2252 = sld [smem:[#allocation9 + $0x28]]
        %s2253 = sld [smem:[#allocation9 + $0x59]]
        %v2254 = vstv %s2252
        %v2255 = vstv %s2253
        %v2256 = vsel %vm1200, %v2254, %v2255
        %v2257 = vmul.f32 %v2256, %v1278
        %v2258 = vmul.f32 %v2256, %v1279
        %v2259 = vmul.f32 %v2256, %v1280
        %2263 = vrot.lane.b32.xlu0 %v2257, 64
        %v2264 = vpop.permute.xlu0 %2263
        %2265 = vrot.lane.b32.xlu0 %v2258, 64
        %v2266 = vpop.permute.xlu0 %2265
        %2267 = vrot.lane.b32.xlu0 %v2259, 64
        %v2268 = vpop.permute.xlu0 %2267
        %v2269 = vsel %vm1293, %v2264, %v2266
        %v2270 = vsel %vm1293, %v2266, %v2268
        %v2274 = vadd.f32 %v2224, %v2264
        %v2275 = vadd.f32 %v2225, %v2269
        %v2276 = vadd.f32 %v2226, %v2270
        %s2277 = sld [smem:[#allocation9 + $0x2f]]
        %s2278 = sld [smem:[#allocation9 + $0x60]]
        %v2279 = vstv %s2277
        %v2280 = vstv %s2278
        %v2281 = vsel %vm1200, %v2279, %v2280
        %v2282 = vmul.f32 %v2281, %v1278
        %v2283 = vmul.f32 %v2281, %v1279
        %v2284 = vmul.f32 %v2281, %v1280
        %2288 = vrot.lane.b32.xlu0 %v2282, 32
        %v2289 = vpop.permute.xlu0 %2288
        %2290 = vrot.lane.b32.xlu0 %v2283, 32
        %v2291 = vpop.permute.xlu0 %2290
        %2292 = vrot.lane.b32.xlu0 %v2284, 32
        %v2293 = vpop.permute.xlu0 %2292
        %v2294 = vsel %vm1344, %v2289, %v2291
        %v2295 = vsel %vm1344, %v2291, %v2293
        %v2299 = vadd.f32 %v2249, %v2289
        %v2300 = vadd.f32 %v2250, %v2294
        %v2301 = vadd.f32 %v2251, %v2295
        %2305 = vrot.lane.b32.xlu0 %v2274, 112
        %v2306 = vpop.permute.xlu0 %2305
        %2307 = vrot.lane.b32.xlu0 %v2275, 112
        %v2308 = vpop.permute.xlu0 %2307
        %2309 = vrot.lane.b32.xlu0 %v2276, 112
        %v2310 = vpop.permute.xlu0 %2309
        %v2311 = vsel %vm1362, %v2306, %v2308
        %v2312 = vsel %vm1362, %v2308, %v2310
        %v2316 = vadd.f32 %v2299, %v2311
        %v2317 = vadd.f32 %v2300, %v2312
        %v2318 = vadd.f32 %v2301, %v2310
        %v2319 = vlaneseq
        %v2320 = vshrl.u32 %v2319, 7
        %v2321 = vsub.s32 5, %v2320
        %v2322 = vrot.slane %v1201, %v2321
        %v2323 = vlaneseq
        %v2324 = vshrl.u32 %v2323, 7
        %v2325 = vsub.s32 5, %v2324
        %v2326 = vrot.slane %v1202, %v2325
        %2329 = vrot.lane.b32.xlu0 %v2322, 82
        %v2330 = vpop.permute.xlu0 %2329
        %2331 = vrot.lane.b32.xlu0 %v2326, 82
        %v2332 = vpop.permute.xlu0 %2331
        %vm2333 = vcmask 670720
        %v2334 = vsel %vm2333, %v2330, %v2332
        %v2338 = vmul.f32 %v2316, %v2330
        %v2339 = vmul.f32 %v2317, %v2334
        %v2340 = vmul.f32 %v2318, %v2332
        %2344 = vrot.lane.b32.xlu0 %v2338, 124
        %v2345 = vpop.permute.xlu0 %2344
        %2346 = vrot.lane.b32.xlu0 %v2339, 124
        %v2347 = vpop.permute.xlu0 %2346
        %2348 = vrot.lane.b32.xlu0 %v2340, 124
        %v2349 = vpop.permute.xlu0 %2348
        %v2350 = vsel %vm2152, %v2345, %v2347
        %v2351 = vsel %vm2152, %v2347, %v2349
        %v2355 = vadd.f32 %v1960, %v2350
        %v2356 = vadd.f32 %v1961, %v2351
        %v2357 = vadd.f32 %v1962, %v2349
        %s2358 = sld [smem:[#allocation9 + $0x6]]
        %s2359 = sld [smem:[#allocation9 + $0x37]]
        %v2360 = vstv %s2358
        %v2361 = vstv %s2359
        %v2362 = vsel %vm1200, %v2360, %v2361
        %v2363 = vmul.f32 %v2362, %v1208
        %v2364 = vmul.f32 %v2362, %v1209
        %v2365 = vmul.f32 %v2362, %v1210
        %s2366 = sld [smem:[#allocation9 + $0xd]]
        %s2367 = sld [smem:[#allocation9 + $0x3e]]
        %v2368 = vstv %s2366
        %v2369 = vstv %s2367
        %v2370 = vsel %vm1200, %v2368, %v2369
        %v2371 = vmul.f32 %v2370, %v1208
        %v2372 = vmul.f32 %v2370, %v1209
        %v2373 = vmul.f32 %v2370, %v1210
        %s2374 = sld [smem:[#allocation9 + $0x14]]
        %s2375 = sld [smem:[#allocation9 + $0x45]]
        %v2376 = vstv %s2374
        %v2377 = vstv %s2375
        %v2378 = vsel %vm1200, %v2376, %v2377
        %v2379 = vmul.f32 %v2378, %v1208
        %v2380 = vmul.f32 %v2378, %v1209
        %v2381 = vmul.f32 %v2378, %v1210
        %2385 = vrot.lane.b32.xlu0 %v2379, 96
        %v2386 = vpop.permute.xlu0 %2385
        %2387 = vrot.lane.b32.xlu0 %v2380, 96
        %v2388 = vpop.permute.xlu0 %2387
        %2389 = vrot.lane.b32.xlu0 %v2381, 96
        %v2390 = vpop.permute.xlu0 %2389
        %v2391 = vsel %vm1239, %v2386, %v2388
        %v2392 = vsel %vm1239, %v2388, %v2390
        %v2396 = vadd.f32 %v2363, %v2391
        %v2397 = vadd.f32 %v2364, %v2392
        %v2398 = vadd.f32 %v2365, %v2390
        %s2399 = sld [smem:[#allocation9 + $0x1b]]
        %s2400 = sld [smem:[#allocation9 + $0x4c]]
        %v2401 = vstv %s2399
        %v2402 = vstv %s2400
        %v2403 = vsel %vm1200, %v2401, %v2402
        %v2404 = vmul.f32 %v2403, %v1278
        %v2405 = vmul.f32 %v2403, %v1279
        %v2406 = vmul.f32 %v2403, %v1280
        %2410 = vrot.lane.b32.xlu0 %v2404, 96
        %v2411 = vpop.permute.xlu0 %2410
        %2412 = vrot.lane.b32.xlu0 %v2405, 96
        %v2413 = vpop.permute.xlu0 %2412
        %2414 = vrot.lane.b32.xlu0 %v2406, 96
        %v2415 = vpop.permute.xlu0 %2414
        %v2416 = vsel %vm1239, %v2411, %v2413
        %v2417 = vsel %vm1239, %v2413, %v2415
        %v2421 = vadd.f32 %v2371, %v2411
        %v2422 = vadd.f32 %v2372, %v2416
        %v2423 = vadd.f32 %v2373, %v2417
        %s2424 = sld [smem:[#allocation9 + $0x22]]
        %s2425 = sld [smem:[#allocation9 + $0x53]]
        %v2426 = vstv %s2424
        %v2427 = vstv %s2425
        %v2428 = vsel %vm1200, %v2426, %v2427
        %v2429 = vmul.f32 %v2428, %v1278
        %v2430 = vmul.f32 %v2428, %v1279
        %v2431 = vmul.f32 %v2428, %v1280
        %2435 = vrot.lane.b32.xlu0 %v2429, 64
        %v2436 = vpop.permute.xlu0 %2435
        %2437 = vrot.lane.b32.xlu0 %v2430, 64
        %v2438 = vpop.permute.xlu0 %2437
        %2439 = vrot.lane.b32.xlu0 %v2431, 64
        %v2440 = vpop.permute.xlu0 %2439
        %v2441 = vsel %vm1293, %v2436, %v2438
        %v2442 = vsel %vm1293, %v2438, %v2440
        %v2446 = vadd.f32 %v2396, %v2436
        %v2447 = vadd.f32 %v2397, %v2441
        %v2448 = vadd.f32 %v2398, %v2442
        %s2449 = sld [smem:[#allocation9 + $0x29]]
        %s2450 = sld [smem:[#allocation9 + $0x5a]]
        %v2451 = vstv %s2449
        %v2452 = vstv %s2450
        %v2453 = vsel %vm1200, %v2451, %v2452
        %v2454 = vmul.f32 %v2453, %v1278
        %v2455 = vmul.f32 %v2453, %v1279
        %v2456 = vmul.f32 %v2453, %v1280
        %2460 = vrot.lane.b32.xlu0 %v2454, 64
        %v2461 = vpop.permute.xlu0 %2460
        %2462 = vrot.lane.b32.xlu0 %v2455, 64
        %v2463 = vpop.permute.xlu0 %2462
        %2464 = vrot.lane.b32.xlu0 %v2456, 64
        %v2465 = vpop.permute.xlu0 %2464
        %v2466 = vsel %vm1293, %v2461, %v2463
        %v2467 = vsel %vm1293, %v2463, %v2465
        %v2471 = vadd.f32 %v2421, %v2461
        %v2472 = vadd.f32 %v2422, %v2466
        %v2473 = vadd.f32 %v2423, %v2467
        %s2474 = sld [smem:[#allocation9 + $0x30]]
        %s2475 = sld [smem:[#allocation9 + $0x61]]
        %v2476 = vstv %s2474
        %v2477 = vstv %s2475
        %v2478 = vsel %vm1200, %v2476, %v2477
        %v2479 = vmul.f32 %v2478, %v1278
        %v2480 = vmul.f32 %v2478, %v1279
        %v2481 = vmul.f32 %v2478, %v1280
        %2485 = vrot.lane.b32.xlu0 %v2479, 32
        %v2486 = vpop.permute.xlu0 %2485
        %2487 = vrot.lane.b32.xlu0 %v2480, 32
        %v2488 = vpop.permute.xlu0 %2487
        %2489 = vrot.lane.b32.xlu0 %v2481, 32
        %v2490 = vpop.permute.xlu0 %2489
        %v2491 = vsel %vm1344, %v2486, %v2488
        %v2492 = vsel %vm1344, %v2488, %v2490
        %v2496 = vadd.f32 %v2446, %v2486
        %v2497 = vadd.f32 %v2447, %v2491
        %v2498 = vadd.f32 %v2448, %v2492
        %2502 = vrot.lane.b32.xlu0 %v2471, 112
        %v2503 = vpop.permute.xlu0 %2502
        %2504 = vrot.lane.b32.xlu0 %v2472, 112
        %v2505 = vpop.permute.xlu0 %2504
        %2506 = vrot.lane.b32.xlu0 %v2473, 112
        %v2507 = vpop.permute.xlu0 %2506
        %v2508 = vsel %vm1362, %v2503, %v2505
        %v2509 = vsel %vm1362, %v2505, %v2507
        %v2513 = vadd.f32 %v2496, %v2508
        %v2514 = vadd.f32 %v2497, %v2509
        %v2515 = vadd.f32 %v2498, %v2507
        %v2516 = vlaneseq
        %v2517 = vshrl.u32 %v2516, 7
        %v2518 = vsub.s32 6, %v2517
        %v2519 = vrot.slane %v1201, %v2518
        %v2520 = vlaneseq
        %v2521 = vshrl.u32 %v2520, 7
        %v2522 = vsub.s32 6, %v2521
        %v2523 = vrot.slane %v1202, %v2522
        %2526 = vrot.lane.b32.xlu0 %v2519, 83
        %v2527 = vpop.permute.xlu0 %2526
        %2528 = vrot.lane.b32.xlu0 %v2523, 83
        %v2529 = vpop.permute.xlu0 %2528
        %vm2530 = vcmask 678912
        %v2531 = vsel %vm2530, %v2527, %v2529
        %v2535 = vmul.f32 %v2513, %v2527
        %v2536 = vmul.f32 %v2514, %v2531
        %v2537 = vmul.f32 %v2515, %v2529
        %2541 = vrot.lane.b32.xlu0 %v2535, 122
        %v2542 = vpop.permute.xlu0 %2541
        %2543 = vrot.lane.b32.xlu0 %v2536, 122
        %v2544 = vpop.permute.xlu0 %2543
        %2545 = vrot.lane.b32.xlu0 %v2537, 122
        %v2546 = vpop.permute.xlu0 %2545
        %vm2547 = vcmask 998400
        %v2548 = vsel %vm2547, %v2542, %v2544
        %v2549 = vsel %vm2547, %v2544, %v2546
        %v2553 = vadd.f32 %v2158, %v2548
        %v2554 = vadd.f32 %v2159, %v2549
        %v2555 = vadd.f32 %v2160, %v2546
        %2559 = vrot.lane.b32.xlu0 %v2355, 127
        %v2560 = vpop.permute.xlu0 %2559
        %2561 = vrot.lane.b32.xlu0 %v2356, 127
        %v2562 = vpop.permute.xlu0 %2561
        %2563 = vrot.lane.b32.xlu0 %v2357, 127
        %v2564 = vpop.permute.xlu0 %2563
        %vm2565 = vcmask 1039360
        %v2566 = vsel %vm2565, %v2560, %v2562
        %v2567 = vsel %vm2565, %v2562, %v2564
        %v2571 = vadd.f32 %v2553, %v2566
        %v2572 = vadd.f32 %v2554, %v2567
        %v2573 = vadd.f32 %v2555, %v2564
        %v2577 = vrot.slane %v2571, 4
        %v2578 = vrot.slane %v2572, 4
        %v2579 = vrot.slane %v2573, 4
        %v2583 = vadd.f32 %v2571, %v2577
        %v2584 = vadd.f32 %v2572, %v2578
        %v2585 = vadd.f32 %v2573, %v2579
        %s2586 = sld [smem:[#allocation4]]
        %v2587 = vstv %s2586
        %v2588 = vadd.f32 %v2583, %v2587
        %v2589 = vadd.f32 %v2584, %v2587
        %v2590 = vadd.f32 %v2585, %v2587
        %v2591 = vxor.u32 %v2588, 2147483648
        %v2592 = vxor.u32 %v2589, 2147483648
        %v2593 = vxor.u32 %v2590, 2147483648
        %v2594 = vmul.f32 %v2591, 1.442695
        %v2595 = vpow.pop %v2594
        %v2596 = vmul.f32 %v2592, 1.442695
        %v2597 = vpow.pop %v2596
        %v2598 = vmul.f32 %v2593, 1.442695
        %v2599 = vpow.pop %v2598
        %v2600 = vadd.f32 %v2595, 1.0
        %v2601 = vadd.f32 %v2597, 1.0
        %v2602 = vadd.f32 %v2599, 1.0
        %v2603 = vrcp.pop %v2600
        %v2604 = vmul.f32 1.0, %v2603
        %v2605 = vrcp.pop %v2601
        %v2606 = vmul.f32 1.0, %v2605
        %v2607 = vrcp.pop %v2602
        %v2608 = vmul.f32 1.0, %v2607
        %v2609 = vld [vmem:[#allocation2] sm:$0xff]
        %v2610 = vld [vmem:[#allocation2 + $0x8] sm:$0xff]
        %v2611 = vld [vmem:[#allocation2 + $0x10] sm:$0xff]
        %v2612 = vld [vmem:[#allocation2 + $0x18] sm:$0xff]
        %v2613 = vld [vmem:[#allocation2 + $0x20] sm:$0xff]
        %v2614 = vld [vmem:[#allocation2 + $0x28] sm:$0xff]
        %v2615 = vld [vmem:[#allocation2 + $0x30] sm:$0xff]
        %v2616 = vld [vmem:[#allocation2 + $0x38] sm:$0xff]
        %v2617 = vlaneseq
        %v2618 = vshrl.u32 %v2617, 7
        %v2619 = vsub.s32 0, %v2618
        %v2620 = vrot.slane %v2604, %v2619
        %v2621 = vlaneseq
        %v2622 = vshrl.u32 %v2621, 7
        %v2623 = vsub.s32 0, %v2622
        %v2624 = vrot.slane %v2606, %v2623
        %v2625 = vlaneseq
        %v2626 = vshrl.u32 %v2625, 7
        %v2627 = vsub.s32 0, %v2626
        %v2628 = vrot.slane %v2608, %v2627
        %2632 = vrot.lane.b32.xlu0 %v2620, 51
        %v2633 = vpop.permute.xlu0 %2632
        %2634 = vrot.lane.b32.xlu0 %v2624, 51
        %v2635 = vpop.permute.xlu0 %2634
        %2636 = vrot.lane.b32.xlu0 %v2628, 51
        %v2637 = vpop.permute.xlu0 %2636
        %vm2638 = vcmask 416768
        %v2639 = vsel %vm2638, %v2633, %v2635
        %v2640 = vsel %vm2638, %v2635, %v2637
        %v2643 = vmul.f32 %v2609, %v2639
        %v2644 = vmul.f32 %v2610, %v2640
        %v2645 = vmul.f32 %v2611, %v2639
        %v2646 = vmul.f32 %v2612, %v2640
        %v2647 = vmul.f32 %v2613, %v2639
        %v2648 = vmul.f32 %v2614, %v2640
        %v2649 = vmul.f32 %v2615, %v2639
        %v2650 = vmul.f32 %v2616, %v2640
        %2651 = vst [vmem:[%s339] sm:$0xff] %v2643
        %2652 = vst [vmem:[%s339 + $0x8] sm:$0xff] %v2644
        %2653 = vst [vmem:[%s339 + $0x10] sm:$0xff] %v2645
        %2654 = vst [vmem:[%s339 + $0x18] sm:$0xff] %v2646
        %2655 = vst [vmem:[%s339 + $0x20] sm:$0xff] %v2647
        %2656 = vst [vmem:[%s339 + $0x28] sm:$0xff] %v2648
        %2657 = vst [vmem:[%s339 + $0x30] sm:$0xff] %v2649
        %2658 = vst [vmem:[%s339 + $0x38] sm:$0xff] %v2650
        %v2659 = vld [vmem:[%s691] sm:$0xff]
        %v2660 = vld [vmem:[%s691 + $0x8] sm:$0xff]
        %v2661 = vld [vmem:[%s691 + $0x10] sm:$0xff]
        %v2662 = vld [vmem:[%s691 + $0x18] sm:$0xff]
        %v2663 = vld [vmem:[%s691 + $0x20] sm:$0xff]
        %v2664 = vld [vmem:[%s691 + $0x28] sm:$0xff]
        %v2665 = vld [vmem:[%s691 + $0x30] sm:$0xff]
        %v2666 = vld [vmem:[%s691 + $0x38] sm:$0xff]
        %v2667 = vlaneseq
        %v2668 = vshrl.u32 %v2667, 7
        %v2669 = vsub.s32 1, %v2668
        %v2670 = vrot.slane %v2604, %v2669
        %v2671 = vlaneseq
        %v2672 = vshrl.u32 %v2671, 7
        %v2673 = vsub.s32 1, %v2672
        %v2674 = vrot.slane %v2606, %v2673
        %v2675 = vlaneseq
        %v2676 = vshrl.u32 %v2675, 7
        %v2677 = vsub.s32 1, %v2676
        %v2678 = vrot.slane %v2608, %v2677
        %2682 = vrot.lane.b32.xlu0 %v2670, 51
        %v2683 = vpop.permute.xlu0 %2682
        %2684 = vrot.lane.b32.xlu0 %v2674, 51
        %v2685 = vpop.permute.xlu0 %2684
        %2686 = vrot.lane.b32.xlu0 %v2678, 51
        %v2687 = vpop.permute.xlu0 %2686
        %v2688 = vsel %vm2638, %v2683, %v2685
        %v2689 = vsel %vm2638, %v2685, %v2687
        %v2692 = vmul.f32 %v2659, %v2688
        %v2693 = vmul.f32 %v2660, %v2689
        %v2694 = vmul.f32 %v2661, %v2688
        %v2695 = vmul.f32 %v2662, %v2689
        %v2696 = vmul.f32 %v2663, %v2688
        %v2697 = vmul.f32 %v2664, %v2689
        %v2698 = vmul.f32 %v2665, %v2688
        %v2699 = vmul.f32 %v2666, %v2689
        %s2700 = scalar_lea.vmem %s339, 64 [#allocation10]
        %2701 = vst [vmem:[%s2700] sm:$0xff] %v2692
        %2702 = vst [vmem:[%s2700 + $0x8] sm:$0xff] %v2693
        %2703 = vst [vmem:[%s2700 + $0x10] sm:$0xff] %v2694
        %2704 = vst [vmem:[%s2700 + $0x18] sm:$0xff] %v2695
        %2705 = vst [vmem:[%s2700 + $0x20] sm:$0xff] %v2696
        %2706 = vst [vmem:[%s2700 + $0x28] sm:$0xff] %v2697
        %2707 = vst [vmem:[%s2700 + $0x30] sm:$0xff] %v2698
        %2708 = vst [vmem:[%s2700 + $0x38] sm:$0xff] %v2699
        %v2709 = vld [vmem:[%s900] sm:$0xff]
        %v2710 = vld [vmem:[%s900 + $0x8] sm:$0xff]
        %v2711 = vld [vmem:[%s900 + $0x10] sm:$0xff]
        %v2712 = vld [vmem:[%s900 + $0x18] sm:$0xff]
        %v2713 = vld [vmem:[%s900 + $0x20] sm:$0xff]
        %v2714 = vld [vmem:[%s900 + $0x28] sm:$0xff]
        %v2715 = vld [vmem:[%s900 + $0x30] sm:$0xff]
        %v2716 = vld [vmem:[%s900 + $0x38] sm:$0xff]
        %v2717 = vlaneseq
        %v2718 = vshrl.u32 %v2717, 7
        %v2719 = vsub.s32 2, %v2718
        %v2720 = vrot.slane %v2604, %v2719
        %v2721 = vlaneseq
        %v2722 = vshrl.u32 %v2721, 7
        %v2723 = vsub.s32 2, %v2722
        %v2724 = vrot.slane %v2606, %v2723
        %v2725 = vlaneseq
        %v2726 = vshrl.u32 %v2725, 7
        %v2727 = vsub.s32 2, %v2726
        %v2728 = vrot.slane %v2608, %v2727
        %2732 = vrot.lane.b32.xlu0 %v2720, 51
        %v2733 = vpop.permute.xlu0 %2732
        %2734 = vrot.lane.b32.xlu0 %v2724, 51
        %v2735 = vpop.permute.xlu0 %2734
        %2736 = vrot.lane.b32.xlu0 %v2728, 51
        %v2737 = vpop.permute.xlu0 %2736
        %v2738 = vsel %vm2638, %v2733, %v2735
        %v2739 = vsel %vm2638, %v2735, %v2737
        %v2742 = vmul.f32 %v2709, %v2738
        %v2743 = vmul.f32 %v2710, %v2739
        %v2744 = vmul.f32 %v2711, %v2738
        %v2745 = vmul.f32 %v2712, %v2739
        %v2746 = vmul.f32 %v2713, %v2738
        %v2747 = vmul.f32 %v2714, %v2739
        %v2748 = vmul.f32 %v2715, %v2738
        %v2749 = vmul.f32 %v2716, %v2739
        %s2750 = scalar_lea.vmem %s339, 128 [#allocation10]
        %2751 = vst [vmem:[%s2750] sm:$0xff] %v2742
        %2752 = vst [vmem:[%s2750 + $0x8] sm:$0xff] %v2743
        %2753 = vst [vmem:[%s2750 + $0x10] sm:$0xff] %v2744
        %2754 = vst [vmem:[%s2750 + $0x18] sm:$0xff] %v2745
        %2755 = vst [vmem:[%s2750 + $0x20] sm:$0xff] %v2746
        %2756 = vst [vmem:[%s2750 + $0x28] sm:$0xff] %v2747
        %2757 = vst [vmem:[%s2750 + $0x30] sm:$0xff] %v2748
        %2758 = vst [vmem:[%s2750 + $0x38] sm:$0xff] %v2749
        %v2759 = vld [vmem:[%s1109] sm:$0xff]
        %v2760 = vld [vmem:[%s1109 + $0x8] sm:$0xff]
        %v2761 = vld [vmem:[%s1109 + $0x10] sm:$0xff]
        %v2762 = vld [vmem:[%s1109 + $0x18] sm:$0xff]
        %v2763 = vld [vmem:[%s1109 + $0x20] sm:$0xff]
        %v2764 = vld [vmem:[%s1109 + $0x28] sm:$0xff]
        %v2765 = vld [vmem:[%s1109 + $0x30] sm:$0xff]
        %v2766 = vld [vmem:[%s1109 + $0x38] sm:$0xff]
        %v2767 = vlaneseq
        %v2768 = vshrl.u32 %v2767, 7
        %v2769 = vsub.s32 3, %v2768
        %v2770 = vrot.slane %v2604, %v2769
        %v2771 = vlaneseq
        %v2772 = vshrl.u32 %v2771, 7
        %v2773 = vsub.s32 3, %v2772
        %v2774 = vrot.slane %v2606, %v2773
        %v2775 = vlaneseq
        %v2776 = vshrl.u32 %v2775, 7
        %v2777 = vsub.s32 3, %v2776
        %v2778 = vrot.slane %v2608, %v2777
        %2782 = vrot.lane.b32.xlu0 %v2770, 51
        %v2783 = vpop.permute.xlu0 %2782
        %2784 = vrot.lane.b32.xlu0 %v2774, 51
        %v2785 = vpop.permute.xlu0 %2784
        %2786 = vrot.lane.b32.xlu0 %v2778, 51
        %v2787 = vpop.permute.xlu0 %2786
        %v2788 = vsel %vm2638, %v2783, %v2785
        %v2789 = vsel %vm2638, %v2785, %v2787
        %v2792 = vmul.f32 %v2759, %v2788
        %v2793 = vmul.f32 %v2760, %v2789
        %v2794 = vmul.f32 %v2761, %v2788
        %v2795 = vmul.f32 %v2762, %v2789
        %v2796 = vmul.f32 %v2763, %v2788
        %v2797 = vmul.f32 %v2764, %v2789
        %v2798 = vmul.f32 %v2765, %v2788
        %v2799 = vmul.f32 %v2766, %v2789
        %s2800 = scalar_lea.vmem %s339, 192 [#allocation10]
        %2801 = vst [vmem:[%s2800] sm:$0xff] %v2792
        %2802 = vst [vmem:[%s2800 + $0x8] sm:$0xff] %v2793
        %2803 = vst [vmem:[%s2800 + $0x10] sm:$0xff] %v2794
        %2804 = vst [vmem:[%s2800 + $0x18] sm:$0xff] %v2795
        %2805 = vst [vmem:[%s2800 + $0x20] sm:$0xff] %v2796
        %2806 = vst [vmem:[%s2800 + $0x28] sm:$0xff] %v2797
        %2807 = vst [vmem:[%s2800 + $0x30] sm:$0xff] %v2798
        %2808 = vst [vmem:[%s2800 + $0x38] sm:$0xff] %v2799
        %s2809 = sand.u32 %s208, 1
        %s2810 = scalar_lea.sflag [#allocation7], %s2809
        %s2811 = sand.u32 %s208, 1
        %s2812 = smul.addr %s2811, 256
        %s2813 = scalar_lea.vmem [#allocation10], %s2812
        // Predicated region
        $region61: #{tpu_custom_call.1} parent=51 // pred_check
          %p2814 = pneg %p218
        $region62: #{tpu_custom_call.1} parent=51 // pred_check_branch
          %2816 = sbr.rel (%p2814) target = $region64
        $region63: #{tpu_custom_call.1} parent=51 // pred_region
          %s2817 = smul.u32 4, %s27
          %s2819 = ssub.s32 4096, 4096
          %2820 = vsyncadd %s2810, %s2819
          %s2821 = smul.addr %s2817, 8
          %s2822 = smul.addr %s2821, 128
          %s2823 = scalar_lea.hbm %s8, %s2822
          %s2824 = sshll.u32 %s2813, 4
          %s2825 = int_to_ptr.vmem [resolvable:$true] %s2824
          %2830 = dma.vmem_to_hbm [thread:$0]  %s2825, 4096, %s2823, %s2810, 256, 256, 16
        $region64: #{tpu_custom_call.1} parent=51 // pred_fallthru
          _
      $region52: #{tpu_custom_call.1} parent=5 // pred_fallthru
        _
      %p2831 = scmp.le.s32.totalorder 2, %s22
      // Predicated region
      $region65: #{tpu_custom_call.1} parent=5 // pred_check
        %p2832 = pneg %p2831
      $region66: #{tpu_custom_call.1} parent=5 // pred_check_branch
        %2834 = sbr.rel (%p2832) target = $region68
      $region67: #{tpu_custom_call.1} parent=5 // pred_region
        %s2835 = ssub.s32 %s22, 2
        // Predicated region
        $region69: #{tpu_custom_call.1} parent=67 // pred_check
          %p2836 = pneg %p224
        $region70: #{tpu_custom_call.1} parent=67 // pred_check_branch
          %2838 = sbr.rel (%p2836) target = $region72
        $region71: #{tpu_custom_call.1} parent=67 // pred_region
          %s2839 = sand.u32 %s209, 1
          %s2840 = scalar_lea.sflag [#allocation7], %s2839
          %s2841 = sand.u32 %s209, 1
          %s2842 = smul.addr %s2841, 256
          %s2843 = scalar_lea.vmem [#allocation10], %s2842
          %2844 = dma.done %s2840, 4096
        $region72: #{tpu_custom_call.1} parent=67 // pred_fallthru
          _
      $region68: #{tpu_custom_call.1} parent=5 // pred_fallthru
        _
    $region6: #{tpu_custom_call.1} parent=1 // loop_footer
      %s26 = sadd.s32 1, %s22
    $region7: #{tpu_custom_call.1} parent=1 // loop_footer_branch
      %21 = sbr.rel target = $region3
    $region8: #{tpu_custom_call.1} parent=1 // loop_exit
      _
    %2845 = vsyncpa [#allocation6], 1
    %s2846 = scalar_lea.sflag [#allocation6], 1
    %2847 = vsyncpa %s2846, 1
    %2848 = vsyncpa [#allocation7], 1
    %s2849 = scalar_lea.sflag [#allocation7], 1
    %2850 = vsyncpa %s2849, 1
    %2851 = vsyncpa [#allocation8], 1
    %s2852 = scalar_lea.sflag [#allocation8], 1
    %2853 = vsyncpa %s2852, 1

</llo_original>
